<compile_context>
chip_gen: v7x
topology: tpu7x:2x2x1
jax: 0.10.0
libtpu: 0.0.40
codegen_flags: <defaults>
</compile_context>

<pallas_src>
import math
import functools
import numpy as np
import jax
import jax.numpy as jnp
from jax import lax
from jax.experimental import pallas as pl
from jax.experimental.pallas import tpu as pltpu


def _round_up(x, m):
    return ((x + m - 1) // m) * m


# ------------------------------------------------------------------------------------
# Kernel 1: tiled matmul  out = x @ w + b   (bf16 operands, f32 VMEM accumulator)
# ------------------------------------------------------------------------------------

def _matmul_kernel(x_ref, w_ref, b_ref, o_ref, acc_ref):
    k = pl.program_id(2)

    @pl.when(k == 0)
    def _():
        acc_ref[...] = jnp.broadcast_to(b_ref[...], acc_ref.shape)

    acc_ref[...] += jnp.dot(x_ref[...], w_ref[...],
                            preferred_element_type=jnp.float32)

    @pl.when(k == pl.num_programs(2) - 1)
    def _():
        o_ref[...] = acc_ref[...].astype(o_ref.dtype)


def _pallas_matmul(x2d, wt, bias, *, out_dtype, tm=512, tn=512, tk=512):
    """(M,K) @ (K,N) + bias -> (M,N).  M/N/K tiled; K is the innermost reduction axis."""
    M, K = x2d.shape
    N = wt.shape[1]
    tm = min(tm, _round_up(M, 8))
    if N % tn:
        tn = N          # small / non-multiple N (demo shapes) -> full width block
    if K % tk:
        tk = K
    # TODO(synk): very large N/K that are not multiples of 512 would need edge-tile masking.
    Mp = _round_up(M, tm)
    if Mp != M:
        x2d = jnp.pad(x2d, ((0, Mp - M), (0, 0)))
    out = pl.pallas_call(
        _matmul_kernel,
        out_shape=jax.ShapeDtypeStruct((Mp, N), out_dtype),
        grid=(Mp // tm, N // tn, K // tk),
        in_specs=[
            pl.BlockSpec((tm, tk), lambda i, j, k: (i, k)),
            pl.BlockSpec((tk, tn), lambda i, j, k: (k, j)),
            pl.BlockSpec((1, tn), lambda i, j, k: (0, j)),
        ],
        out_specs=pl.BlockSpec((tm, tn), lambda i, j, k: (i, j)),
        scratch_shapes=[pltpu.VMEM((tm, tn), jnp.float32)],
        compiler_params=pltpu.CompilerParams(
            dimension_semantics=("parallel", "parallel", "arbitrary")),
    )(x2d.astype(jnp.bfloat16), wt.astype(jnp.bfloat16),
      bias.reshape(1, N).astype(jnp.float32))
    return out[:M]


# ------------------------------------------------------------------------------------
# Kernel 2: fused QK-RMSNorm + RoPE + flash attention (online softmax)
#   grid = (B, H, q-tiles, kv-tiles); kv-tiles is the innermost "arbitrary" axis.
#   q/k/v are read straight from the fused (B, L, 3*dim) QKV activation; the output
#   is written straight into (B, L, H*D) so the projection needs no rearrange.
# ------------------------------------------------------------------------------------

def _attn_kernel(q_ref, k_ref, v_ref, cq_ref, sq_ref, ck_ref, sk_ref,
                 qs_ref, ks_ref, o_ref,
                 qrot_ref, krot_ref, m_ref, l_ref, acc_ref, *, dh, scale):
    kv = pl.program_id(3)

    @pl.when(kv == 0)
    def _():
        # QK-RMSNorm + RoPE on the q tile — done once, reused for every kv tile.
        q = q_ref[...].astype(jnp.float32)                                  # (tq, D)
        q = q * lax.rsqrt(jnp.mean(q * q, axis=-1, keepdims=True) + 1e-6) * qs_ref[...]
        cos, sin = cq_ref[...], sq_ref[...]                                 # (tq, Dh)
        qe, qo = q[:, :dh], q[:, dh:]
        qrot_ref[:, :dh] = (qe * cos - qo * sin).astype(qrot_ref.dtype)
        qrot_ref[:, dh:] = (qe * sin + qo * cos).astype(qrot_ref.dtype)
        m_ref[...] = jnp.full(m_ref.shape, -jnp.inf, m_ref.dtype)
        l_ref[...] = jnp.zeros(l_ref.shape, l_ref.dtype)
        acc_ref[...] = jnp.zeros(acc_ref.shape, acc_ref.dtype)

    # QK-RMSNorm + RoPE on the current kv tile.
    k = k_ref[...].astype(jnp.float32)                                      # (tk, D)
    k = k * lax.rsqrt(jnp.mean(k * k, axis=-1, keepdims=True) + 1e-6) * ks_ref[...]
    cos, sin = ck_ref[...], sk_ref[...]                                     # (tk, Dh)
    ke, ko = k[:, :dh], k[:, dh:]
    krot_ref[:, :dh] = (ke * cos - ko * sin).astype(krot_ref.dtype)
    krot_ref[:, dh:] = (ke * sin + ko * cos).astype(krot_ref.dtype)

    # Scores: single D-wide bf16 MXU contraction (q @ k^T), f32 accumulation.
    s = lax.dot_general(qrot_ref[...], krot_ref[...],
                        (((1,), (1,)), ((), ())),
                        preferred_element_type=jnp.float32) * scale         # (tq, tk)

    # Online softmax update.
    m_prev = m_ref[...]
    m_new = jnp.maximum(m_prev, jnp.max(s, axis=-1, keepdims=True))
    alpha = jnp.exp(m_prev - m_new)
    p = jnp.exp(s - m_new)
    l_ref[...] = alpha * l_ref[...] + jnp.sum(p, axis=-1, keepdims=True)
    acc_ref[...] = alpha * acc_ref[...] + jnp.dot(
        p.astype(jnp.bfloat16), v_ref[...], preferred_element_type=jnp.float32)
    m_ref[...] = m_new

    @pl.when(kv == pl.num_programs(3) - 1)
    def _():
        o_ref[...] = (acc_ref[...] *
                      pl.reciprocal(l_ref[...], approx=True)).astype(o_ref.dtype)


# ------------------------------------------------------------------------------------
# One-time weight preprocessing (hoisted out of the per-call path).
# ------------------------------------------------------------------------------------

def prepare_weights(w_qkv, b_qkv, q_scale, k_scale, w_proj, b_proj, num_heads):
    """Fold RoPE's even/odd de-interleave into the q/k rows of the fused QKV weight
    (and the QK-RMSNorm scales); pre-transpose and downcast weights to bf16."""
    dim = w_proj.shape[0]
    H = num_heads
    D = dim // H
    head_perm = np.concatenate([np.arange(0, D, 2), np.arange(1, D, 2)])
    row_perm = np.arange(3 * dim)
    for blk in (0, 1):                       # q-block and k-block of the fused QKV
        for h in range(H):
            base = blk * dim + h * D
            row_perm[base:base + D] = base + head_perm
    wt_qkv = jnp.asarray(w_qkv)[row_perm].T.astype(jnp.bfloat16)          # (dim, 3*dim)
    b_qkv_p = jnp.asarray(b_qkv)[row_perm].astype(jnp.float32)
    qs = jnp.asarray(q_scale)[head_perm].reshape(1, D).astype(jnp.float32)
    ks = jnp.asarray(k_scale)[head_perm].reshape(1, D).astype(jnp.float32)
    wt_proj = jnp.asarray(w_proj).T.astype(jnp.bfloat16)                  # (dim, dim)
    b_proj_p = jnp.asarray(b_proj).astype(jnp.float32)
    return wt_qkv, b_qkv_p, qs, ks, wt_proj, b_proj_p


# ------------------------------------------------------------------------------------
# Forward pass.
# ------------------------------------------------------------------------------------

def self_attention_forward(x, pe, wt_qkv, b_qkv, qs, ks, wt_proj, b_proj, *, num_heads):
    """Pallas forward of FLUX SelfAttention. x:(B,L,dim), pe:(B,1,L,D/2,2,2)."""
    B, L, dim = x.shape
    H = num_heads
    D = dim // H
    Dh = D // 2
    # TODO(synk): head_dim is assumed to be a multiple of 128 (true for FLUX, D=128);
    # smaller head dims would need heads packed together to keep blocks lane-dense.

    # 1) QKV projection -> bf16 (B, L, 3*dim); column layout [q heads | k heads | v heads],
    #    q/k columns already permuted into RoPE [even|odd] half layout.
    qkv = _pallas_matmul(x.reshape(B * L, dim), wt_qkv, b_qkv,
                         out_dtype=jnp.bfloat16)
    qkv = qkv.reshape(B, L, 3 * dim)

    # Rotary tables from pe: pe[b,0,l,i] = [[cos,-sin],[sin,cos]].
    cos = pe[:, 0, :, :, 0, 0].astype(jnp.float32)      # (B, L, Dh)
    sin = pe[:, 0, :, :, 1, 0].astype(jnp.float32)

    tq = 256 if L % 256 == 0 else L
    tkv = 512 if L % 512 == 0 else tq
    # TODO(synk): sequence lengths not divisible by the tile would need padding + masking.
    scale = 1.0 / math.sqrt(D)

    kernel = functools.partial(_attn_kernel, dh=Dh, scale=scale)
    attn = pl.pallas_call(
        kernel,
        out_shape=jax.ShapeDtypeStruct((B, L, dim), jnp.bfloat16),
        grid=(B, H, L // tq, L // tkv),
        in_specs=[
            pl.BlockSpec((None, tq, D), lambda b, h, qi, ki: (b, qi, h)),           # q head h
            pl.BlockSpec((None, tkv, D), lambda b, h, qi, ki: (b, ki, H + h)),      # k head h
            pl.BlockSpec((None, tkv, D), lambda b, h, qi, ki: (b, ki, 2 * H + h)),  # v head h
            pl.BlockSpec((None, tq, Dh), lambda b, h, qi, ki: (b, qi, 0)),          # cos (q rows)
            pl.BlockSpec((None, tq, Dh), lambda b, h, qi, ki: (b, qi, 0)),          # sin (q rows)
            pl.BlockSpec((None, tkv, Dh), lambda b, h, qi, ki: (b, ki, 0)),         # cos (k rows)
            pl.BlockSpec((None, tkv, Dh), lambda b, h, qi, ki: (b, ki, 0)),         # sin (k rows)
            pl.BlockSpec((1, D), lambda b, h, qi, ki: (0, 0)),                      # q RMS scale
            pl.BlockSpec((1, D), lambda b, h, qi, ki: (0, 0)),                      # k RMS scale
        ],
        out_specs=pl.BlockSpec((None, tq, D), lambda b, h, qi, ki: (b, qi, h)),
        scratch_shapes=[
            pltpu.VMEM((tq, D), jnp.bfloat16),    # rotated q   [even|odd]
            pltpu.VMEM((tkv, D), jnp.bfloat16),   # rotated k   [even|odd]
            pltpu.VMEM((tq, 1), jnp.float32),     # running max
            pltpu.VMEM((tq, 1), jnp.float32),     # running denominator
            pltpu.VMEM((tq, D), jnp.float32),     # output accumulator
        ],
        compiler_params=pltpu.CompilerParams(
            dimension_semantics=("parallel", "parallel", "parallel", "arbitrary")),
    )(qkv, qkv, qkv, cos, sin, cos, sin, qs, ks)

    # 3) Output projection: attention output is already (B, L, H*D) -> plain tiled matmul.
    out = _pallas_matmul(attn.reshape(B * L, dim), wt_proj, b_proj, out_dtype=x.dtype)
    return out.reshape(B, L, dim)


# -------------------- pure-JAX reference (mirrors the PyTorch module) --------------------

def self_attention_ref(x, pe, w_qkv, b_qkv, q_scale, k_scale, w_proj, b_proj, *, num_heads):
    B, L, dim = x.shape
    H = num_heads
    D = dim // H
    qkv = x @ w_qkv.T + b_qkv
    qkv = qkv.reshape(B, L, 3, H, D)
    q = jnp.transpose(qkv[:, :, 0], (0, 2, 1, 3)).astype(jnp.float32)
    k = jnp.transpose(qkv[:, :, 1], (0, 2, 1, 3)).astype(jnp.float32)
    v = jnp.transpose(qkv[:, :, 2], (0, 2, 1, 3))

    def rms(t, scale):
        rrms = jax.lax.rsqrt(jnp.mean(t * t, axis=-1, keepdims=True) + 1e-6)
        return t * rrms * scale

    q, k = rms(q, q_scale), rms(k, k_scale)

    cos = pe[:, :, :, :, 0, 0]                    # (B,1,L,D/2)
    sin = pe[:, :, :, :, 1, 0]

    def rope(t):
        te, to = t[..., 0::2], t[..., 1::2]
        re = te * cos - to * sin
        ro = te * sin + to * cos
        return jnp.stack([re, ro], axis=-1).reshape(t.shape)

    q, k = rope(q), rope(k)
    s = jnp.einsum("bhqd,bhkd->bhqk", q, k) / math.sqrt(D)
    p = jax.nn.softmax(s, axis=-1)
    o = jnp.einsum("bhqk,bhkd->bhqd", p, v)
    o = jnp.transpose(o, (0, 2, 1, 3)).reshape(B, L, dim)
    return o @ w_proj.T + b_proj


if __name__ == "__main__":
    # Small shapes consistent with SelfAttention; head_dim kept at the FLUX value (128)
    # so all attention blocks are lane-dense: dim=256, 2 heads, seq=16, batch=2.
    B, L, dim, num_heads = 2, 16, 256, 2
    D, Dh = dim // num_heads, (dim // num_heads) // 2

    key = jax.random.PRNGKey(0)
    k0, k1, k2, k3, k4, k5, k6, k7 = jax.random.split(key, 8)
    x = jax.random.normal(k0, (B, L, dim), jnp.float32)
    w_qkv = 0.05 * jax.random.normal(k1, (3 * dim, dim), jnp.float32)
    b_qkv = 0.05 * jax.random.normal(k2, (3 * dim,), jnp.float32)       # qkv_bias=True
    q_scale = 1.0 + 0.1 * jax.random.normal(k3, (D,), jnp.float32)      # RMSNorm scales
    k_scale = 1.0 + 0.1 * jax.random.normal(k4, (D,), jnp.float32)
    w_proj = 0.05 * jax.random.normal(k5, (dim, dim), jnp.float32)
    b_proj = 0.05 * jax.random.normal(k6, (dim,), jnp.float32)

    # pe: FLUX EmbedND-style rotary table (B, 1, L, D/2, 2, 2) = [[cos,-sin],[sin,cos]].
    ang = jax.random.uniform(k7, (B, 1, L, Dh), jnp.float32, 0.0, 2.0 * math.pi)
    c, s = jnp.cos(ang), jnp.sin(ang)
    pe = jnp.stack([jnp.stack([c, -s], axis=-1), jnp.stack([s, c], axis=-1)], axis=-2)

    prep = prepare_weights(w_qkv, b_qkv, q_scale, k_scale, w_proj, b_proj, num_heads)

    fwd = jax.jit(self_attention_forward, static_argnames=("num_heads",))
    out = jax.block_until_ready(fwd(x, pe, *prep, num_heads=num_heads))

    ref = self_attention_ref(x, pe, w_qkv, b_qkv, q_scale, k_scale,
                             w_proj, b_proj, num_heads=num_heads)
    assert out.shape == (B, L, dim), out.shape
    assert out.dtype == jnp.float32
    # Tolerance reflects bf16 MXU operands / bf16 inter-kernel activations (f32 accumulation).
    np.testing.assert_allclose(np.asarray(out), np.asarray(ref), rtol=3e-2, atol=3e-2)

    print("KERNEL_OK")
</pallas_src>

<mosaic_0001>
module attributes {stable_mosaic.version = 11 : i64} {
  func.func @_matmul_kernel(%arg0: i32, %arg1: i32, %arg2: i32, %arg3: memref<32x256xbf16, #tpu.memory_space<vmem>>, %arg4: memref<256x768xbf16, #tpu.memory_space<vmem>>, %arg5: memref<1x768xf32, #tpu.memory_space<vmem>>, %arg6: memref<32x768xbf16, #tpu.memory_space<vmem>>, %arg7: memref<32x768xf32, #tpu.memory_space<vmem>>) attributes {dimension_semantics = [#tpu.dimension_semantics<parallel>, #tpu.dimension_semantics<parallel>, #tpu.dimension_semantics<arbitrary>], iteration_bounds = array<i64: 1, 1, 1>, scalar_prefetch = 0 : i64, scratch_operands = 1 : i64, tpu.core_type = #tpu.core_type<tc>, window_params = [{transform_indices = @transform_0, window_bounds = array<i64: 32, 256>}, {transform_indices = @transform_1, window_bounds = array<i64: 256, 768>}, {transform_indices = @transform_2, window_bounds = array<i64: 1, 768>}, {transform_indices = @transform_3, window_bounds = array<i64: 32, 768>}]} {
    %c0_i32 = arith.constant 0 : i32
    %0 = arith.cmpi eq, %arg2, %c0_i32 : i32
    %1 = arith.extui %0 : i1 to i32
    %c0_i32_0 = arith.constant 0 : i32
    %2 = arith.cmpi ne, %1, %c0_i32_0 : i32
    scf.if %2 {
      %c0_10 = arith.constant 0 : index
      %c0_11 = arith.constant 0 : index
      %12 = vector.load %arg5[%c0_10, %c0_11] : memref<1x768xf32, #tpu.memory_space<vmem>>, vector<1x768xf32>
      %13 = vector.shape_cast %12 : vector<1x768xf32> to vector<1x768xf32>
      %14 = vector.broadcast %13 : vector<1x768xf32> to vector<32x768xf32>
      %c0_12 = arith.constant 0 : index
      %c0_13 = arith.constant 0 : index
      %15 = vector.load %arg7[%c0_12, %c0_13] : memref<32x768xf32, #tpu.memory_space<vmem>>, vector<32x768xf32>
      tpu.vector_store %arg7[%c0_12, %c0_13], %14 {strides = array<i32>} : memref<32x768xf32, #tpu.memory_space<vmem>>, vector<32x768xf32>,
    } else {
    }
    %c0 = arith.constant 0 : index
    %c0_1 = arith.constant 0 : index
    %3 = vector.load %arg7[%c0, %c0_1] : memref<32x768xf32, #tpu.memory_space<vmem>>, vector<32x768xf32>
    %c0_2 = arith.constant 0 : index
    %c0_3 = arith.constant 0 : index
    %4 = vector.load %arg3[%c0_2, %c0_3] : memref<32x256xbf16, #tpu.memory_space<vmem>>, vector<32x256xbf16>
    %c0_4 = arith.constant 0 : index
    %c0_5 = arith.constant 0 : index
    %5 = vector.load %arg4[%c0_4, %c0_5] : memref<256x768xbf16, #tpu.memory_space<vmem>>, vector<256x768xbf16>
    %cst = arith.constant dense<0.000000e+00> : vector<32x768xf32>
    %6 = tpu.matmul %4, %5, %cst {dimension_numbers = #tpu.dot_dimension_numbers<[1], [0], [0], [1], [0, 0, 1, 1], [], []>} : vector<32x256xbf16>, vector<256x768xbf16>, vector<32x768xf32> -> vector<32x768xf32>
    %7 = arith.addf %3, %6 : vector<32x768xf32>
    %c0_6 = arith.constant 0 : index
    %c0_7 = arith.constant 0 : index
    %8 = vector.load %arg7[%c0_6, %c0_7] : memref<32x768xf32, #tpu.memory_space<vmem>>, vector<32x768xf32>
    tpu.vector_store %arg7[%c0_6, %c0_7], %7 {strides = array<i32>} : memref<32x768xf32, #tpu.memory_space<vmem>>, vector<32x768xf32>,
    %c0_i32_8 = arith.constant 0 : i32
    %9 = arith.cmpi eq, %arg2, %c0_i32_8 : i32
    %10 = arith.extui %9 : i1 to i32
    %c0_i32_9 = arith.constant 0 : i32
    %11 = arith.cmpi ne, %10, %c0_i32_9 : i32
    scf.if %11 {
      %c0_10 = arith.constant 0 : index
      %c0_11 = arith.constant 0 : index
      %12 = vector.load %arg7[%c0_10, %c0_11] : memref<32x768xf32, #tpu.memory_space<vmem>>, vector<32x768xf32>
      %13 = arith.truncf %12 : vector<32x768xf32> to vector<32x768xbf16>
      %c0_12 = arith.constant 0 : index
      %c0_13 = arith.constant 0 : index
      %14 = vector.load %arg6[%c0_12, %c0_13] : memref<32x768xbf16, #tpu.memory_space<vmem>>, vector<32x768xbf16>
      tpu.vector_store %arg6[%c0_12, %c0_13], %13 {strides = array<i32>} : memref<32x768xbf16, #tpu.memory_space<vmem>>, vector<32x768xbf16>,
    } else {
    }
    return
  }
  func.func @transform_0(%arg0: i32, %arg1: i32, %arg2: i32) -> (i32, i32) {
    %c0_i32 = arith.constant 0 : i32
    return %arg0, %arg2 : i32, i32
  }
  func.func @transform_1(%arg0: i32, %arg1: i32, %arg2: i32) -> (i32, i32) {
    %c0_i32 = arith.constant 0 : i32
    return %arg2, %arg1 : i32, i32
  }
  func.func @transform_2(%arg0: i32, %arg1: i32, %arg2: i32) -> (i32, i32) {
    %c0_i32 = arith.constant 0 : i32
    %c0_i32_0 = arith.constant 0 : i32
    return %c0_i32, %arg1 : i32, i32
  }
  func.func @transform_3(%arg0: i32, %arg1: i32, %arg2: i32) -> (i32, i32) {
    %c0_i32 = arith.constant 0 : i32
    return %arg0, %arg1 : i32, i32
  }
}

module attributes {stable_mosaic.version = 11 : i64} {
  func.func @_matmul_kernel(%arg0: i32, %arg1: i32, %arg2: i32, %arg3: memref<32x256xbf16, #tpu.memory_space<vmem>>, %arg4: memref<256x256xbf16, #tpu.memory_space<vmem>>, %arg5: memref<1x256xf32, #tpu.memory_space<vmem>>, %arg6: memref<32x256xf32, #tpu.memory_space<vmem>>, %arg7: memref<32x256xf32, #tpu.memory_space<vmem>>) attributes {dimension_semantics = [#tpu.dimension_semantics<parallel>, #tpu.dimension_semantics<parallel>, #tpu.dimension_semantics<arbitrary>], iteration_bounds = array<i64: 1, 1, 1>, scalar_prefetch = 0 : i64, scratch_operands = 1 : i64, tpu.core_type = #tpu.core_type<tc>, window_params = [{transform_indices = @transform_0, window_bounds = array<i64: 32, 256>}, {transform_indices = @transform_1, window_bounds = array<i64: 256, 256>}, {transform_indices = @transform_2, window_bounds = array<i64: 1, 256>}, {transform_indices = @transform_3, window_bounds = array<i64: 32, 256>}]} {
    %c0_i32 = arith.constant 0 : i32
    %0 = arith.cmpi eq, %arg2, %c0_i32 : i32
    %1 = arith.extui %0 : i1 to i32
    %c0_i32_0 = arith.constant 0 : i32
    %2 = arith.cmpi ne, %1, %c0_i32_0 : i32
    scf.if %2 {
      %c0_10 = arith.constant 0 : index
      %c0_11 = arith.constant 0 : index
      %12 = vector.load %arg5[%c0_10, %c0_11] : memref<1x256xf32, #tpu.memory_space<vmem>>, vector<1x256xf32>
      %13 = vector.shape_cast %12 : vector<1x256xf32> to vector<1x256xf32>
      %14 = vector.broadcast %13 : vector<1x256xf32> to vector<32x256xf32>
      %c0_12 = arith.constant 0 : index
      %c0_13 = arith.constant 0 : index
      %15 = vector.load %arg7[%c0_12, %c0_13] : memref<32x256xf32, #tpu.memory_space<vmem>>, vector<32x256xf32>
      tpu.vector_store %arg7[%c0_12, %c0_13], %14 {strides = array<i32>} : memref<32x256xf32, #tpu.memory_space<vmem>>, vector<32x256xf32>,
    } else {
    }
    %c0 = arith.constant 0 : index
    %c0_1 = arith.constant 0 : index
    %3 = vector.load %arg7[%c0, %c0_1] : memref<32x256xf32, #tpu.memory_space<vmem>>, vector<32x256xf32>
    %c0_2 = arith.constant 0 : index
    %c0_3 = arith.constant 0 : index
    %4 = vector.load %arg3[%c0_2, %c0_3] : memref<32x256xbf16, #tpu.memory_space<vmem>>, vector<32x256xbf16>
    %c0_4 = arith.constant 0 : index
    %c0_5 = arith.constant 0 : index
    %5 = vector.load %arg4[%c0_4, %c0_5] : memref<256x256xbf16, #tpu.memory_space<vmem>>, vector<256x256xbf16>
    %cst = arith.constant dense<0.000000e+00> : vector<32x256xf32>
    %6 = tpu.matmul %4, %5, %cst {dimension_numbers = #tpu.dot_dimension_numbers<[1], [0], [0], [1], [0, 0, 1, 1], [], []>} : vector<32x256xbf16>, vector<256x256xbf16>, vector<32x256xf32> -> vector<32x256xf32>
    %7 = arith.addf %3, %6 : vector<32x256xf32>
    %c0_6 = arith.constant 0 : index
    %c0_7 = arith.constant 0 : index
    %8 = vector.load %arg7[%c0_6, %c0_7] : memref<32x256xf32, #tpu.memory_space<vmem>>, vector<32x256xf32>
    tpu.vector_store %arg7[%c0_6, %c0_7], %7 {strides = array<i32>} : memref<32x256xf32, #tpu.memory_space<vmem>>, vector<32x256xf32>,
    %c0_i32_8 = arith.constant 0 : i32
    %9 = arith.cmpi eq, %arg2, %c0_i32_8 : i32
    %10 = arith.extui %9 : i1 to i32
    %c0_i32_9 = arith.constant 0 : i32
    %11 = arith.cmpi ne, %10, %c0_i32_9 : i32
    scf.if %11 {
      %c0_10 = arith.constant 0 : index
      %c0_11 = arith.constant 0 : index
      %12 = vector.load %arg7[%c0_10, %c0_11] : memref<32x256xf32, #tpu.memory_space<vmem>>, vector<32x256xf32>
      %c0_12 = arith.constant 0 : index
      %c0_13 = arith.constant 0 : index
      %13 = vector.load %arg6[%c0_12, %c0_13] : memref<32x256xf32, #tpu.memory_space<vmem>>, vector<32x256xf32>
      tpu.vector_store %arg6[%c0_12, %c0_13], %12 {strides = array<i32>} : memref<32x256xf32, #tpu.memory_space<vmem>>, vector<32x256xf32>,
    } else {
    }
    return
  }
  func.func @transform_0(%arg0: i32, %arg1: i32, %arg2: i32) -> (i32, i32) {
    %c0_i32 = arith.constant 0 : i32
    return %arg0, %arg2 : i32, i32
  }
  func.func @transform_1(%arg0: i32, %arg1: i32, %arg2: i32) -> (i32, i32) {
    %c0_i32 = arith.constant 0 : i32
    return %arg2, %arg1 : i32, i32
  }
  func.func @transform_2(%arg0: i32, %arg1: i32, %arg2: i32) -> (i32, i32) {
    %c0_i32 = arith.constant 0 : i32
    %c0_i32_0 = arith.constant 0 : i32
    return %c0_i32, %arg1 : i32, i32
  }
  func.func @transform_3(%arg0: i32, %arg1: i32, %arg2: i32) -> (i32, i32) {
    %c0_i32 = arith.constant 0 : i32
    return %arg0, %arg1 : i32, i32
  }
}

module attributes {stable_mosaic.version = 11 : i64} {
  func.func @_attn_kernel(%arg0: i32, %arg1: i32, %arg2: i32, %arg3: i32, %arg4: memref<1x16x128xbf16, #tpu.memory_space<vmem>>, %arg5: memref<1x16x128xbf16, #tpu.memory_space<vmem>>, %arg6: memref<1x16x128xbf16, #tpu.memory_space<vmem>>, %arg7: memref<1x16x64xf32, #tpu.memory_space<vmem>>, %arg8: memref<1x16x64xf32, #tpu.memory_space<vmem>>, %arg9: memref<1x16x64xf32, #tpu.memory_space<vmem>>, %arg10: memref<1x16x64xf32, #tpu.memory_space<vmem>>, %arg11: memref<1x128xf32, #tpu.memory_space<vmem>>, %arg12: memref<1x128xf32, #tpu.memory_space<vmem>>, %arg13: memref<1x16x128xbf16, #tpu.memory_space<vmem>>, %arg14: memref<16x128xbf16, #tpu.memory_space<vmem>>, %arg15: memref<16x128xbf16, #tpu.memory_space<vmem>>, %arg16: memref<16x1xf32, #tpu.memory_space<vmem>>, %arg17: memref<16x1xf32, #tpu.memory_space<vmem>>, %arg18: memref<16x128xf32, #tpu.memory_space<vmem>>) attributes {dimension_semantics = [#tpu.dimension_semantics<parallel>, #tpu.dimension_semantics<parallel>, #tpu.dimension_semantics<parallel>, #tpu.dimension_semantics<arbitrary>], iteration_bounds = array<i64: 2, 2, 1, 1>, scalar_prefetch = 0 : i64, scratch_operands = 5 : i64, tpu.core_type = #tpu.core_type<tc>, window_params = [{transform_indices = @transform_0, window_bounds = array<i64: 1, 16, 128>}, {transform_indices = @transform_1, window_bounds = array<i64: 1, 16, 128>}, {transform_indices = @transform_2, window_bounds = array<i64: 1, 16, 128>}, {transform_indices = @transform_3, window_bounds = array<i64: 1, 16, 64>}, {transform_indices = @transform_4, window_bounds = array<i64: 1, 16, 64>}, {transform_indices = @transform_5, window_bounds = array<i64: 1, 16, 64>}, {transform_indices = @transform_6, window_bounds = array<i64: 1, 16, 64>}, {pipeline_mode = #tpu.pipeline_mode<synchronous>, transform_indices = @transform_7, window_bounds = array<i64: 1, 128>}, {pipeline_mode = #tpu.pipeline_mode<synchronous>, transform_indices = @transform_8, window_bounds = array<i64: 1, 128>}, {transform_indices = @transform_9, window_bounds = array<i64: 1, 16, 128>}]} {
    %c0_i32 = arith.constant 0 : i32
    %0 = arith.cmpi eq, %arg3, %c0_i32 : i32
    %1 = arith.extui %0 : i1 to i32
    %c0_i32_0 = arith.constant 0 : i32
    %2 = arith.cmpi ne, %1, %c0_i32_0 : i32
    scf.if %2 {
      %c0_42 = arith.constant 0 : index
      %c0_43 = arith.constant 0 : index
      %c0_44 = arith.constant 0 : index
      %68 = vector.load %arg4[%c0_42, %c0_43, %c0_44] : memref<1x16x128xbf16, #tpu.memory_space<vmem>>, vector<1x16x128xbf16>
      %69 = vector.shape_cast %68 : vector<1x16x128xbf16> to vector<16x128xbf16>
      %70 = arith.extf %69 : vector<16x128xbf16> to vector<16x128xf32>
      %71 = arith.mulf %70, %70 : vector<16x128xf32>
      %cst_45 = arith.constant dense<0.000000e+00> : vector<16xf32>
      %72 = vector.multi_reduction <add>, %71, %cst_45 [1] : vector<16x128xf32> to vector<16xf32>
      %73 = vector.shape_cast %72 : vector<16xf32> to vector<16x1xf32>
      %cst_46 = arith.constant 1.280000e+02 : f32
      %74 = vector.broadcast %cst_46 : f32 to vector<16x1xf32>
      %75 = arith.divf %73, %74 : vector<16x1xf32>
      %cst_47 = arith.constant 9.99999997E-7 : f32
      %76 = vector.broadcast %cst_47 : f32 to vector<16x1xf32>
      %77 = arith.addf %75, %76 : vector<16x1xf32>
      %78 = math.rsqrt %77 : vector<16x1xf32>
      %79 = vector.broadcast %78 : vector<16x1xf32> to vector<16x128xf32>
      %80 = arith.mulf %70, %79 : vector<16x128xf32>
      %c0_48 = arith.constant 0 : index
      %c0_49 = arith.constant 0 : index
      %81 = vector.load %arg11[%c0_48, %c0_49] : memref<1x128xf32, #tpu.memory_space<vmem>>, vector<1x128xf32>
      %82 = vector.broadcast %81 : vector<1x128xf32> to vector<16x128xf32>
      %83 = arith.mulf %80, %82 : vector<16x128xf32>
      %c0_50 = arith.constant 0 : index
      %c0_51 = arith.constant 0 : index
      %c0_52 = arith.constant 0 : index
      %84 = vector.load %arg7[%c0_50, %c0_51, %c0_52] : memref<1x16x64xf32, #tpu.memory_space<vmem>>, vector<1x16x64xf32>
      %85 = vector.shape_cast %84 : vector<1x16x64xf32> to vector<16x64xf32>
      %c0_53 = arith.constant 0 : index
      %c0_54 = arith.constant 0 : index
      %c0_55 = arith.constant 0 : index
      %86 = vector.load %arg8[%c0_53, %c0_54, %c0_55] : memref<1x16x64xf32, #tpu.memory_space<vmem>>, vector<1x16x64xf32>
      %87 = vector.shape_cast %86 : vector<1x16x64xf32> to vector<16x64xf32>
      %88 = vector.extract_strided_slice %83 {offsets = [0, 0], sizes = [16, 64], strides = [1, 1]} : vector<16x128xf32> to vector<16x64xf32>
      %89 = vector.extract_strided_slice %83 {offsets = [0, 64], sizes = [16, 64], strides = [1, 1]} : vector<16x128xf32> to vector<16x64xf32>
      %90 = arith.mulf %88, %85 : vector<16x64xf32>
      %91 = arith.mulf %89, %87 : vector<16x64xf32>
      %92 = arith.subf %90, %91 : vector<16x64xf32>
      %93 = arith.truncf %92 : vector<16x64xf32> to vector<16x64xbf16>
      %c0_56 = arith.constant 0 : index
      %c0_57 = arith.constant 0 : index
      %94 = vector.load %arg14[%c0_56, %c0_57] : memref<16x128xbf16, #tpu.memory_space<vmem>>, vector<16x64xbf16>
      tpu.vector_store %arg14[%c0_56, %c0_57], %93 {strides = array<i32>} : memref<16x128xbf16, #tpu.memory_space<vmem>>, vector<16x64xbf16>,
      %95 = arith.mulf %88, %87 : vector<16x64xf32>
      %96 = arith.mulf %89, %85 : vector<16x64xf32>
      %97 = arith.addf %95, %96 : vector<16x64xf32>
      %98 = arith.truncf %97 : vector<16x64xf32> to vector<16x64xbf16>
      %c0_58 = arith.constant 0 : index
      %c64_59 = arith.constant 64 : index
      %99 = vector.load %arg14[%c0_58, %c64_59] : memref<16x128xbf16, #tpu.memory_space<vmem>>, vector<16x64xbf16>
      tpu.vector_store %arg14[%c0_58, %c64_59], %98 {strides = array<i32>} : memref<16x128xbf16, #tpu.memory_space<vmem>>, vector<16x64xbf16>,
      %cst_60 = arith.constant 0xFF800000 : f32
      %100 = vector.broadcast %cst_60 : f32 to vector<16x1xf32>
      %c0_61 = arith.constant 0 : index
      %c0_62 = arith.constant 0 : index
      %101 = vector.load %arg16[%c0_61, %c0_62] : memref<16x1xf32, #tpu.memory_space<vmem>>, vector<16x1xf32>
      tpu.vector_store %arg16[%c0_61, %c0_62], %100 {strides = array<i32>} : memref<16x1xf32, #tpu.memory_space<vmem>>, vector<16x1xf32>,
      %cst_63 = arith.constant 0.000000e+00 : f32
      %102 = vector.broadcast %cst_63 : f32 to vector<16x1xf32>
      %c0_64 = arith.constant 0 : index
      %c0_65 = arith.constant 0 : index
      %103 = vector.load %arg17[%c0_64, %c0_65] : memref<16x1xf32, #tpu.memory_space<vmem>>, vector<16x1xf32>
      tpu.vector_store %arg17[%c0_64, %c0_65], %102 {strides = array<i32>} : memref<16x1xf32, #tpu.memory_space<vmem>>, vector<16x1xf32>,
      %cst_66 = arith.constant 0.000000e+00 : f32
      %104 = vector.broadcast %cst_66 : f32 to vector<16x128xf32>
      %c0_67 = arith.constant 0 : index
      %c0_68 = arith.constant 0 : index
      %105 = vector.load %arg18[%c0_67, %c0_68] : memref<16x128xf32, #tpu.memory_space<vmem>>, vector<16x128xf32>
      tpu.vector_store %arg18[%c0_67, %c0_68], %104 {strides = array<i32>} : memref<16x128xf32, #tpu.memory_space<vmem>>, vector<16x128xf32>,
    } else {
    }
    %c0 = arith.constant 0 : index
    %c0_1 = arith.constant 0 : index
    %c0_2 = arith.constant 0 : index
    %3 = vector.load %arg5[%c0, %c0_1, %c0_2] : memref<1x16x128xbf16, #tpu.memory_space<vmem>>, vector<1x16x128xbf16>
    %4 = vector.shape_cast %3 : vector<1x16x128xbf16> to vector<16x128xbf16>
    %5 = arith.extf %4 : vector<16x128xbf16> to vector<16x128xf32>
    %6 = arith.mulf %5, %5 : vector<16x128xf32>
    %cst = arith.constant dense<0.000000e+00> : vector<16xf32>
    %7 = vector.multi_reduction <add>, %6, %cst [1] : vector<16x128xf32> to vector<16xf32>
    %8 = vector.shape_cast %7 : vector<16xf32> to vector<16x1xf32>
    %cst_3 = arith.constant 1.280000e+02 : f32
    %9 = vector.broadcast %cst_3 : f32 to vector<16x1xf32>
    %10 = arith.divf %8, %9 : vector<16x1xf32>
    %cst_4 = arith.constant 9.99999997E-7 : f32
    %11 = vector.broadcast %cst_4 : f32 to vector<16x1xf32>
    %12 = arith.addf %10, %11 : vector<16x1xf32>
    %13 = math.rsqrt %12 : vector<16x1xf32>
    %14 = vector.broadcast %13 : vector<16x1xf32> to vector<16x128xf32>
    %15 = arith.mulf %5, %14 : vector<16x128xf32>
    %c0_5 = arith.constant 0 : index
    %c0_6 = arith.constant 0 : index
    %16 = vector.load %arg12[%c0_5, %c0_6] : memref<1x128xf32, #tpu.memory_space<vmem>>, vector<1x128xf32>
    %17 = vector.broadcast %16 : vector<1x128xf32> to vector<16x128xf32>
    %18 = arith.mulf %15, %17 : vector<16x128xf32>
    %c0_7 = arith.constant 0 : index
    %c0_8 = arith.constant 0 : index
    %c0_9 = arith.constant 0 : index
    %19 = vector.load %arg9[%c0_7, %c0_8, %c0_9] : memref<1x16x64xf32, #tpu.memory_space<vmem>>, vector<1x16x64xf32>
    %20 = vector.shape_cast %19 : vector<1x16x64xf32> to vector<16x64xf32>
    %c0_10 = arith.constant 0 : index
    %c0_11 = arith.constant 0 : index
    %c0_12 = arith.constant 0 : index
    %21 = vector.load %arg10[%c0_10, %c0_11, %c0_12] : memref<1x16x64xf32, #tpu.memory_space<vmem>>, vector<1x16x64xf32>
    %22 = vector.shape_cast %21 : vector<1x16x64xf32> to vector<16x64xf32>
    %23 = vector.extract_strided_slice %18 {offsets = [0, 0], sizes = [16, 64], strides = [1, 1]} : vector<16x128xf32> to vector<16x64xf32>
    %24 = vector.extract_strided_slice %18 {offsets = [0, 64], sizes = [16, 64], strides = [1, 1]} : vector<16x128xf32> to vector<16x64xf32>
    %25 = arith.mulf %23, %20 : vector<16x64xf32>
    %26 = arith.mulf %24, %22 : vector<16x64xf32>
    %27 = arith.subf %25, %26 : vector<16x64xf32>
    %28 = arith.truncf %27 : vector<16x64xf32> to vector<16x64xbf16>
    %c0_13 = arith.constant 0 : index
    %c0_14 = arith.constant 0 : index
    %29 = vector.load %arg15[%c0_13, %c0_14] : memref<16x128xbf16, #tpu.memory_space<vmem>>, vector<16x64xbf16>
    tpu.vector_store %arg15[%c0_13, %c0_14], %28 {strides = array<i32>} : memref<16x128xbf16, #tpu.memory_space<vmem>>, vector<16x64xbf16>,
    %30 = arith.mulf %23, %22 : vector<16x64xf32>
    %31 = arith.mulf %24, %20 : vector<16x64xf32>
    %32 = arith.addf %30, %31 : vector<16x64xf32>
    %33 = arith.truncf %32 : vector<16x64xf32> to vector<16x64xbf16>
    %c0_15 = arith.constant 0 : index
    %c64 = arith.constant 64 : index
    %34 = vector.load %arg15[%c0_15, %c64] : memref<16x128xbf16, #tpu.memory_space<vmem>>, vector<16x64xbf16>
    tpu.vector_store %arg15[%c0_15, %c64], %33 {strides = array<i32>} : memref<16x128xbf16, #tpu.memory_space<vmem>>, vector<16x64xbf16>,
    %c0_16 = arith.constant 0 : index
    %c0_17 = arith.constant 0 : index
    %35 = vector.load %arg14[%c0_16, %c0_17] : memref<16x128xbf16, #tpu.memory_space<vmem>>, vector<16x128xbf16>
    %c0_18 = arith.constant 0 : index
    %c0_19 = arith.constant 0 : index
    %36 = vector.load %arg15[%c0_18, %c0_19] : memref<16x128xbf16, #tpu.memory_space<vmem>>, vector<16x128xbf16>
    %cst_20 = arith.constant dense<0.000000e+00> : vector<16x16xf32>
    %37 = tpu.matmul %35, %36, %cst_20 {dimension_numbers = #tpu.dot_dimension_numbers<[1], [1], [0], [0], [0, 0, 1, 0], [], []>} : vector<16x128xbf16>, vector<16x128xbf16>, vector<16x16xf32> -> vector<16x16xf32>
    %cst_21 = arith.constant 0.0883883461 : f32
    %38 = vector.broadcast %cst_21 : f32 to vector<16x16xf32>
    %39 = arith.mulf %37, %38 : vector<16x16xf32>
    %c0_22 = arith.constant 0 : index
    %c0_23 = arith.constant 0 : index
    %40 = vector.load %arg16[%c0_22, %c0_23] : memref<16x1xf32, #tpu.memory_space<vmem>>, vector<16x1xf32>
    %cst_24 = arith.constant dense<0xFF800000> : vector<16xf32>
    %41 = vector.multi_reduction <maximumf>, %39, %cst_24 [1] : vector<16x16xf32> to vector<16xf32>
    %42 = vector.shape_cast %41 : vector<16xf32> to vector<16x1xf32>
    %43 = arith.maximumf %40, %42 : vector<16x1xf32>
    %44 = arith.subf %40, %43 : vector<16x1xf32>
    %45 = math.exp %44 : vector<16x1xf32>
    %46 = vector.broadcast %43 : vector<16x1xf32> to vector<16x16xf32>
    %47 = arith.subf %39, %46 : vector<16x16xf32>
    %48 = math.exp %47 : vector<16x16xf32>
    %c0_25 = arith.constant 0 : index
    %c0_26 = arith.constant 0 : index
    %49 = vector.load %arg17[%c0_25, %c0_26] : memref<16x1xf32, #tpu.memory_space<vmem>>, vector<16x1xf32>
    %50 = arith.mulf %45, %49 : vector<16x1xf32>
    %cst_27 = arith.constant dense<0.000000e+00> : vector<16xf32>
    %51 = vector.multi_reduction <add>, %48, %cst_27 [1] : vector<16x16xf32> to vector<16xf32>
    %52 = vector.shape_cast %51 : vector<16xf32> to vector<16x1xf32>
    %53 = arith.addf %50, %52 : vector<16x1xf32>
    %c0_28 = arith.constant 0 : index
    %c0_29 = arith.constant 0 : index
    %54 = vector.load %arg17[%c0_28, %c0_29] : memref<16x1xf32, #tpu.memory_space<vmem>>, vector<16x1xf32>
    tpu.vector_store %arg17[%c0_28, %c0_29], %53 {strides = array<i32>} : memref<16x1xf32, #tpu.memory_space<vmem>>, vector<16x1xf32>,
    %c0_30 = arith.constant 0 : index
    %c0_31 = arith.constant 0 : index
    %55 = vector.load %arg18[%c0_30, %c0_31] : memref<16x128xf32, #tpu.memory_space<vmem>>, vector<16x128xf32>
    %56 = vector.broadcast %45 : vector<16x1xf32> to vector<16x128xf32>
    %57 = arith.mulf %56, %55 : vector<16x128xf32>
    %58 = arith.truncf %48 : vector<16x16xf32> to vector<16x16xbf16>
    %c0_32 = arith.constant 0 : index
    %c0_33 = arith.constant 0 : index
    %c0_34 = arith.constant 0 : index
    %59 = vector.load %arg6[%c0_32, %c0_33, %c0_34] : memref<1x16x128xbf16, #tpu.memory_space<vmem>>, vector<1x16x128xbf16>
    %60 = vector.shape_cast %59 : vector<1x16x128xbf16> to vector<16x128xbf16>
    %cst_35 = arith.constant dense<0.000000e+00> : vector<16x128xf32>
    %61 = tpu.matmul %58, %60, %cst_35 {dimension_numbers = #tpu.dot_dimension_numbers<[1], [0], [0], [1], [0, 0, 1, 1], [], []>} : vector<16x16xbf16>, vector<16x128xbf16>, vector<16x128xf32> -> vector<16x128xf32>
    %62 = arith.addf %57, %61 : vector<16x128xf32>
    %c0_36 = arith.constant 0 : index
    %c0_37 = arith.constant 0 : index
    %63 = vector.load %arg18[%c0_36, %c0_37] : memref<16x128xf32, #tpu.memory_space<vmem>>, vector<16x128xf32>
    tpu.vector_store %arg18[%c0_36, %c0_37], %62 {strides = array<i32>} : memref<16x128xf32, #tpu.memory_space<vmem>>, vector<16x128xf32>,
    %c0_38 = arith.constant 0 : index
    %c0_39 = arith.constant 0 : index
    %64 = vector.load %arg16[%c0_38, %c0_39] : memref<16x1xf32, #tpu.memory_space<vmem>>, vector<16x1xf32>
    tpu.vector_store %arg16[%c0_38, %c0_39], %43 {strides = array<i32>} : memref<16x1xf32, #tpu.memory_space<vmem>>, vector<16x1xf32>,
    %c0_i32_40 = arith.constant 0 : i32
    %65 = arith.cmpi eq, %arg3, %c0_i32_40 : i32
    %66 = arith.extui %65 : i1 to i32
    %c0_i32_41 = arith.constant 0 : i32
    %67 = arith.cmpi ne, %66, %c0_i32_41 : i32
    scf.if %67 {
      %c0_42 = arith.constant 0 : index
      %c0_43 = arith.constant 0 : index
      %68 = vector.load %arg18[%c0_42, %c0_43] : memref<16x128xf32, #tpu.memory_space<vmem>>, vector<16x128xf32>
      %c0_44 = arith.constant 0 : index
      %c0_45 = arith.constant 0 : index
      %69 = vector.load %arg17[%c0_44, %c0_45] : memref<16x1xf32, #tpu.memory_space<vmem>>, vector<16x1xf32>
      %70 = tpu.reciprocal %69 {approx = true} : vector<16x1xf32> -> vector<16x1xf32>
      %71 = vector.broadcast %70 : vector<16x1xf32> to vector<16x128xf32>
      %72 = arith.mulf %68, %71 : vector<16x128xf32>
      %73 = arith.truncf %72 : vector<16x128xf32> to vector<16x128xbf16>
      %c0_46 = arith.constant 0 : index
      %c0_47 = arith.constant 0 : index
      %c0_48 = arith.constant 0 : index
      %74 = vector.load %arg13[%c0_46, %c0_47, %c0_48] : memref<1x16x128xbf16, #tpu.memory_space<vmem>>, vector<1x16x128xbf16>
      %75 = vector.shape_cast %74 : vector<1x16x128xbf16> to vector<16x128xbf16>
      %76 = vector.shape_cast %73 : vector<16x128xbf16> to vector<1x16x128xbf16>
      tpu.vector_store %arg13[%c0_46, %c0_47, %c0_48], %76 {strides = array<i32>} : memref<1x16x128xbf16, #tpu.memory_space<vmem>>, vector<1x16x128xbf16>,
    } else {
    }
    return
  }
  func.func @transform_0(%arg0: i32, %arg1: i32, %arg2: i32, %arg3: i32) -> (i32, i32, i32) {
    %c0_i32 = arith.constant 0 : i32
    return %arg0, %arg2, %arg1 : i32, i32, i32
  }
  func.func @transform_1(%arg0: i32, %arg1: i32, %arg2: i32, %arg3: i32) -> (i32, i32, i32) {
    %c2_i32 = arith.constant 2 : i32
    %0 = arith.addi %c2_i32, %arg1 : i32
    %c0_i32 = arith.constant 0 : i32
    return %arg0, %arg3, %0 : i32, i32, i32
  }
  func.func @transform_2(%arg0: i32, %arg1: i32, %arg2: i32, %arg3: i32) -> (i32, i32, i32) {
    %c4_i32 = arith.constant 4 : i32
    %0 = arith.addi %c4_i32, %arg1 : i32
    %c0_i32 = arith.constant 0 : i32
    return %arg0, %arg3, %0 : i32, i32, i32
  }
  func.func @transform_3(%arg0: i32, %arg1: i32, %arg2: i32, %arg3: i32) -> (i32, i32, i32) {
    %c0_i32 = arith.constant 0 : i32
    %c0_i32_0 = arith.constant 0 : i32
    return %arg0, %arg2, %c0_i32 : i32, i32, i32
  }
  func.func @transform_4(%arg0: i32, %arg1: i32, %arg2: i32, %arg3: i32) -> (i32, i32, i32) {
    %c0_i32 = arith.constant 0 : i32
    %c0_i32_0 = arith.constant 0 : i32
    return %arg0, %arg2, %c0_i32 : i32, i32, i32
  }
  func.func @transform_5(%arg0: i32, %arg1: i32, %arg2: i32, %arg3: i32) -> (i32, i32, i32) {
    %c0_i32 = arith.constant 0 : i32
    %c0_i32_0 = arith.constant 0 : i32
    return %arg0, %arg3, %c0_i32 : i32, i32, i32
  }
  func.func @transform_6(%arg0: i32, %arg1: i32, %arg2: i32, %arg3: i32) -> (i32, i32, i32) {
    %c0_i32 = arith.constant 0 : i32
    %c0_i32_0 = arith.constant 0 : i32
    return %arg0, %arg3, %c0_i32 : i32, i32, i32
  }
  func.func @transform_7(%arg0: i32, %arg1: i32, %arg2: i32, %arg3: i32) -> (i32, i32) {
    %c0_i32 = arith.constant 0 : i32
    %c0_i32_0 = arith.constant 0 : i32
    %c0_i32_1 = arith.constant 0 : i32
    return %c0_i32, %c0_i32_0 : i32, i32
  }
  func.func @transform_8(%arg0: i32, %arg1: i32, %arg2: i32, %arg3: i32) -> (i32, i32) {
    %c0_i32 = arith.constant 0 : i32
    %c0_i32_0 = arith.constant 0 : i32
    %c0_i32_1 = arith.constant 0 : i32
    return %c0_i32, %c0_i32_0 : i32, i32
  }
  func.func @transform_9(%arg0: i32, %arg1: i32, %arg2: i32, %arg3: i32) -> (i32, i32, i32) {
    %c0_i32 = arith.constant 0 : i32
    return %arg0, %arg2, %arg1 : i32, i32, i32
  }
}

</mosaic_0001>

<llo_original>
// kernel: self_attention_forward.5
$region0: #{self_attention_forward.5}
  #allocation0 [shape = 'u32[]', space=smem, size = 0x4, offset = 0x4, fixed_abs, tag = 'smem constant byte address 0x4 - core index']
  #allocation1 [shape = 'u32[144,128]{1,0:T(1,128)}', space=vmem, size = 0x12000, scoped, tag = 'internal scratch']
  #allocation2 [shape = 'f32[32,256]{1,0:T(8,128)}', space=vmem, size = 0x8000, scoped, tag = 'scratch operand']
  %s0 = inlined_call_operand.vmem [shape: bf16[32,256], index: 0, kind: input, shape index: {}]
  %s1 = inlined_call_operand.vmem [shape: bf16[256,256], index: 1, kind: input, shape index: {}]
  %s2 = inlined_call_operand.vmem [shape: f32[1,256], index: 2, kind: input, shape index: {}]
  %s3 = inlined_call_operand.hbm [shape: f32[32,256], index: 3, kind: output, shape index: {}]
  %s4 = sld [smem:[#allocation0]]
  $region30: #{self_attention_forward.5} parent=0
    _
  %s6 = ssub.s32 1, %s4
  %s7 = scalar_select 0, %s6, %s4
  $region1: #{self_attention_forward.5} parent=0
    #allocation3 [shape = 'u8[32768]{0}', space=vmem, size = 0x8000, scoped, tag = 'output window, operand 0, single buffered']
    #allocation4 [shape = 's32[1]{0}', space=sflag, size = 0x4, scoped, tag = 'scoped memory for self_attention_forward.5']
    %8 = vsyncpa [#allocation4], 0
    // Predicated region
    $region2: #{self_attention_forward.5} parent=1 // pred_check
      _
    $region3: #{self_attention_forward.5} parent=1 // pred_check_branch
      %10 = sbr.rel (0) target = $region5
    $region4: #{self_attention_forward.5} parent=1 // pred_region
      _
    $region5: #{self_attention_forward.5} parent=1 // pred_fallthru
      _
    // Predicated region
    $region6: #{self_attention_forward.5} parent=1 // pred_check
      _
    $region7: #{self_attention_forward.5} parent=1 // pred_check_branch
      %12 = sbr.rel (0) target = $region9
    $region8: #{self_attention_forward.5} parent=1 // pred_region
      _
    $region9: #{self_attention_forward.5} parent=1 // pred_fallthru
      _
    // Predicated region
    $region10: #{self_attention_forward.5} parent=1 // pred_check
      _
    $region11: #{self_attention_forward.5} parent=1 // pred_check_branch
      %14 = sbr.rel (0) target = $region13
    $region12: #{self_attention_forward.5} parent=1 // pred_region
      _
    $region13: #{self_attention_forward.5} parent=1 // pred_fallthru
      _
    %p15 = scmp.eq.s32.totalorder 0, 0
    // Predicated region
    $region14: #{self_attention_forward.5} parent=1 // pred_check
      %p16 = pneg %p15
    $region15: #{self_attention_forward.5} parent=1 // pred_check_branch
      %18 = sbr.rel (%p16) target = $region17
    $region16: #{self_attention_forward.5} parent=1 // pred_region
      %v19 = vld [vmem:[%s2] sm:$0x3]
      %v21 = vlaneseq
      %v22 = vshrl.u32 %v21, 7
      %v23 = vsub.s32 0, %v22
      %v24 = vrot.slane %v19, %v23
      %v25 = vlaneseq
      %v26 = vshrl.u32 %v25, 7
      %v27 = vsub.s32 1, %v26
      %v28 = vrot.slane %v19, %v27
      %31 = vst [vmem:[#allocation2] sm:$0xff] %v24
      %32 = vst [vmem:[#allocation2 + $0x8] sm:$0xff] %v28
      %33 = vst [vmem:[#allocation2 + $0x10] sm:$0xff] %v24
      %34 = vst [vmem:[#allocation2 + $0x18] sm:$0xff] %v28
      %35 = vst [vmem:[#allocation2 + $0x20] sm:$0xff] %v24
      %36 = vst [vmem:[#allocation2 + $0x28] sm:$0xff] %v28
      %37 = vst [vmem:[#allocation2 + $0x30] sm:$0xff] %v24
      %38 = vst [vmem:[#allocation2 + $0x38] sm:$0xff] %v28
    $region17: #{self_attention_forward.5} parent=1 // pred_fallthru
      _
    %v39 = vld [vmem:[#allocation2] sm:$0xff]
    %v40 = vld [vmem:[#allocation2 + $0x8] sm:$0xff]
    %v41 = vld [vmem:[#allocation2 + $0x10] sm:$0xff]
    %v42 = vld [vmem:[#allocation2 + $0x18] sm:$0xff]
    %v43 = vld [vmem:[#allocation2 + $0x20] sm:$0xff]
    %v44 = vld [vmem:[#allocation2 + $0x28] sm:$0xff]
    %v45 = vld [vmem:[#allocation2 + $0x30] sm:$0xff]
    %v46 = vld [vmem:[#allocation2 + $0x38] sm:$0xff]
    %v47 = vld [vmem:[%s0] sm:$0xff]
    %v48 = vld [vmem:[%s0 + $0x8] sm:$0xff]
    %v49 = vld [vmem:[%s0 + $0x10] sm:$0xff]
    %v50 = vld [vmem:[%s0 + $0x18] sm:$0xff]
    %v51 = vld [vmem:[%s1] sm:$0xff]
    %v52 = vld [vmem:[%s1 + $0x8] sm:$0xff]
    %v53 = vld [vmem:[%s1 + $0x10] sm:$0xff]
    %v54 = vld [vmem:[%s1 + $0x18] sm:$0xff]
    %v55 = vld [vmem:[%s1 + $0x20] sm:$0xff]
    %v56 = vld [vmem:[%s1 + $0x28] sm:$0xff]
    %v57 = vld [vmem:[%s1 + $0x30] sm:$0xff]
    %v58 = vld [vmem:[%s1 + $0x38] sm:$0xff]
    %v59 = vld [vmem:[%s1 + $0x40] sm:$0xff]
    %v60 = vld [vmem:[%s1 + $0x48] sm:$0xff]
    %v61 = vld [vmem:[%s1 + $0x50] sm:$0xff]
    %v62 = vld [vmem:[%s1 + $0x58] sm:$0xff]
    %v63 = vld [vmem:[%s1 + $0x60] sm:$0xff]
    %v64 = vld [vmem:[%s1 + $0x68] sm:$0xff]
    %v65 = vld [vmem:[%s1 + $0x70] sm:$0xff]
    %v66 = vld [vmem:[%s1 + $0x78] sm:$0xff]
    %v67 = vld [vmem:[%s1 + $0x80] sm:$0xff]
    %v68 = vld [vmem:[%s1 + $0x88] sm:$0xff]
    %v69 = vld [vmem:[%s1 + $0x90] sm:$0xff]
    %v70 = vld [vmem:[%s1 + $0x98] sm:$0xff]
    %v71 = vld [vmem:[%s1 + $0xa0] sm:$0xff]
    %v72 = vld [vmem:[%s1 + $0xa8] sm:$0xff]
    %v73 = vld [vmem:[%s1 + $0xb0] sm:$0xff]
    %v74 = vld [vmem:[%s1 + $0xb8] sm:$0xff]
    %v75 = vld [vmem:[%s1 + $0xc0] sm:$0xff]
    %v76 = vld [vmem:[%s1 + $0xc8] sm:$0xff]
    %v77 = vld [vmem:[%s1 + $0xd0] sm:$0xff]
    %v78 = vld [vmem:[%s1 + $0xd8] sm:$0xff]
    %v79 = vld [vmem:[%s1 + $0xe0] sm:$0xff]
    %v80 = vld [vmem:[%s1 + $0xe8] sm:$0xff]
    %v81 = vld [vmem:[%s1 + $0xf0] sm:$0xff]
    %v82 = vld [vmem:[%s1 + $0xf8] sm:$0xff]
    %v87 = vunpack.c.l.b16 %v47
    %v88 = vunpack.c.h.b16 %v47
    %v89 = vunpack.c.l.b16 %v48
    %v90 = vunpack.c.h.b16 %v48
    %v91 = vunpack.c.l.b16 %v49
    %v92 = vunpack.c.h.b16 %v49
    %v93 = vunpack.c.l.b16 %v50
    %v94 = vunpack.c.h.b16 %v50
    %v95 = vpack.c.b16 %v89, %v87
    %v96 = vpack.c.b16 %v90, %v88
    %v97 = vpack.c.b16 %v93, %v91
    %v98 = vpack.c.b16 %v94, %v92
    %v135 = vunpack.c.l.b16 %v51
    %v136 = vunpack.c.h.b16 %v51
    %v137 = vunpack.c.l.b16 %v52
    %v138 = vunpack.c.h.b16 %v52
    %v139 = vunpack.c.l.b16 %v53
    %v140 = vunpack.c.h.b16 %v53
    %v141 = vunpack.c.l.b16 %v54
    %v142 = vunpack.c.h.b16 %v54
    %v143 = vunpack.c.l.b16 %v55
    %v144 = vunpack.c.h.b16 %v55
    %v145 = vunpack.c.l.b16 %v56
    %v146 = vunpack.c.h.b16 %v56
    %v147 = vunpack.c.l.b16 %v57
    %v148 = vunpack.c.h.b16 %v57
    %v149 = vunpack.c.l.b16 %v58
    %v150 = vunpack.c.h.b16 %v58
    %v151 = vunpack.c.l.b16 %v59
    %v152 = vunpack.c.h.b16 %v59
    %v153 = vunpack.c.l.b16 %v60
    %v154 = vunpack.c.h.b16 %v60
    %v155 = vunpack.c.l.b16 %v61
    %v156 = vunpack.c.h.b16 %v61
    %v157 = vunpack.c.l.b16 %v62
    %v158 = vunpack.c.h.b16 %v62
    %v159 = vunpack.c.l.b16 %v63
    %v160 = vunpack.c.h.b16 %v63
    %v161 = vunpack.c.l.b16 %v64
    %v162 = vunpack.c.h.b16 %v64
    %v163 = vunpack.c.l.b16 %v65
    %v164 = vunpack.c.h.b16 %v65
    %v165 = vunpack.c.l.b16 %v66
    %v166 = vunpack.c.h.b16 %v66
    %v167 = vunpack.c.l.b16 %v67
    %v168 = vunpack.c.h.b16 %v67
    %v169 = vunpack.c.l.b16 %v68
    %v170 = vunpack.c.h.b16 %v68
    %v171 = vunpack.c.l.b16 %v69
    %v172 = vunpack.c.h.b16 %v69
    %v173 = vunpack.c.l.b16 %v70
    %v174 = vunpack.c.h.b16 %v70
    %v175 = vunpack.c.l.b16 %v71
    %v176 = vunpack.c.h.b16 %v71
    %v177 = vunpack.c.l.b16 %v72
    %v178 = vunpack.c.h.b16 %v72
    %v179 = vunpack.c.l.b16 %v73
    %v180 = vunpack.c.h.b16 %v73
    %v181 = vunpack.c.l.b16 %v74
    %v182 = vunpack.c.h.b16 %v74
    %v183 = vunpack.c.l.b16 %v75
    %v184 = vunpack.c.h.b16 %v75
    %v185 = vunpack.c.l.b16 %v76
    %v186 = vunpack.c.h.b16 %v76
    %v187 = vunpack.c.l.b16 %v77
    %v188 = vunpack.c.h.b16 %v77
    %v189 = vunpack.c.l.b16 %v78
    %v190 = vunpack.c.h.b16 %v78
    %v191 = vunpack.c.l.b16 %v79
    %v192 = vunpack.c.h.b16 %v79
    %v193 = vunpack.c.l.b16 %v80
    %v194 = vunpack.c.h.b16 %v80
    %v195 = vunpack.c.l.b16 %v81
    %v196 = vunpack.c.h.b16 %v81
    %v197 = vunpack.c.l.b16 %v82
    %v198 = vunpack.c.h.b16 %v82
    %v199 = vpack.c.b16 %v137, %v135
    %v200 = vpack.c.b16 %v138, %v136
    %v201 = vpack.c.b16 %v141, %v139
    %v202 = vpack.c.b16 %v142, %v140
    %v203 = vpack.c.b16 %v145, %v143
    %v204 = vpack.c.b16 %v146, %v144
    %v205 = vpack.c.b16 %v149, %v147
    %v206 = vpack.c.b16 %v150, %v148
    %v207 = vpack.c.b16 %v153, %v151
    %v208 = vpack.c.b16 %v154, %v152
    %v209 = vpack.c.b16 %v157, %v155
    %v210 = vpack.c.b16 %v158, %v156
    %v211 = vpack.c.b16 %v161, %v159
    %v212 = vpack.c.b16 %v162, %v160
    %v213 = vpack.c.b16 %v165, %v163
    %v214 = vpack.c.b16 %v166, %v164
    %v215 = vpack.c.b16 %v169, %v167
    %v216 = vpack.c.b16 %v170, %v168
    %v217 = vpack.c.b16 %v173, %v171
    %v218 = vpack.c.b16 %v174, %v172
    %v219 = vpack.c.b16 %v177, %v175
    %v220 = vpack.c.b16 %v178, %v176
    %v221 = vpack.c.b16 %v181, %v179
    %v222 = vpack.c.b16 %v182, %v180
    %v223 = vpack.c.b16 %v185, %v183
    %v224 = vpack.c.b16 %v186, %v184
    %v225 = vpack.c.b16 %v189, %v187
    %v226 = vpack.c.b16 %v190, %v188
    %v227 = vpack.c.b16 %v193, %v191
    %v228 = vpack.c.b16 %v194, %v192
    %v229 = vpack.c.b16 %v197, %v195
    %v230 = vpack.c.b16 %v198, %v196
    %263 = vmatprep.subr.bf16.mxu0 %v200
    %264 = vmatpush1.bf16.msra.mxu0 %v199
    %265 = vmatprep.subr.bf16.mxu0 %v202
    %266 = vmatpush1.bf16.msra.mxu0 %v201
    %267 = vmatprep.subr.bf16.mxu0 %v204
    %268 = vmatpush1.bf16.msra.mxu0 %v203
    %269 = vmatprep.subr.bf16.mxu0 %v206
    %270 = vmatpush1.bf16.msra.mxu0 %v205
    %271 = vmatprep.subr.bf16.mxu0 %v208
    %272 = vmatpush1.bf16.msra.mxu0 %v207
    %273 = vmatprep.subr.bf16.mxu0 %v210
    %274 = vmatpush1.bf16.msra.mxu0 %v209
    %275 = vmatprep.subr.bf16.mxu0 %v212
    %276 = vmatpush1.bf16.msra.mxu0 %v211
    %277 = vmatprep.subr.bf16.mxu0 %v214
    %278 = vmatpush1.bf16.msra.mxu0 %v213
    %279 = vmatprep.subr.bf16.mxu0 %v216
    %280 = vmatpush1.bf16.msra.mxu0 %v215
    %281 = vmatprep.subr.bf16.mxu0 %v218
    %282 = vmatpush1.bf16.msra.mxu0 %v217
    %283 = vmatprep.subr.bf16.mxu0 %v220
    %284 = vmatpush1.bf16.msra.mxu0 %v219
    %285 = vmatprep.subr.bf16.mxu0 %v222
    %286 = vmatpush1.bf16.msra.mxu0 %v221
    %287 = vmatprep.subr.bf16.mxu0 %v224
    %288 = vmatpush1.bf16.msra.mxu0 %v223
    %289 = vmatprep.subr.bf16.mxu0 %v226
    %290 = vmatpush1.bf16.msra.mxu0 %v225
    %291 = vmatprep.subr.bf16.mxu0 %v228
    %292 = vmatpush1.bf16.msra.mxu0 %v227
    %293 = vmatprep.subr.bf16.mxu0 %v230
    %294 = vmatpush1.bf16.msra.mxu0 %v229
    %295 = vmatprep.mubr.bf16.mxu0 %v96
    %296 = vmatmul.mubr.bf16.gmra.mrb[0].mxu0 %v95
    %v297 = vpop.f32.mrb[0].mxu0
    %v298 = vadd.f32 0.0, %v297
    %v299 = vpop.f32.mrb[0].mxu0
    %v300 = vadd.f32 0.0, %v299
    %v301 = vpop.f32.mrb[0].mxu0
    %v302 = vadd.f32 0.0, %v301
    %v303 = vpop.f32.mrb[0].mxu0
    %v304 = vadd.f32 0.0, %v303
    %305 = vmatprep.mubr.bf16.mxu0 %v98
    %306 = vmatmul.mubr.bf16.gmra.mrb[0].mxu0 %v97
    %v307 = vpop.f32.mrb[0].mxu0
    %v308 = vadd.f32 0.0, %v307
    %v309 = vpop.f32.mrb[0].mxu0
    %v310 = vadd.f32 0.0, %v309
    %v311 = vpop.f32.mrb[0].mxu0
    %v312 = vadd.f32 0.0, %v311
    %v313 = vpop.f32.mrb[0].mxu0
    %v314 = vadd.f32 0.0, %v313
    %315 = vdwg.mxu0
    %v316 = vadd.f32 %v39, %v298
    %v317 = vadd.f32 %v40, %v300
    %v318 = vadd.f32 %v41, %v302
    %v319 = vadd.f32 %v42, %v304
    %v320 = vadd.f32 %v43, %v308
    %v321 = vadd.f32 %v44, %v310
    %v322 = vadd.f32 %v45, %v312
    %v323 = vadd.f32 %v46, %v314
    %324 = vst [vmem:[#allocation2] sm:$0xff] %v316
    %325 = vst [vmem:[#allocation2 + $0x8] sm:$0xff] %v317
    %326 = vst [vmem:[#allocation2 + $0x10] sm:$0xff] %v318
    %327 = vst [vmem:[#allocation2 + $0x18] sm:$0xff] %v319
    %328 = vst [vmem:[#allocation2 + $0x20] sm:$0xff] %v320
    %329 = vst [vmem:[#allocation2 + $0x28] sm:$0xff] %v321
    %330 = vst [vmem:[#allocation2 + $0x30] sm:$0xff] %v322
    %331 = vst [vmem:[#allocation2 + $0x38] sm:$0xff] %v323
    // Predicated region
    $region18: #{self_attention_forward.5} parent=1 // pred_check
      %p332 = pneg %p15
    $region19: #{self_attention_forward.5} parent=1 // pred_check_branch
      %334 = sbr.rel (%p332) target = $region21
    $region20: #{self_attention_forward.5} parent=1 // pred_region
      %v335 = vld [vmem:[#allocation2] sm:$0xff]
      %v336 = vld [vmem:[#allocation2 + $0x8] sm:$0xff]
      %v337 = vld [vmem:[#allocation2 + $0x10] sm:$0xff]
      %v338 = vld [vmem:[#allocation2 + $0x18] sm:$0xff]
      %v339 = vld [vmem:[#allocation2 + $0x20] sm:$0xff]
      %v340 = vld [vmem:[#allocation2 + $0x28] sm:$0xff]
      %v341 = vld [vmem:[#allocation2 + $0x30] sm:$0xff]
      %v342 = vld [vmem:[#allocation2 + $0x38] sm:$0xff]
      %343 = vst [vmem:[#allocation3] sm:$0xff] %v335
      %344 = vst [vmem:[#allocation3 + $0x8] sm:$0xff] %v336
      %345 = vst [vmem:[#allocation3 + $0x10] sm:$0xff] %v337
      %346 = vst [vmem:[#allocation3 + $0x18] sm:$0xff] %v338
      %347 = vst [vmem:[#allocation3 + $0x20] sm:$0xff] %v339
      %348 = vst [vmem:[#allocation3 + $0x28] sm:$0xff] %v340
      %349 = vst [vmem:[#allocation3 + $0x30] sm:$0xff] %v341
      %350 = vst [vmem:[#allocation3 + $0x38] sm:$0xff] %v342
    $region21: #{self_attention_forward.5} parent=1 // pred_fallthru
      _
    // Predicated region
    $region22: #{self_attention_forward.5} parent=1 // pred_check
      _
    $region23: #{self_attention_forward.5} parent=1 // pred_check_branch
      %352 = sbr.rel (0) target = $region25
    $region24: #{self_attention_forward.5} parent=1 // pred_region
      %s354 = ssub.s32 1024, 1024
      %355 = vsyncadd [#allocation4], %s354
      %s356 = sshll.u32 [#allocation3], 4
      %s357 = int_to_ptr.vmem [resolvable:$true] %s356
      %362 = dma.vmem_to_hbm [thread:$0]  %s357, 1024, %s3, [#allocation4], 256, 256, 16
    $region25: #{self_attention_forward.5} parent=1 // pred_fallthru
      _
    // Predicated region
    $region26: #{self_attention_forward.5} parent=1 // pred_check
      _
    $region27: #{self_attention_forward.5} parent=1 // pred_check_branch
      %364 = sbr.rel (0) target = $region29
    $region28: #{self_attention_forward.5} parent=1 // pred_region
      %365 = dma.done [#allocation4], 1024
    $region29: #{self_attention_forward.5} parent=1 // pred_fallthru
      _
    %366 = vsyncpa [#allocation4], 1

// kernel: self_attention_forward.4
$region0: #{self_attention_forward.4}
  #allocation0 [shape = 'u32[]', space=smem, size = 0x4, offset = 0x4, fixed_abs, tag = 'smem constant byte address 0x4 - core index']
  #allocation1 [shape = 'u32[144,128]{1,0:T(1,128)}', space=vmem, size = 0x12000, scoped, tag = 'internal scratch']
  #allocation2 [shape = 'bf16[16,128]{1,0:T(16,128)(2,1)}', space=vmem, size = 0x1000, scoped, tag = 'scratch operand']
  #allocation3 [shape = 'bf16[16,128]{1,0:T(16,128)(2,1)}', space=vmem, size = 0x1000, scoped, tag = 'scratch operand']
  #allocation4 [shape = 'f32[16,1]{1,0:T(8,128)}', space=vmem, size = 0x2000, scoped, tag = 'scratch operand']
  #allocation5 [shape = 'f32[16,1]{1,0:T(8,128)}', space=vmem, size = 0x2000, scoped, tag = 'scratch operand']
  #allocation6 [shape = 'f32[16,128]{1,0:T(8,128)}', space=vmem, size = 0x2000, scoped, tag = 'scratch operand']
  %s0 = inlined_call_operand.vmem [shape: bf16[2,16,768], index: 0, kind: input, shape index: {}, may-alias: {0,1,2}]
  %s1 = inlined_call_operand.vmem [shape: bf16[2,16,768], index: 1, kind: input, shape index: {}, may-alias: {0,1,2}]
  %s2 = inlined_call_operand.vmem [shape: bf16[2,16,768], index: 2, kind: input, shape index: {}, may-alias: {0,1,2}]
  %s3 = inlined_call_operand.vmem [shape: f32[2,16,64], index: 3, kind: input, shape index: {}, may-alias: {3,5}]
  %s4 = inlined_call_operand.vmem [shape: f32[2,16,64], index: 4, kind: input, shape index: {}, may-alias: {4,6}]
  %s5 = inlined_call_operand.vmem [shape: f32[2,16,64], index: 5, kind: input, shape index: {}, may-alias: {3,5}]
  %s6 = inlined_call_operand.vmem [shape: f32[2,16,64], index: 6, kind: input, shape index: {}, may-alias: {4,6}]
  %s7 = inlined_call_operand.vmem [shape: f32[1,128], index: 7, kind: input, shape index: {}]
  %s8 = inlined_call_operand.vmem [shape: f32[1,128], index: 8, kind: input, shape index: {}]
  %s9 = inlined_call_operand.vmem [shape: bf16[2,16,256], index: 9, kind: output, shape index: {}]
  %s10 = sld [smem:[#allocation0]]
  $region237: #{self_attention_forward.4} parent=0
    _
  %s12 = ssub.s32 1, %s10
  %s13 = scalar_select 0, %s12, %s10
  $region1: #{self_attention_forward.4} parent=0
    #allocation7 [shape = 'u8[8192]{0}', space=vmem, size = 0x2000, scoped, tag = 'input window, operand 0']
    #allocation8 [shape = 'u8[8192]{0}', space=vmem, size = 0x2000, scoped, tag = 'input window, operand 1']
    #allocation9 [shape = 'u8[8192]{0}', space=vmem, size = 0x2000, scoped, tag = 'input window, operand 2']
    #allocation10 [shape = 'u8[8192]{0}', space=vmem, size = 0x2000, scoped, tag = 'output window, operand 0']
    loop: start=0, step=1, limit=6
    $region2: #{self_attention_forward.4} parent=1 // loop_pre_header
      _
    $region3: #{self_attention_forward.4} parent=1 // loop_header
      %s15 = sphi 0, %s19
      %p16 = scmp.ge.s32.totalorder %s15, 6
      %s22 = sphi 0, %s48
      %s23 = sphi 0, %s44
      %s24 = sphi 0, %s40
      %s25 = sphi 0, %s36
      %s26 = sphi 0, %s22
      %s27 = sphi 0, %s23
      %s28 = sphi 0, %s24
      %s29 = sphi 0, %s25
      %s30 = sphi 0, %s26
      %s31 = sphi 0, %s27
      %s32 = sphi 0, %s28
      %s33 = sphi 0, %s29
      %s55 = sphi 0, %s57
      %s58 = sphi 0, %s55
      %s59 = sphi 0, %s58
      %s75 = sphi 0, %s59
      %s87 = sphi 0, %s89
      %s90 = sphi 0, %s87
      %s91 = sphi 0, %s90
      %s107 = sphi 0, %s91
      %s119 = sphi 0, %s121
      %s122 = sphi 0, %s119
      %s123 = sphi 0, %s122
      %s139 = sphi 0, %s123
      %s147 = sphi 0, %s149
      %s150 = sphi 0, %s147
      %s151 = sphi 0, %s150
      %s167 = sphi 0, %s151
      %s175 = sphi 0, %s177
      %s178 = sphi 0, %s175
      %s179 = sphi 0, %s178
      %s195 = sphi 0, %s179
      %s203 = sphi 0, %s205
      %s206 = sphi 0, %s203
      %s207 = sphi 0, %s206
      %s223 = sphi 0, %s207
      %s231 = sphi 0, %s233
      %s234 = sphi 0, %s231
      %s235 = sphi 0, %s234
      %s251 = sphi 0, %s235
      %s255 = sphi 0, %s255
      %s257 = sphi 0, %s255
      %s258 = sphi 0, %s257
      %s272 = sphi 0, %s258
      %s276 = sphi 0, %s276
      %s278 = sphi 0, %s276
      %s279 = sphi 0, %s278
      %s293 = sphi 0, %s279
      %s303 = sphi 0, %s305
      %s306 = sphi 0, %s303
      %s307 = sphi 0, %s306
      %s323 = sphi 0, %s307
    $region4: #{self_attention_forward.4} parent=1 // loop_header_branch
      %18 = sbr.rel (%p16) target = $region8
    $region5: #{self_attention_forward.4} parent=1 // loop_body
      %s20 = ssub.s32 %s15, 1
      %s21 = ssub.s32 %s15, 2
      %s34 = sadd.s32 1, %s25
      %p35 = scmp.ge.s32.totalorder %s34, 1
      %s36 = scalar_select %p35, 0, %s34
      %s37 = sadd.s32 1, %s24
      %s38 = scalar_select %p35, %s37, %s24
      %p39 = scmp.ge.s32.totalorder %s38, 1
      %s40 = scalar_select %p39, 0, %s38
      %s41 = sadd.s32 1, %s23
      %s42 = scalar_select %p39, %s41, %s23
      %p43 = scmp.ge.s32.totalorder %s42, 2
      %s44 = scalar_select %p43, 0, %s42
      %s45 = sadd.s32 1, %s22
      %s46 = scalar_select %p43, %s45, %s22
      %p47 = scmp.ge.s32.totalorder %s46, 2
      %s48 = scalar_select %p47, 0, %s46
      %s49 = ssub.s32 %s22, %s48
      %s50 = ssub.s32 %s24, %s40
      %s51 = sor.u32 %s49, %s50
      %s52 = ssub.s32 %s23, %s44
      %s53 = sor.u32 %s51, %s52
      %p54 = scmp.eq.s32.totalorder %s53, 0
      %s56 = sadd.s32 %s55, 1
      %s57 = scalar_select %p54, %s55, %s56
      %p60 = pneg %p54
      %p61 = scmp.eq.s32.totalorder %s15, 3
      %p62 = por %p60, %p61
      %p63 = scmp.ne.s32.totalorder %s55, %s58
      %p64 = scmp.eq.s32.totalorder %s15, 0
      %p65 = por %p63, %p64
      %p66 = scmp.ne.s32.totalorder %s55, %s58
      %p67 = scmp.eq.s32.totalorder %s20, 3
      %p68 = por %p66, %p67
      %p69 = scmp.ne.s32.totalorder %s58, %s59
      %p70 = scmp.eq.s32.totalorder %s20, 0
      %p71 = por %p69, %p70
      %p72 = scmp.ne.s32.totalorder %s58, %s59
      %p73 = scmp.eq.s32.totalorder %s21, 3
      %p74 = por %p72, %p73
      %p76 = scmp.ne.s32.totalorder %s59, %s75
      %p77 = scmp.eq.s32.totalorder %s21, 0
      %p78 = por %p76, %p77
      %s79 = sadd.s32 %s23, 2
      %s80 = sadd.s32 %s44, 2
      %s81 = ssub.s32 %s22, %s48
      %s82 = ssub.s32 %s25, %s36
      %s83 = sor.u32 %s81, %s82
      %s84 = ssub.s32 %s79, %s80
      %s85 = sor.u32 %s83, %s84
      %p86 = scmp.eq.s32.totalorder %s85, 0
      %s88 = sadd.s32 %s87, 1
      %s89 = scalar_select %p86, %s87, %s88
      %p92 = pneg %p86
      %p93 = scmp.eq.s32.totalorder %s15, 3
      %p94 = por %p92, %p93
      %p95 = scmp.ne.s32.totalorder %s87, %s90
      %p96 = scmp.eq.s32.totalorder %s15, 0
      %p97 = por %p95, %p96
      %p98 = scmp.ne.s32.totalorder %s87, %s90
      %p99 = scmp.eq.s32.totalorder %s20, 3
      %p100 = por %p98, %p99
      %p101 = scmp.ne.s32.totalorder %s90, %s91
      %p102 = scmp.eq.s32.totalorder %s20, 0
      %p103 = por %p101, %p102
      %p104 = scmp.ne.s32.totalorder %s90, %s91
      %p105 = scmp.eq.s32.totalorder %s21, 3
      %p106 = por %p104, %p105
      %p108 = scmp.ne.s32.totalorder %s91, %s107
      %p109 = scmp.eq.s32.totalorder %s21, 0
      %p110 = por %p108, %p109
      %s111 = sadd.s32 %s23, 4
      %s112 = sadd.s32 %s44, 4
      %s113 = ssub.s32 %s22, %s48
      %s114 = ssub.s32 %s25, %s36
      %s115 = sor.u32 %s113, %s114
      %s116 = ssub.s32 %s111, %s112
      %s117 = sor.u32 %s115, %s116
      %p118 = scmp.eq.s32.totalorder %s117, 0
      %s120 = sadd.s32 %s119, 1
      %s121 = scalar_select %p118, %s119, %s120
      %p124 = pneg %p118
      %p125 = scmp.eq.s32.totalorder %s15, 3
      %p126 = por %p124, %p125
      %p127 = scmp.ne.s32.totalorder %s119, %s122
      %p128 = scmp.eq.s32.totalorder %s15, 0
      %p129 = por %p127, %p128
      %p130 = scmp.ne.s32.totalorder %s119, %s122
      %p131 = scmp.eq.s32.totalorder %s20, 3
      %p132 = por %p130, %p131
      %p133 = scmp.ne.s32.totalorder %s122, %s123
      %p134 = scmp.eq.s32.totalorder %s20, 0
      %p135 = por %p133, %p134
      %p136 = scmp.ne.s32.totalorder %s122, %s123
      %p137 = scmp.eq.s32.totalorder %s21, 3
      %p138 = por %p136, %p137
      %p140 = scmp.ne.s32.totalorder %s123, %s139
      %p141 = scmp.eq.s32.totalorder %s21, 0
      %p142 = por %p140, %p141
      %s143 = ssub.s32 %s22, %s48
      %s144 = ssub.s32 %s24, %s40
      %s145 = sor.u32 %s143, %s144
      %p146 = scmp.eq.s32.totalorder %s145, 0
      %s148 = sadd.s32 %s147, 1
      %s149 = scalar_select %p146, %s147, %s148
      %p152 = pneg %p146
      %p153 = scmp.eq.s32.totalorder %s15, 3
      %p154 = por %p152, %p153
      %p155 = scmp.ne.s32.totalorder %s147, %s150
      %p156 = scmp.eq.s32.totalorder %s15, 0
      %p157 = por %p155, %p156
      %p158 = scmp.ne.s32.totalorder %s147, %s150
      %p159 = scmp.eq.s32.totalorder %s20, 3
      %p160 = por %p158, %p159
      %p161 = scmp.ne.s32.totalorder %s150, %s151
      %p162 = scmp.eq.s32.totalorder %s20, 0
      %p163 = por %p161, %p162
      %p164 = scmp.ne.s32.totalorder %s150, %s151
      %p165 = scmp.eq.s32.totalorder %s21, 3
      %p166 = por %p164, %p165
      %p168 = scmp.ne.s32.totalorder %s151, %s167
      %p169 = scmp.eq.s32.totalorder %s21, 0
      %p170 = por %p168, %p169
      %s171 = ssub.s32 %s22, %s48
      %s172 = ssub.s32 %s24, %s40
      %s173 = sor.u32 %s171, %s172
      %p174 = scmp.eq.s32.totalorder %s173, 0
      %s176 = sadd.s32 %s175, 1
      %s177 = scalar_select %p174, %s175, %s176
      %p180 = pneg %p174
      %p181 = scmp.eq.s32.totalorder %s15, 3
      %p182 = por %p180, %p181
      %p183 = scmp.ne.s32.totalorder %s175, %s178
      %p184 = scmp.eq.s32.totalorder %s15, 0
      %p185 = por %p183, %p184
      %p186 = scmp.ne.s32.totalorder %s175, %s178
      %p187 = scmp.eq.s32.totalorder %s20, 3
      %p188 = por %p186, %p187
      %p189 = scmp.ne.s32.totalorder %s178, %s179
      %p190 = scmp.eq.s32.totalorder %s20, 0
      %p191 = por %p189, %p190
      %p192 = scmp.ne.s32.totalorder %s178, %s179
      %p193 = scmp.eq.s32.totalorder %s21, 3
      %p194 = por %p192, %p193
      %p196 = scmp.ne.s32.totalorder %s179, %s195
      %p197 = scmp.eq.s32.totalorder %s21, 0
      %p198 = por %p196, %p197
      %s199 = ssub.s32 %s22, %s48
      %s200 = ssub.s32 %s25, %s36
      %s201 = sor.u32 %s199, %s200
      %p202 = scmp.eq.s32.totalorder %s201, 0
      %s204 = sadd.s32 %s203, 1
      %s205 = scalar_select %p202, %s203, %s204
      %p208 = pneg %p202
      %p209 = scmp.eq.s32.totalorder %s15, 3
      %p210 = por %p208, %p209
      %p211 = scmp.ne.s32.totalorder %s203, %s206
      %p212 = scmp.eq.s32.totalorder %s15, 0
      %p213 = por %p211, %p212
      %p214 = scmp.ne.s32.totalorder %s203, %s206
      %p215 = scmp.eq.s32.totalorder %s20, 3
      %p216 = por %p214, %p215
      %p217 = scmp.ne.s32.totalorder %s206, %s207
      %p218 = scmp.eq.s32.totalorder %s20, 0
      %p219 = por %p217, %p218
      %p220 = scmp.ne.s32.totalorder %s206, %s207
      %p221 = scmp.eq.s32.totalorder %s21, 3
      %p222 = por %p220, %p221
      %p224 = scmp.ne.s32.totalorder %s207, %s223
      %p225 = scmp.eq.s32.totalorder %s21, 0
      %p226 = por %p224, %p225
      %s227 = ssub.s32 %s22, %s48
      %s228 = ssub.s32 %s25, %s36
      %s229 = sor.u32 %s227, %s228
      %p230 = scmp.eq.s32.totalorder %s229, 0
      %s232 = sadd.s32 %s231, 1
      %s233 = scalar_select %p230, %s231, %s232
      %p236 = pneg %p230
      %p237 = scmp.eq.s32.totalorder %s15, 3
      %p238 = por %p236, %p237
      %p239 = scmp.ne.s32.totalorder %s231, %s234
      %p240 = scmp.eq.s32.totalorder %s15, 0
      %p241 = por %p239, %p240
      %p242 = scmp.ne.s32.totalorder %s231, %s234
      %p243 = scmp.eq.s32.totalorder %s20, 3
      %p244 = por %p242, %p243
      %p245 = scmp.ne.s32.totalorder %s234, %s235
      %p246 = scmp.eq.s32.totalorder %s20, 0
      %p247 = por %p245, %p246
      %p248 = scmp.ne.s32.totalorder %s234, %s235
      %p249 = scmp.eq.s32.totalorder %s21, 3
      %p250 = por %p248, %p249
      %p252 = scmp.ne.s32.totalorder %s235, %s251
      %p253 = scmp.eq.s32.totalorder %s21, 0
      %p254 = por %p252, %p253
      %s256 = sadd.s32 %s255, 1
      %p259 = scmp.eq.s32.totalorder %s15, 3
      %p260 = scmp.ne.s32.totalorder %s255, %s257
      %p261 = scmp.eq.s32.totalorder %s15, 0
      %p262 = por %p260, %p261
      %p263 = scmp.ne.s32.totalorder %s255, %s257
      %p264 = scmp.eq.s32.totalorder %s20, 3
      %p265 = por %p263, %p264
      %p266 = scmp.ne.s32.totalorder %s257, %s258
      %p267 = scmp.eq.s32.totalorder %s20, 0
      %p268 = por %p266, %p267
      %p269 = scmp.ne.s32.totalorder %s257, %s258
      %p270 = scmp.eq.s32.totalorder %s21, 3
      %p271 = por %p269, %p270
      %p273 = scmp.ne.s32.totalorder %s258, %s272
      %p274 = scmp.eq.s32.totalorder %s21, 0
      %p275 = por %p273, %p274
      %s277 = sadd.s32 %s276, 1
      %p280 = scmp.eq.s32.totalorder %s15, 3
      %p281 = scmp.ne.s32.totalorder %s276, %s278
      %p282 = scmp.eq.s32.totalorder %s15, 0
      %p283 = por %p281, %p282
      %p284 = scmp.ne.s32.totalorder %s276, %s278
      %p285 = scmp.eq.s32.totalorder %s20, 3
      %p286 = por %p284, %p285
      %p287 = scmp.ne.s32.totalorder %s278, %s279
      %p288 = scmp.eq.s32.totalorder %s20, 0
      %p289 = por %p287, %p288
      %p290 = scmp.ne.s32.totalorder %s278, %s279
      %p291 = scmp.eq.s32.totalorder %s21, 3
      %p292 = por %p290, %p291
      %p294 = scmp.ne.s32.totalorder %s279, %s293
      %p295 = scmp.eq.s32.totalorder %s21, 0
      %p296 = por %p294, %p295
      %s297 = ssub.s32 %s22, %s48
      %s298 = ssub.s32 %s24, %s40
      %s299 = sor.u32 %s297, %s298
      %s300 = ssub.s32 %s23, %s44
      %s301 = sor.u32 %s299, %s300
      %p302 = scmp.eq.s32.totalorder %s301, 0
      %s304 = sadd.s32 %s303, 1
      %s305 = scalar_select %p302, %s303, %s304
      %p308 = pneg %p302
      %p309 = scmp.eq.s32.totalorder %s15, 3
      %p310 = por %p308, %p309
      %p311 = scmp.ne.s32.totalorder %s303, %s306
      %p312 = scmp.eq.s32.totalorder %s15, 0
      %p313 = por %p311, %p312
      %p314 = scmp.ne.s32.totalorder %s303, %s306
      %p315 = scmp.eq.s32.totalorder %s20, 3
      %p316 = por %p314, %p315
      %p317 = scmp.ne.s32.totalorder %s306, %s307
      %p318 = scmp.eq.s32.totalorder %s20, 0
      %p319 = por %p317, %p318
      %p320 = scmp.ne.s32.totalorder %s306, %s307
      %p321 = scmp.eq.s32.totalorder %s21, 3
      %p322 = por %p320, %p321
      %p324 = scmp.ne.s32.totalorder %s307, %s323
      %p325 = scmp.eq.s32.totalorder %s21, 0
      %p326 = por %p324, %p325
      %p327 = scmp.le.s32.totalorder 1, %s15
      %p328 = scmp.lt.s32.totalorder %s15, 5
      %p329 = pnand %p327, %p328
      %p330 = pneg %p329
      // Predicated region
      $region9: #{self_attention_forward.4} parent=5 // pred_check
        _
      $region10: #{self_attention_forward.4} parent=5 // pred_check_branch
        %332 = sbr.rel (%p329) target = $region12
      $region11: #{self_attention_forward.4} parent=5 // pred_region
        %s333 = ssub.s32 %s15, 1
        // Predicated region
        $region13: #{self_attention_forward.4} parent=11 // pred_check
          %p334 = pneg %p268
        $region14: #{self_attention_forward.4} parent=11 // pred_check_branch
          %336 = sbr.rel (%p334) target = $region16
        $region15: #{self_attention_forward.4} parent=11 // pred_region
          _
        $region16: #{self_attention_forward.4} parent=11 // pred_fallthru
          _
        // Predicated region
        $region17: #{self_attention_forward.4} parent=11 // pred_check
          %p337 = pneg %p289
        $region18: #{self_attention_forward.4} parent=11 // pred_check_branch
          %339 = sbr.rel (%p337) target = $region20
        $region19: #{self_attention_forward.4} parent=11 // pred_region
          _
        $region20: #{self_attention_forward.4} parent=11 // pred_fallthru
          _
      $region12: #{self_attention_forward.4} parent=5 // pred_fallthru
        _
      %p340 = scmp.lt.s32.totalorder %s15, 4
      // Predicated region
      $region21: #{self_attention_forward.4} parent=5 // pred_check
        %p341 = pneg %p340
      $region22: #{self_attention_forward.4} parent=5 // pred_check_branch
        %343 = sbr.rel (%p341) target = $region24
      $region23: #{self_attention_forward.4} parent=5 // pred_region
        // Predicated region
        $region25: #{self_attention_forward.4} parent=23 // pred_check
          %p344 = pneg %p65
        $region26: #{self_attention_forward.4} parent=23 // pred_check_branch
          %346 = sbr.rel (%p344) target = $region28
        $region27: #{self_attention_forward.4} parent=23 // pred_region
          %s347 = sand.u32 %s55, 1
          %s348 = sand.u32 %s55, 1
          %s349 = smul.addr %s348, 8
          %s350 = scalar_lea.vmem [#allocation7], %s349
          %s351 = smul.u32 2, %s24
          %s352 = smul.addr %s351, 6
          %s353 = sadd.s32 %s23, %s352
          %s354 = smul.addr %s22, 12
          %s355 = sadd.s32 %s353, %s354
          %s356 = smul.addr %s355, 4
          %s357 = scalar_lea.vmem %s0, %s356
          // Predicated region
          $region29: #{self_attention_forward.4} parent=27 // pred_check
            _
          $region30: #{self_attention_forward.4} parent=27 // pred_check_branch
            %359 = sbr.rel (0) target = $region32
          $region31: #{self_attention_forward.4} parent=27 // pred_region
            // Predicated region
            $region33: #{self_attention_forward.4} parent=31 // pred_check
              _
            $region34: #{self_attention_forward.4} parent=31 // pred_check_branch
              %361 = sbr.rel target = $region36
            $region35: #{self_attention_forward.4} parent=31 // pred_region
              // Predicated region
              $region48: #{self_attention_forward.4} parent=35 // pred_check
                _
              $region49: #{self_attention_forward.4} parent=35 // pred_check_branch
                %378 = sbr.rel (0) target = $region51
              $region50: #{self_attention_forward.4} parent=35 // pred_region
                loop: start=0, step=1, limit=1
                $region52: #{self_attention_forward.4} parent=50 // loop_pre_header
                  _
                $region53: #{self_attention_forward.4} parent=50 // loop_header
                  %s380 = sphi 0, %s384
                  %p381 = scmp.ge.s32.totalorder %s380, 1
                  %s385 = sphi %s357, %s357
                  %s386 = sphi %s350, %s350
                $region54: #{self_attention_forward.4} parent=50 // loop_header_branch
                  %383 = sbr.rel (%p381) target = $region58
                $region55: #{self_attention_forward.4} parent=50 // loop_body
                  _
                $region56: #{self_attention_forward.4} parent=50 // loop_footer
                  %s384 = sadd.s32 1, %s380
                $region57: #{self_attention_forward.4} parent=50 // loop_footer_branch
                  %379 = sbr.rel target = $region53
                $region58: #{self_attention_forward.4} parent=50 // loop_exit
                  _
                loop: start=0, step=1, limit=1
                $region59: #{self_attention_forward.4} parent=50 // loop_pre_header
                  _
                $region60: #{self_attention_forward.4} parent=50 // loop_header
                  %s389 = sphi 0, %s393
                  %p390 = scmp.ge.s32.totalorder %s389, 1
                  %s394 = sphi %s357, %s357
                  %s395 = sphi %s350, %s350
                $region61: #{self_attention_forward.4} parent=50 // loop_header_branch
                  %392 = sbr.rel (%p390) target = $region65
                $region62: #{self_attention_forward.4} parent=50 // loop_body
                  %v396 = vld [vmem:[%s394] sm:$0xf]
                  %397 = vst [vmem:[%s395] sm:$0xf] %v396
                  %v398 = vld [vmem:[%s394 + $0x18] sm:$0xf]
                  %399 = vst [vmem:[%s395 + $0x4] sm:$0xf] %v398
                $region63: #{self_attention_forward.4} parent=50 // loop_footer
                  %s393 = sadd.s32 1, %s389
                $region64: #{self_attention_forward.4} parent=50 // loop_footer_branch
                  %388 = sbr.rel target = $region60
                $region65: #{self_attention_forward.4} parent=50 // loop_exit
                  _
              $region51: #{self_attention_forward.4} parent=35 // pred_fallthru
                _
            $region36: #{self_attention_forward.4} parent=31 // pred_fallthru
              _
            // Predicated region
            $region37: #{self_attention_forward.4} parent=31 // pred_check
              _
            $region38: #{self_attention_forward.4} parent=31 // pred_check_branch
              %363 = sbr.rel (0) target = $region40
            $region39: #{self_attention_forward.4} parent=31 // pred_region
              loop: start=0, step=1, limit=1
              $region41: #{self_attention_forward.4} parent=39 // loop_pre_header
                _
              $region42: #{self_attention_forward.4} parent=39 // loop_header
                %s366 = sphi 0, %s370
                %p367 = scmp.ge.s32.totalorder %s366, 1
                %s371 = sphi %s357, %s357
                %s372 = sphi %s350, %s350
              $region43: #{self_attention_forward.4} parent=39 // loop_header_branch
                %369 = sbr.rel (%p367) target = $region47
              $region44: #{self_attention_forward.4} parent=39 // loop_body
                %v373 = vld [vmem:[%s371] sm:$0xf]
                %374 = vst [vmem:[%s372] sm:$0xf] %v373
                %v375 = vld [vmem:[%s371 + $0x18] sm:$0xf]
                %376 = vst [vmem:[%s372 + $0x4] sm:$0xf] %v375
              $region45: #{self_attention_forward.4} parent=39 // loop_footer
                %s370 = sadd.s32 1, %s366
              $region46: #{self_attention_forward.4} parent=39 // loop_footer_branch
                %365 = sbr.rel target = $region42
              $region47: #{self_attention_forward.4} parent=39 // loop_exit
                _
            $region40: #{self_attention_forward.4} parent=31 // pred_fallthru
              _
          $region32: #{self_attention_forward.4} parent=27 // pred_fallthru
            _
          %400 = vnop
        $region28: #{self_attention_forward.4} parent=23 // pred_fallthru
          _
        // Predicated region
        $region66: #{self_attention_forward.4} parent=23 // pred_check
          %p401 = pneg %p97
        $region67: #{self_attention_forward.4} parent=23 // pred_check_branch
          %403 = sbr.rel (%p401) target = $region69
        $region68: #{self_attention_forward.4} parent=23 // pred_region
          %s404 = sand.u32 %s87, 1
          %s405 = sand.u32 %s87, 1
          %s406 = smul.addr %s405, 8
          %s407 = scalar_lea.vmem [#allocation8], %s406
          %s408 = sadd.s32 %s23, 2
          %s409 = smul.u32 2, %s25
          %s410 = smul.addr %s409, 6
          %s411 = sadd.s32 %s408, %s410
          %s412 = smul.addr %s22, 12
          %s413 = sadd.s32 %s411, %s412
          %s414 = smul.addr %s413, 4
          %s415 = scalar_lea.vmem %s1, %s414
          // Predicated region
          $region70: #{self_attention_forward.4} parent=68 // pred_check
            _
          $region71: #{self_attention_forward.4} parent=68 // pred_check_branch
            %417 = sbr.rel (0) target = $region73
          $region72: #{self_attention_forward.4} parent=68 // pred_region
            // Predicated region
            $region74: #{self_attention_forward.4} parent=72 // pred_check
              _
            $region75: #{self_attention_forward.4} parent=72 // pred_check_branch
              %419 = sbr.rel target = $region77
            $region76: #{self_attention_forward.4} parent=72 // pred_region
              // Predicated region
              $region89: #{self_attention_forward.4} parent=76 // pred_check
                _
              $region90: #{self_attention_forward.4} parent=76 // pred_check_branch
                %436 = sbr.rel (0) target = $region92
              $region91: #{self_attention_forward.4} parent=76 // pred_region
                loop: start=0, step=1, limit=1
                $region93: #{self_attention_forward.4} parent=91 // loop_pre_header
                  _
                $region94: #{self_attention_forward.4} parent=91 // loop_header
                  %s438 = sphi 0, %s442
                  %p439 = scmp.ge.s32.totalorder %s438, 1
                  %s443 = sphi %s415, %s415
                  %s444 = sphi %s407, %s407
                $region95: #{self_attention_forward.4} parent=91 // loop_header_branch
                  %441 = sbr.rel (%p439) target = $region99
                $region96: #{self_attention_forward.4} parent=91 // loop_body
                  _
                $region97: #{self_attention_forward.4} parent=91 // loop_footer
                  %s442 = sadd.s32 1, %s438
                $region98: #{self_attention_forward.4} parent=91 // loop_footer_branch
                  %437 = sbr.rel target = $region94
                $region99: #{self_attention_forward.4} parent=91 // loop_exit
                  _
                loop: start=0, step=1, limit=1
                $region100: #{self_attention_forward.4} parent=91 // loop_pre_header
                  _
                $region101: #{self_attention_forward.4} parent=91 // loop_header
                  %s447 = sphi 0, %s451
                  %p448 = scmp.ge.s32.totalorder %s447, 1
                  %s452 = sphi %s415, %s415
                  %s453 = sphi %s407, %s407
                $region102: #{self_attention_forward.4} parent=91 // loop_header_branch
                  %450 = sbr.rel (%p448) target = $region106
                $region103: #{self_attention_forward.4} parent=91 // loop_body
                  %v454 = vld [vmem:[%s452] sm:$0xf]
                  %455 = vst [vmem:[%s453] sm:$0xf] %v454
                  %v456 = vld [vmem:[%s452 + $0x18] sm:$0xf]
                  %457 = vst [vmem:[%s453 + $0x4] sm:$0xf] %v456
                $region104: #{self_attention_forward.4} parent=91 // loop_footer
                  %s451 = sadd.s32 1, %s447
                $region105: #{self_attention_forward.4} parent=91 // loop_footer_branch
                  %446 = sbr.rel target = $region101
                $region106: #{self_attention_forward.4} parent=91 // loop_exit
                  _
              $region92: #{self_attention_forward.4} parent=76 // pred_fallthru
                _
            $region77: #{self_attention_forward.4} parent=72 // pred_fallthru
              _
            // Predicated region
            $region78: #{self_attention_forward.4} parent=72 // pred_check
              _
            $region79: #{self_attention_forward.4} parent=72 // pred_check_branch
              %421 = sbr.rel (0) target = $region81
            $region80: #{self_attention_forward.4} parent=72 // pred_region
              loop: start=0, step=1, limit=1
              $region82: #{self_attention_forward.4} parent=80 // loop_pre_header
                _
              $region83: #{self_attention_forward.4} parent=80 // loop_header
                %s424 = sphi 0, %s428
                %p425 = scmp.ge.s32.totalorder %s424, 1
                %s429 = sphi %s415, %s415
                %s430 = sphi %s407, %s407
              $region84: #{self_attention_forward.4} parent=80 // loop_header_branch
                %427 = sbr.rel (%p425) target = $region88
              $region85: #{self_attention_forward.4} parent=80 // loop_body
                %v431 = vld [vmem:[%s429] sm:$0xf]
                %432 = vst [vmem:[%s430] sm:$0xf] %v431
                %v433 = vld [vmem:[%s429 + $0x18] sm:$0xf]
                %434 = vst [vmem:[%s430 + $0x4] sm:$0xf] %v433
              $region86: #{self_attention_forward.4} parent=80 // loop_footer
                %s428 = sadd.s32 1, %s424
              $region87: #{self_attention_forward.4} parent=80 // loop_footer_branch
                %423 = sbr.rel target = $region83
              $region88: #{self_attention_forward.4} parent=80 // loop_exit
                _
            $region81: #{self_attention_forward.4} parent=72 // pred_fallthru
              _
          $region73: #{self_attention_forward.4} parent=68 // pred_fallthru
            _
          %458 = vnop
        $region69: #{self_attention_forward.4} parent=23 // pred_fallthru
          _
        // Predicated region
        $region107: #{self_attention_forward.4} parent=23 // pred_check
          %p459 = pneg %p129
        $region108: #{self_attention_forward.4} parent=23 // pred_check_branch
          %461 = sbr.rel (%p459) target = $region110
        $region109: #{self_attention_forward.4} parent=23 // pred_region
          %s462 = sand.u32 %s119, 1
          %s463 = sand.u32 %s119, 1
          %s464 = smul.addr %s463, 8
          %s465 = scalar_lea.vmem [#allocation9], %s464
          %s466 = sadd.s32 %s23, 4
          %s467 = smul.u32 2, %s25
          %s468 = smul.addr %s467, 6
          %s469 = sadd.s32 %s466, %s468
          %s470 = smul.addr %s22, 12
          %s471 = sadd.s32 %s469, %s470
          %s472 = smul.addr %s471, 4
          %s473 = scalar_lea.vmem %s2, %s472
          // Predicated region
          $region111: #{self_attention_forward.4} parent=109 // pred_check
            _
          $region112: #{self_attention_forward.4} parent=109 // pred_check_branch
            %475 = sbr.rel (0) target = $region114
          $region113: #{self_attention_forward.4} parent=109 // pred_region
            // Predicated region
            $region115: #{self_attention_forward.4} parent=113 // pred_check
              _
            $region116: #{self_attention_forward.4} parent=113 // pred_check_branch
              %477 = sbr.rel target = $region118
            $region117: #{self_attention_forward.4} parent=113 // pred_region
              // Predicated region
              $region130: #{self_attention_forward.4} parent=117 // pred_check
                _
              $region131: #{self_attention_forward.4} parent=117 // pred_check_branch
                %494 = sbr.rel (0) target = $region133
              $region132: #{self_attention_forward.4} parent=117 // pred_region
                loop: start=0, step=1, limit=1
                $region134: #{self_attention_forward.4} parent=132 // loop_pre_header
                  _
                $region135: #{self_attention_forward.4} parent=132 // loop_header
                  %s496 = sphi 0, %s500
                  %p497 = scmp.ge.s32.totalorder %s496, 1
                  %s501 = sphi %s473, %s473
                  %s502 = sphi %s465, %s465
                $region136: #{self_attention_forward.4} parent=132 // loop_header_branch
                  %499 = sbr.rel (%p497) target = $region140
                $region137: #{self_attention_forward.4} parent=132 // loop_body
                  _
                $region138: #{self_attention_forward.4} parent=132 // loop_footer
                  %s500 = sadd.s32 1, %s496
                $region139: #{self_attention_forward.4} parent=132 // loop_footer_branch
                  %495 = sbr.rel target = $region135
                $region140: #{self_attention_forward.4} parent=132 // loop_exit
                  _
                loop: start=0, step=1, limit=1
                $region141: #{self_attention_forward.4} parent=132 // loop_pre_header
                  _
                $region142: #{self_attention_forward.4} parent=132 // loop_header
                  %s505 = sphi 0, %s509
                  %p506 = scmp.ge.s32.totalorder %s505, 1
                  %s510 = sphi %s473, %s473
                  %s511 = sphi %s465, %s465
                $region143: #{self_attention_forward.4} parent=132 // loop_header_branch
                  %508 = sbr.rel (%p506) target = $region147
                $region144: #{self_attention_forward.4} parent=132 // loop_body
                  %v512 = vld [vmem:[%s510] sm:$0xf]
                  %513 = vst [vmem:[%s511] sm:$0xf] %v512
                  %v514 = vld [vmem:[%s510 + $0x18] sm:$0xf]
                  %515 = vst [vmem:[%s511 + $0x4] sm:$0xf] %v514
                $region145: #{self_attention_forward.4} parent=132 // loop_footer
                  %s509 = sadd.s32 1, %s505
                $region146: #{self_attention_forward.4} parent=132 // loop_footer_branch
                  %504 = sbr.rel target = $region142
                $region147: #{self_attention_forward.4} parent=132 // loop_exit
                  _
              $region133: #{self_attention_forward.4} parent=117 // pred_fallthru
                _
            $region118: #{self_attention_forward.4} parent=113 // pred_fallthru
              _
            // Predicated region
            $region119: #{self_attention_forward.4} parent=113 // pred_check
              _
            $region120: #{self_attention_forward.4} parent=113 // pred_check_branch
              %479 = sbr.rel (0) target = $region122
            $region121: #{self_attention_forward.4} parent=113 // pred_region
              loop: start=0, step=1, limit=1
              $region123: #{self_attention_forward.4} parent=121 // loop_pre_header
                _
              $region124: #{self_attention_forward.4} parent=121 // loop_header
                %s482 = sphi 0, %s486
                %p483 = scmp.ge.s32.totalorder %s482, 1
                %s487 = sphi %s473, %s473
                %s488 = sphi %s465, %s465
              $region125: #{self_attention_forward.4} parent=121 // loop_header_branch
                %485 = sbr.rel (%p483) target = $region129
              $region126: #{self_attention_forward.4} parent=121 // loop_body
                %v489 = vld [vmem:[%s487] sm:$0xf]
                %490 = vst [vmem:[%s488] sm:$0xf] %v489
                %v491 = vld [vmem:[%s487 + $0x18] sm:$0xf]
                %492 = vst [vmem:[%s488 + $0x4] sm:$0xf] %v491
              $region127: #{self_attention_forward.4} parent=121 // loop_footer
                %s486 = sadd.s32 1, %s482
              $region128: #{self_attention_forward.4} parent=121 // loop_footer_branch
                %481 = sbr.rel target = $region124
              $region129: #{self_attention_forward.4} parent=121 // loop_exit
                _
            $region122: #{self_attention_forward.4} parent=113 // pred_fallthru
              _
          $region114: #{self_attention_forward.4} parent=109 // pred_fallthru
            _
          %516 = vnop
        $region110: #{self_attention_forward.4} parent=23 // pred_fallthru
          _
        // Predicated region
        $region148: #{self_attention_forward.4} parent=23 // pred_check
          %p517 = pneg %p157
        $region149: #{self_attention_forward.4} parent=23 // pred_check_branch
          %519 = sbr.rel (%p517) target = $region151
        $region150: #{self_attention_forward.4} parent=23 // pred_region
          %s520 = smul.u32 2, %s24
          %p521 = scmp.lt.s32.totalorder %s22, 1
          %s522 = scalar_select %p521, %s22, 1
          %p523 = scmp.lt.s32.totalorder %s520, 1
          %s524 = scalar_select %p523, %s520, 1
          %s525 = smul.addr %s522, 2
          %s526 = sadd.s32 %s524, %s525
          %s527 = smul.addr %s526, 8
          %s528 = scalar_lea.vmem %s3, %s527
          %s529 = smul.u32 2, %s24
        $region151: #{self_attention_forward.4} parent=23 // pred_fallthru
          _
        // Predicated region
        $region152: #{self_attention_forward.4} parent=23 // pred_check
          %p530 = pneg %p185
        $region153: #{self_attention_forward.4} parent=23 // pred_check_branch
          %532 = sbr.rel (%p530) target = $region155
        $region154: #{self_attention_forward.4} parent=23 // pred_region
          %s533 = smul.u32 2, %s24
          %p534 = scmp.lt.s32.totalorder %s22, 1
          %s535 = scalar_select %p534, %s22, 1
          %p536 = scmp.lt.s32.totalorder %s533, 1
          %s537 = scalar_select %p536, %s533, 1
          %s538 = smul.addr %s535, 2
          %s539 = sadd.s32 %s537, %s538
          %s540 = smul.addr %s539, 8
          %s541 = scalar_lea.vmem %s4, %s540
          %s542 = smul.u32 2, %s24
        $region155: #{self_attention_forward.4} parent=23 // pred_fallthru
          _
        // Predicated region
        $region156: #{self_attention_forward.4} parent=23 // pred_check
          %p543 = pneg %p213
        $region157: #{self_attention_forward.4} parent=23 // pred_check_branch
          %545 = sbr.rel (%p543) target = $region159
        $region158: #{self_attention_forward.4} parent=23 // pred_region
          %s546 = smul.u32 2, %s25
          %p547 = scmp.lt.s32.totalorder %s22, 1
          %s548 = scalar_select %p547, %s22, 1
          %p549 = scmp.lt.s32.totalorder %s546, 1
          %s550 = scalar_select %p549, %s546, 1
          %s551 = smul.addr %s548, 2
          %s552 = sadd.s32 %s550, %s551
          %s553 = smul.addr %s552, 8
          %s554 = scalar_lea.vmem %s5, %s553
          %s555 = smul.u32 2, %s25
        $region159: #{self_attention_forward.4} parent=23 // pred_fallthru
          _
        // Predicated region
        $region160: #{self_attention_forward.4} parent=23 // pred_check
          %p556 = pneg %p241
        $region161: #{self_attention_forward.4} parent=23 // pred_check_branch
          %558 = sbr.rel (%p556) target = $region163
        $region162: #{self_attention_forward.4} parent=23 // pred_region
          %s559 = smul.u32 2, %s25
          %p560 = scmp.lt.s32.totalorder %s22, 1
          %s561 = scalar_select %p560, %s22, 1
          %p562 = scmp.lt.s32.totalorder %s559, 1
          %s563 = scalar_select %p562, %s559, 1
          %s564 = smul.addr %s561, 2
          %s565 = sadd.s32 %s563, %s564
          %s566 = smul.addr %s565, 8
          %s567 = scalar_lea.vmem %s6, %s566
          %s568 = smul.u32 2, %s25
        $region163: #{self_attention_forward.4} parent=23 // pred_fallthru
          _
      $region24: #{self_attention_forward.4} parent=5 // pred_fallthru
        _
      %p569 = scmp.le.s32.totalorder 1, %s15
      %p570 = scmp.lt.s32.totalorder %s15, 5
      %p571 = pnand %p569, %p570
      %p572 = pneg %p571
      // Predicated region
      $region164: #{self_attention_forward.4} parent=5 // pred_check
        _
      $region165: #{self_attention_forward.4} parent=5 // pred_check_branch
        %574 = sbr.rel (%p571) target = $region167
      $region166: #{self_attention_forward.4} parent=5 // pred_region
        %s575 = ssub.s32 %s15, 1
        %s576 = sand.u32 %s58, 1
        %s577 = sand.u32 %s58, 1
        %s578 = smul.addr %s577, 8
        %s579 = scalar_lea.vmem [#allocation7], %s578
        // Predicated region
        $region168: #{self_attention_forward.4} parent=166 // pred_check
          %p580 = pneg %p71
        $region169: #{self_attention_forward.4} parent=166 // pred_check_branch
          %582 = sbr.rel (%p580) target = $region171
        $region170: #{self_attention_forward.4} parent=166 // pred_region
          _
        $region171: #{self_attention_forward.4} parent=166 // pred_fallthru
          _
        %s583 = sand.u32 %s90, 1
        %s584 = sand.u32 %s90, 1
        %s585 = smul.addr %s584, 8
        %s586 = scalar_lea.vmem [#allocation8], %s585
        // Predicated region
        $region172: #{self_attention_forward.4} parent=166 // pred_check
          %p587 = pneg %p103
        $region173: #{self_attention_forward.4} parent=166 // pred_check_branch
          %589 = sbr.rel (%p587) target = $region175
        $region174: #{self_attention_forward.4} parent=166 // pred_region
          _
        $region175: #{self_attention_forward.4} parent=166 // pred_fallthru
          _
        %s590 = sand.u32 %s122, 1
        %s591 = sand.u32 %s122, 1
        %s592 = smul.addr %s591, 8
        %s593 = scalar_lea.vmem [#allocation9], %s592
        // Predicated region
        $region176: #{self_attention_forward.4} parent=166 // pred_check
          %p594 = pneg %p135
        $region177: #{self_attention_forward.4} parent=166 // pred_check_branch
          %596 = sbr.rel (%p594) target = $region179
        $region178: #{self_attention_forward.4} parent=166 // pred_region
          _
        $region179: #{self_attention_forward.4} parent=166 // pred_fallthru
          _
        %s597 = sand.u32 %s58, 1
        %s598 = sand.u32 %s58, 1
        %s599 = smul.addr %s598, 8
        %s600 = scalar_lea.vmem [#allocation7], %s599
        %p601 = pneg %p71
        %p602 = pneg %p68
        %s603 = sand.u32 %s90, 1
        %s604 = sand.u32 %s90, 1
        %s605 = smul.addr %s604, 8
        %s606 = scalar_lea.vmem [#allocation8], %s605
        %p607 = pneg %p103
        %p608 = pneg %p100
        %s609 = sand.u32 %s122, 1
        %s610 = sand.u32 %s122, 1
        %s611 = smul.addr %s610, 8
        %s612 = scalar_lea.vmem [#allocation9], %s611
        %p613 = pneg %p135
        %p614 = pneg %p132
        %s615 = smul.u32 2, %s28
        %p616 = scmp.lt.s32.totalorder %s26, 1
        %s617 = scalar_select %p616, %s26, 1
        %p618 = scmp.lt.s32.totalorder %s615, 1
        %s619 = scalar_select %p618, %s615, 1
        %s620 = smul.addr %s617, 2
        %s621 = sadd.s32 %s619, %s620
        %s622 = smul.addr %s621, 8
        %s623 = scalar_lea.vmem %s3, %s622
        %p624 = pneg %p163
        %p625 = pneg %p160
        %s626 = smul.u32 2, %s28
        %p627 = scmp.lt.s32.totalorder %s26, 1
        %s628 = scalar_select %p627, %s26, 1
        %p629 = scmp.lt.s32.totalorder %s626, 1
        %s630 = scalar_select %p629, %s626, 1
        %s631 = smul.addr %s628, 2
        %s632 = sadd.s32 %s630, %s631
        %s633 = smul.addr %s632, 8
        %s634 = scalar_lea.vmem %s4, %s633
        %p635 = pneg %p191
        %p636 = pneg %p188
        %s637 = smul.u32 2, %s29
        %p638 = scmp.lt.s32.totalorder %s26, 1
        %s639 = scalar_select %p638, %s26, 1
        %p640 = scmp.lt.s32.totalorder %s637, 1
        %s641 = scalar_select %p640, %s637, 1
        %s642 = smul.addr %s639, 2
        %s643 = sadd.s32 %s641, %s642
        %s644 = smul.addr %s643, 8
        %s645 = scalar_lea.vmem %s5, %s644
        %p646 = pneg %p219
        %p647 = pneg %p216
        %s648 = smul.u32 2, %s29
        %p649 = scmp.lt.s32.totalorder %s26, 1
        %s650 = scalar_select %p649, %s26, 1
        %p651 = scmp.lt.s32.totalorder %s648, 1
        %s652 = scalar_select %p651, %s648, 1
        %s653 = smul.addr %s650, 2
        %s654 = sadd.s32 %s652, %s653
        %s655 = smul.addr %s654, 8
        %s656 = scalar_lea.vmem %s6, %s655
        %p657 = pneg %p247
        %p658 = pneg %p244
        %p659 = pneg %p268
        %p660 = pneg %p265
        %p661 = pneg %p289
        %p662 = pneg %p286
        %p663 = pneg %p319
        %p664 = pneg %p316
        %s665 = sand.u32 %s306, 1
        %s666 = sand.u32 %s306, 1
        %s667 = smul.addr %s666, 8
        %s668 = scalar_lea.vmem [#allocation10], %s667
        %s669 = smul.u32 2, %s28
        %s670 = sadd.s32 %s27, 2
        %s671 = smul.u32 2, %s29
        %s672 = sadd.s32 %s27, 4
        %s673 = smul.u32 2, %s29
        %s674 = smul.u32 2, %s28
        %p675 = scmp.lt.s32.totalorder %s26, 1
        %s676 = scalar_select %p675, %s26, 1
        %p677 = scmp.lt.s32.totalorder %s674, 1
        %s678 = scalar_select %p677, %s674, 1
        %s679 = smul.addr %s676, 2
        %s680 = sadd.s32 %s678, %s679
        %s681 = smul.addr %s680, 8
        %s682 = scalar_lea.vmem %s3, %s681
        %s683 = smul.u32 2, %s28
        %s684 = smul.u32 2, %s28
        %p685 = scmp.lt.s32.totalorder %s26, 1
        %s686 = scalar_select %p685, %s26, 1
        %p687 = scmp.lt.s32.totalorder %s684, 1
        %s688 = scalar_select %p687, %s684, 1
        %s689 = smul.addr %s686, 2
        %s690 = sadd.s32 %s688, %s689
        %s691 = smul.addr %s690, 8
        %s692 = scalar_lea.vmem %s4, %s691
        %s693 = smul.u32 2, %s28
        %s694 = smul.u32 2, %s29
        %p695 = scmp.lt.s32.totalorder %s26, 1
        %s696 = scalar_select %p695, %s26, 1
        %p697 = scmp.lt.s32.totalorder %s694, 1
        %s698 = scalar_select %p697, %s694, 1
        %s699 = smul.addr %s696, 2
        %s700 = sadd.s32 %s698, %s699
        %s701 = smul.addr %s700, 8
        %s702 = scalar_lea.vmem %s5, %s701
        %s703 = smul.u32 2, %s29
        %s704 = smul.u32 2, %s29
        %p705 = scmp.lt.s32.totalorder %s26, 1
        %s706 = scalar_select %p705, %s26, 1
        %p707 = scmp.lt.s32.totalorder %s704, 1
        %s708 = scalar_select %p707, %s704, 1
        %s709 = smul.addr %s706, 2
        %s710 = sadd.s32 %s708, %s709
        %s711 = smul.addr %s710, 8
        %s712 = scalar_lea.vmem %s6, %s711
        %s713 = smul.u32 2, %s29
        %s714 = smul.u32 2, %s28
        %p716 = scmp.eq.s32.totalorder %s29, 0
        // Predicated region
        $region180: #{self_attention_forward.4} parent=166 // pred_check
          %p717 = pneg %p716
        $region181: #{self_attention_forward.4} parent=166 // pred_check_branch
          %719 = sbr.rel (%p717) target = $region183
        $region182: #{self_attention_forward.4} parent=166 // pred_region
          %v720 = vld [vmem:[%s579] sm:$0xf]
          %v721 = vld [vmem:[%s579 + $0x4] sm:$0xf]
          %v722 = vunpack.c.l.bf16 %v720
          %v723 = vunpack.c.l.bf16 %v721
          %v724 = vmul.f32 %v722, %v722
          %v725 = vmul.f32 %v723, %v723
          %726 = vadd.xlane.f32.xlu0 %v724
          %v727 = vpop.xlane.xlu0 %726
          %728 = vadd.xlane.f32.xlu0 %v725
          %v729 = vpop.xlane.xlu0 %728
          %v730 = vrcp.pop 128.0
          %v731 = vmul.f32 %v727, %v730
          %v732 = vmul.f32 %v729, %v730
          %v733 = vadd.f32 %v731, 1e-06
          %v734 = vadd.f32 %v732, 1e-06
          %v735 = vrsqrt.pop %v733
          %v736 = vrsqrt.pop %v734
          %v737 = vmul.f32 %v722, %v735
          %v738 = vmul.f32 %v723, %v736
          %v739 = vld [vmem:[%s7] sm:$0x1]
          %v741 = vlaneseq
          %v742 = vshrl.u32 %v741, 7
          %v743 = vsub.s32 0, %v742
          %v744 = vrot.slane %v739, %v743
          %v746 = vmul.f32 %v737, %v744
          %v747 = vmul.f32 %v738, %v744
          %v748 = vld [vmem:[%s682] sm:$0xff]
          %v749 = vld [vmem:[%s682 + $0x8] sm:$0xff]
          %v750 = vld [vmem:[%s692] sm:$0xff]
          %v751 = vld [vmem:[%s692 + $0x8] sm:$0xff]
          %v752 = vmul.f32 %v746, %v748
          %v753 = vmul.f32 %v747, %v749
          %756 = vrot.lane.b32.xlu0 %v750, 64
          %v757 = vpop.permute.xlu0 %756
          %758 = vrot.lane.b32.xlu0 %v751, 64
          %v759 = vpop.permute.xlu0 %758
          %v762 = vmul.f32 %v746, %v757
          %v763 = vmul.f32 %v747, %v759
          %766 = vrot.lane.b32.xlu0 %v762, 64
          %v767 = vpop.permute.xlu0 %766
          %768 = vrot.lane.b32.xlu0 %v763, 64
          %v769 = vpop.permute.xlu0 %768
          %v772 = vsub.f32 %v752, %v767
          %v773 = vsub.f32 %v753, %v769
          %v774 = vpack.c.bf16 %v773, %v772
          %vm775 = vcmask 523264
          %776 = vst.msk [vmem:[#allocation2] sm:$0xff] %vm775, %v774
          %v777 = vmul.f32 %v746, %v750
          %v778 = vmul.f32 %v747, %v751
          %781 = vrot.lane.b32.xlu0 %v748, 64
          %v782 = vpop.permute.xlu0 %781
          %783 = vrot.lane.b32.xlu0 %v749, 64
          %v784 = vpop.permute.xlu0 %783
          %v787 = vmul.f32 %v746, %v782
          %v788 = vmul.f32 %v747, %v784
          %791 = vrot.lane.b32.xlu0 %v787, 64
          %v792 = vpop.permute.xlu0 %791
          %793 = vrot.lane.b32.xlu0 %v788, 64
          %v794 = vpop.permute.xlu0 %793
          %v797 = vadd.f32 %v777, %v792
          %v798 = vadd.f32 %v778, %v794
          %v799 = vpack.c.bf16 %v798, %v797
          %801 = vrot.lane.b32.xlu0 %v799, 64
          %v802 = vpop.permute.xlu0 %801
          %vm804 = vcmask 1048064
          %805 = vst.msk [vmem:[#allocation2] sm:$0xff] %vm804, %v802
          %vm806 = vcmask 7168
          %807 = vst.msk [vmem:[#allocation4] sm:$0xff] %vm806, -inf
          %808 = vst.msk [vmem:[#allocation4 + $0x8] sm:$0xff] %vm806, -inf
          %809 = vst.msk [vmem:[#allocation5] sm:$0xff] %vm806, 0.0
          %810 = vst.msk [vmem:[#allocation5 + $0x8] sm:$0xff] %vm806, 0.0
          %811 = vst [vmem:[#allocation6] sm:$0xff] 0.0
          %812 = vst [vmem:[#allocation6 + $0x8] sm:$0xff] 0.0
        $region183: #{self_attention_forward.4} parent=166 // pred_fallthru
          _
        %v813 = vld [vmem:[%s586] sm:$0xf]
        %v814 = vld [vmem:[%s586 + $0x4] sm:$0xf]
        %v815 = vunpack.c.l.bf16 %v813
        %v816 = vunpack.c.l.bf16 %v814
        %v817 = vmul.f32 %v815, %v815
        %v818 = vmul.f32 %v816, %v816
        %819 = vadd.xlane.f32.xlu0 %v817
        %v820 = vpop.xlane.xlu0 %819
        %821 = vadd.xlane.f32.xlu0 %v818
        %v822 = vpop.xlane.xlu0 %821
        %v823 = vrcp.pop 128.0
        %v824 = vmul.f32 %v820, %v823
        %v825 = vmul.f32 %v822, %v823
        %v826 = vadd.f32 %v824, 1e-06
        %v827 = vadd.f32 %v825, 1e-06
        %v828 = vrsqrt.pop %v826
        %v829 = vrsqrt.pop %v827
        %v830 = vmul.f32 %v815, %v828
        %v831 = vmul.f32 %v816, %v829
        %v832 = vld [vmem:[%s8] sm:$0x1]
        %v834 = vlaneseq
        %v835 = vshrl.u32 %v834, 7
        %v836 = vsub.s32 0, %v835
        %v837 = vrot.slane %v832, %v836
        %v839 = vmul.f32 %v830, %v837
        %v840 = vmul.f32 %v831, %v837
        %v841 = vld [vmem:[%s702] sm:$0xff]
        %v842 = vld [vmem:[%s702 + $0x8] sm:$0xff]
        %v843 = vld [vmem:[%s712] sm:$0xff]
        %v844 = vld [vmem:[%s712 + $0x8] sm:$0xff]
        %v845 = vmul.f32 %v839, %v841
        %v846 = vmul.f32 %v840, %v842
        %849 = vrot.lane.b32.xlu0 %v843, 64
        %v850 = vpop.permute.xlu0 %849
        %851 = vrot.lane.b32.xlu0 %v844, 64
        %v852 = vpop.permute.xlu0 %851
        %v855 = vmul.f32 %v839, %v850
        %v856 = vmul.f32 %v840, %v852
        %859 = vrot.lane.b32.xlu0 %v855, 64
        %v860 = vpop.permute.xlu0 %859
        %861 = vrot.lane.b32.xlu0 %v856, 64
        %v862 = vpop.permute.xlu0 %861
        %v865 = vsub.f32 %v845, %v860
        %v866 = vsub.f32 %v846, %v862
        %v867 = vpack.c.bf16 %v866, %v865
        %vm868 = vcmask 523264
        %869 = vst.msk [vmem:[#allocation3] sm:$0xff] %vm868, %v867
        %v870 = vmul.f32 %v839, %v843
        %v871 = vmul.f32 %v840, %v844
        %874 = vrot.lane.b32.xlu0 %v841, 64
        %v875 = vpop.permute.xlu0 %874
        %876 = vrot.lane.b32.xlu0 %v842, 64
        %v877 = vpop.permute.xlu0 %876
        %v880 = vmul.f32 %v839, %v875
        %v881 = vmul.f32 %v840, %v877
        %884 = vrot.lane.b32.xlu0 %v880, 64
        %v885 = vpop.permute.xlu0 %884
        %886 = vrot.lane.b32.xlu0 %v881, 64
        %v887 = vpop.permute.xlu0 %886
        %v890 = vadd.f32 %v870, %v885
        %v891 = vadd.f32 %v871, %v887
        %v892 = vpack.c.bf16 %v891, %v890
        %894 = vrot.lane.b32.xlu0 %v892, 64
        %v895 = vpop.permute.xlu0 %894
        %vm897 = vcmask 1048064
        %898 = vst.msk [vmem:[#allocation3] sm:$0xff] %vm897, %v895
        %v899 = vld [vmem:[#allocation2] sm:$0xff]
        %v900 = vld [vmem:[#allocation3] sm:$0xff]
        %901 = vmatprep.subr.bf16.mxu0 0
        %902 = vmatpush1.bf16.xpose.msra.mxu0 %v900
        %903 = vmatprep.subr.bf16.mxu0 0
        %904 = vmatpush1.bf16.xpose.msra.mxu0 0
        %905 = vmatprep.subr.bf16.mxu0 0
        %906 = vmatpush1.bf16.xpose.msra.mxu0 0
        %907 = vmatprep.subr.bf16.mxu0 0
        %908 = vmatpush1.bf16.xpose.msra.mxu0 0
        %909 = vmatprep.subr.bf16.mxu0 0
        %910 = vmatpush1.bf16.xpose.msra.mxu0 0
        %911 = vmatprep.subr.bf16.mxu0 0
        %912 = vmatpush1.bf16.xpose.msra.mxu0 0
        %913 = vmatprep.subr.bf16.mxu0 0
        %914 = vmatpush1.bf16.xpose.msra.mxu0 0
        %915 = vmatprep.subr.bf16.mxu0 0
        %916 = vmatpush1.bf16.xpose.msra.mxu0 0
        %917 = vmatprep.subr.bf16.mxu0 0
        %918 = vmatpush1.bf16.xpose.msra.mxu0 0
        %919 = vmatprep.subr.bf16.mxu0 0
        %920 = vmatpush1.bf16.xpose.msra.mxu0 0
        %921 = vmatprep.subr.bf16.mxu0 0
        %922 = vmatpush1.bf16.xpose.msra.mxu0 0
        %923 = vmatprep.subr.bf16.mxu0 0
        %924 = vmatpush1.bf16.xpose.msra.mxu0 0
        %925 = vmatprep.subr.bf16.mxu0 0
        %926 = vmatpush1.bf16.xpose.msra.mxu0 0
        %927 = vmatprep.subr.bf16.mxu0 0
        %928 = vmatpush1.bf16.xpose.msra.mxu0 0
        %929 = vmatprep.subr.bf16.mxu0 0
        %930 = vmatpush1.bf16.xpose.msra.mxu0 0
        %931 = vmatprep.subr.bf16.mxu0 0
        %932 = vmatpush1.bf16.xpose.msra.mxu0 0
        %933 = vmatprep.mubr.bf16.mxu0 0
        %934 = vmatmul.mubr.bf16.gmra.mrb[0].mxu0 %v899
        %v935 = vpop.f32.mrb[0].mxu0
        %v936 = vadd.f32 0.0, %v935
        %v937 = vpop.f32.mrb[0].mxu0
        %v938 = vpop.f32.mrb[0].mxu0
        %v939 = vadd.f32 0.0, %v938
        %v940 = vpop.f32.mrb[0].mxu0
        %941 = vdwg.mxu0
        %v942 = vmul.f32 %v936, 0.088388346
        %v943 = vmul.f32 %v939, 0.088388346
        %v944 = vld [vmem:[#allocation4] sm:$0xff]
        %v945 = vld [vmem:[#allocation4 + $0x8] sm:$0xff]
        %vm946 = vcmask 130048
        %v947 = vsel %vm946, %v942, -inf
        %948 = vmax.xlane.f32.xlu0 %v947
        %v949 = vpop.xlane.xlu0 %948
        %v950 = vsel %vm946, %v943, -inf
        %951 = vmax.xlane.f32.xlu0 %v950
        %v952 = vpop.xlane.xlu0 %951
        %v953 = vmax.f32 %v944, %v949
        %v954 = vmax.f32 %v945, %v952
        %v955 = vsub.f32 %v944, %v953
        %v956 = vsub.f32 %v945, %v954
        %v957 = vmul.f32 %v955, 1.442695
        %v958 = vpow.pop %v957
        %v959 = vmul.f32 %v956, 1.442695
        %v960 = vpow.pop %v959
        %962 = vset.pattern.permute.xlu0 0
        %963 = vperm.xlu0 %962, %v953
        %v964 = vpop.permute.xlu0 %963
        %967 = vset.pattern.permute.xlu0 0
        %968 = vperm.xlu0 %967, %v954
        %v969 = vpop.permute.xlu0 %968
        %v971 = vsub.f32 %v942, %v964
        %v972 = vsub.f32 %v943, %v969
        %v973 = vmul.f32 %v971, 1.442695
        %v974 = vpow.pop %v973
        %v975 = vmul.f32 %v972, 1.442695
        %v976 = vpow.pop %v975
        %v977 = vld [vmem:[#allocation5] sm:$0xff]
        %v978 = vld [vmem:[#allocation5 + $0x8] sm:$0xff]
        %v979 = vmul.f32 %v958, %v977
        %v980 = vmul.f32 %v960, %v978
        %v981 = vsel %vm946, %v974, 0.0
        %982 = vadd.xlane.f32.xlu0 %v981
        %v983 = vpop.xlane.xlu0 %982
        %v984 = vsel %vm946, %v976, 0.0
        %985 = vadd.xlane.f32.xlu0 %v984
        %v986 = vpop.xlane.xlu0 %985
        %v987 = vadd.f32 %v979, %v983
        %v988 = vadd.f32 %v980, %v986
        %vm989 = vcmask 7168
        %990 = vst.msk [vmem:[#allocation5] sm:$0xff] %vm989, %v987
        %991 = vst.msk [vmem:[#allocation5 + $0x8] sm:$0xff] %vm989, %v988
        %v992 = vld [vmem:[#allocation6] sm:$0xff]
        %v993 = vld [vmem:[#allocation6 + $0x8] sm:$0xff]
        %995 = vset.pattern.permute.xlu0 0
        %996 = vperm.xlu0 %995, %v958
        %v997 = vpop.permute.xlu0 %996
        %1000 = vset.pattern.permute.xlu0 0
        %1001 = vperm.xlu0 %1000, %v960
        %v1002 = vpop.permute.xlu0 %1001
        %v1004 = vmul.f32 %v997, %v992
        %v1005 = vmul.f32 %v1002, %v993
        %v1006 = vpack.c.bf16 %v976, %v974
        %v1007 = vld [vmem:[%s593] sm:$0xf]
        %v1008 = vld [vmem:[%s593 + $0x4] sm:$0xf]
        %v1011 = vunpack.c.l.b16 %v1007
        %v1012 = vunpack.c.l.b16 %v1008
        %v1013 = vpack.c.b16 %v1012, %v1011
        %v1016 = vsel %vm946, %v1006, 0
        %1018 = vmatprep.subr.bf16.mxu0 0
        %1019 = vmatpush1.bf16.msra.mxu0 %v1013
        %1020 = vmatprep.subr.bf16.mxu0 0
        %1021 = vmatpush1.bf16.msra.mxu0 0
        %1022 = vmatprep.subr.bf16.mxu0 0
        %1023 = vmatpush1.bf16.msra.mxu0 0
        %1024 = vmatprep.subr.bf16.mxu0 0
        %1025 = vmatpush1.bf16.msra.mxu0 0
        %1026 = vmatprep.subr.bf16.mxu0 0
        %1027 = vmatpush1.bf16.msra.mxu0 0
        %1028 = vmatprep.subr.bf16.mxu0 0
        %1029 = vmatpush1.bf16.msra.mxu0 0
        %1030 = vmatprep.subr.bf16.mxu0 0
        %1031 = vmatpush1.bf16.msra.mxu0 0
        %1032 = vmatprep.subr.bf16.mxu0 0
        %1033 = vmatpush1.bf16.msra.mxu0 0
        %1034 = vmatprep.subr.bf16.mxu0 0
        %1035 = vmatpush1.bf16.msra.mxu0 0
        %1036 = vmatprep.subr.bf16.mxu0 0
        %1037 = vmatpush1.bf16.msra.mxu0 0
        %1038 = vmatprep.subr.bf16.mxu0 0
        %1039 = vmatpush1.bf16.msra.mxu0 0
        %1040 = vmatprep.subr.bf16.mxu0 0
        %1041 = vmatpush1.bf16.msra.mxu0 0
        %1042 = vmatprep.subr.bf16.mxu0 0
        %1043 = vmatpush1.bf16.msra.mxu0 0
        %1044 = vmatprep.subr.bf16.mxu0 0
        %1045 = vmatpush1.bf16.msra.mxu0 0
        %1046 = vmatprep.subr.bf16.mxu0 0
        %1047 = vmatpush1.bf16.msra.mxu0 0
        %1048 = vmatprep.subr.bf16.mxu0 0
        %1049 = vmatpush1.bf16.msra.mxu0 0
        %1050 = vmatprep.mubr.bf16.mxu0 0
        %1051 = vmatmul.mubr.bf16.gmra.mrb[0].mxu0 %v1016
        %v1052 = vpop.f32.mrb[0].mxu0
        %v1053 = vadd.f32 0.0, %v1052
        %v1054 = vpop.f32.mrb[0].mxu0
        %v1055 = vpop.f32.mrb[0].mxu0
        %v1056 = vadd.f32 0.0, %v1055
        %v1057 = vpop.f32.mrb[0].mxu0
        %1058 = vdwg.mxu0
        %v1059 = vadd.f32 %v1004, %v1053
        %v1060 = vadd.f32 %v1005, %v1056
        %1061 = vst [vmem:[#allocation6] sm:$0xff] %v1059
        %1062 = vst [vmem:[#allocation6 + $0x8] sm:$0xff] %v1060
        %1063 = vst.msk [vmem:[#allocation4] sm:$0xff] %vm989, %v953
        %1064 = vst.msk [vmem:[#allocation4 + $0x8] sm:$0xff] %vm989, %v954
        // Predicated region
        $region184: #{self_attention_forward.4} parent=166 // pred_check
          %p1065 = pneg %p716
        $region185: #{self_attention_forward.4} parent=166 // pred_check_branch
          %1067 = sbr.rel (%p1065) target = $region187
        $region186: #{self_attention_forward.4} parent=166 // pred_region
          %v1068 = vld [vmem:[#allocation6] sm:$0xff]
          %v1069 = vld [vmem:[#allocation6 + $0x8] sm:$0xff]
          %v1070 = vld [vmem:[#allocation5] sm:$0xff]
          %v1071 = vld [vmem:[#allocation5 + $0x8] sm:$0xff]
          %v1072 = vrcp.pop %v1070
          %v1073 = vrcp.pop %v1071
          %1075 = vset.pattern.permute.xlu0 0
          %1076 = vperm.xlu0 %1075, %v1072
          %v1077 = vpop.permute.xlu0 %1076
          %1080 = vset.pattern.permute.xlu0 0
          %1081 = vperm.xlu0 %1080, %v1073
          %v1082 = vpop.permute.xlu0 %1081
          %v1084 = vmul.f32 %v1068, %v1077
          %v1085 = vmul.f32 %v1069, %v1082
          %v1086 = vpack.c.bf16 %v1085, %v1084
          %v1088 = vunpack.c.l.b16 %v1086
          %v1089 = vunpack.c.h.b16 %v1086
          %v1090 = vpack.c.b16 %v1088, %v1088
          %v1091 = vpack.c.b16 %v1089, %v1089
          %1094 = vst [vmem:[%s668] sm:$0xf] %v1090
          %1095 = vst [vmem:[%s668 + $0x4] sm:$0xf] %v1091
        $region187: #{self_attention_forward.4} parent=166 // pred_fallthru
          _
        %s1096 = sand.u32 %s306, 1
        %s1097 = sand.u32 %s306, 1
        %s1098 = smul.addr %s1097, 8
        %s1099 = scalar_lea.vmem [#allocation10], %s1098
        // Predicated region
        $region188: #{self_attention_forward.4} parent=166 // pred_check
          %p1100 = pneg %p316
        $region189: #{self_attention_forward.4} parent=166 // pred_check_branch
          %1102 = sbr.rel (%p1100) target = $region191
        $region190: #{self_attention_forward.4} parent=166 // pred_region
          %s1103 = smul.u32 2, %s28
          %s1104 = smul.addr %s1103, 2
          %s1105 = sadd.s32 %s27, %s1104
          %s1106 = smul.addr %s26, 4
          %s1107 = sadd.s32 %s1105, %s1106
          %s1108 = smul.addr %s1107, 4
          %s1109 = scalar_lea.vmem %s9, %s1108
          // Predicated region
          $region192: #{self_attention_forward.4} parent=190 // pred_check
            _
          $region193: #{self_attention_forward.4} parent=190 // pred_check_branch
            %1111 = sbr.rel (0) target = $region195
          $region194: #{self_attention_forward.4} parent=190 // pred_region
            // Predicated region
            $region196: #{self_attention_forward.4} parent=194 // pred_check
              _
            $region197: #{self_attention_forward.4} parent=194 // pred_check_branch
              %1113 = sbr.rel target = $region199
            $region198: #{self_attention_forward.4} parent=194 // pred_region
              // Predicated region
              $region211: #{self_attention_forward.4} parent=198 // pred_check
                _
              $region212: #{self_attention_forward.4} parent=198 // pred_check_branch
                %1130 = sbr.rel (0) target = $region214
              $region213: #{self_attention_forward.4} parent=198 // pred_region
                loop: start=0, step=1, limit=1
                $region215: #{self_attention_forward.4} parent=213 // loop_pre_header
                  _
                $region216: #{self_attention_forward.4} parent=213 // loop_header
                  %s1132 = sphi 0, %s1136
                  %p1133 = scmp.ge.s32.totalorder %s1132, 1
                  %s1137 = sphi %s1099, %s1099
                  %s1138 = sphi %s1109, %s1109
                $region217: #{self_attention_forward.4} parent=213 // loop_header_branch
                  %1135 = sbr.rel (%p1133) target = $region221
                $region218: #{self_attention_forward.4} parent=213 // loop_body
                  _
                $region219: #{self_attention_forward.4} parent=213 // loop_footer
                  %s1136 = sadd.s32 1, %s1132
                $region220: #{self_attention_forward.4} parent=213 // loop_footer_branch
                  %1131 = sbr.rel target = $region216
                $region221: #{self_attention_forward.4} parent=213 // loop_exit
                  _
                loop: start=0, step=1, limit=1
                $region222: #{self_attention_forward.4} parent=213 // loop_pre_header
                  _
                $region223: #{self_attention_forward.4} parent=213 // loop_header
                  %s1141 = sphi 0, %s1145
                  %p1142 = scmp.ge.s32.totalorder %s1141, 1
                  %s1146 = sphi %s1099, %s1099
                  %s1147 = sphi %s1109, %s1109
                $region224: #{self_attention_forward.4} parent=213 // loop_header_branch
                  %1144 = sbr.rel (%p1142) target = $region228
                $region225: #{self_attention_forward.4} parent=213 // loop_body
                  %v1148 = vld [vmem:[%s1146] sm:$0xf]
                  %1149 = vst [vmem:[%s1147] sm:$0xf] %v1148
                  %v1150 = vld [vmem:[%s1146 + $0x4] sm:$0xf]
                  %1151 = vst [vmem:[%s1147 + $0x8] sm:$0xf] %v1150
                $region226: #{self_attention_forward.4} parent=213 // loop_footer
                  %s1145 = sadd.s32 1, %s1141
                $region227: #{self_attention_forward.4} parent=213 // loop_footer_branch
                  %1140 = sbr.rel target = $region223
                $region228: #{self_attention_forward.4} parent=213 // loop_exit
                  _
              $region214: #{self_attention_forward.4} parent=198 // pred_fallthru
                _
            $region199: #{self_attention_forward.4} parent=194 // pred_fallthru
              _
            // Predicated region
            $region200: #{self_attention_forward.4} parent=194 // pred_check
              _
            $region201: #{self_attention_forward.4} parent=194 // pred_check_branch
              %1115 = sbr.rel (0) target = $region203
            $region202: #{self_attention_forward.4} parent=194 // pred_region
              loop: start=0, step=1, limit=1
              $region204: #{self_attention_forward.4} parent=202 // loop_pre_header
                _
              $region205: #{self_attention_forward.4} parent=202 // loop_header
                %s1118 = sphi 0, %s1122
                %p1119 = scmp.ge.s32.totalorder %s1118, 1
                %s1123 = sphi %s1099, %s1099
                %s1124 = sphi %s1109, %s1109
              $region206: #{self_attention_forward.4} parent=202 // loop_header_branch
                %1121 = sbr.rel (%p1119) target = $region210
              $region207: #{self_attention_forward.4} parent=202 // loop_body
                %v1125 = vld [vmem:[%s1123] sm:$0xf]
                %1126 = vst [vmem:[%s1124] sm:$0xf] %v1125
                %v1127 = vld [vmem:[%s1123 + $0x4] sm:$0xf]
                %1128 = vst [vmem:[%s1124 + $0x8] sm:$0xf] %v1127
              $region208: #{self_attention_forward.4} parent=202 // loop_footer
                %s1122 = sadd.s32 1, %s1118
              $region209: #{self_attention_forward.4} parent=202 // loop_footer_branch
                %1117 = sbr.rel target = $region205
              $region210: #{self_attention_forward.4} parent=202 // loop_exit
                _
            $region203: #{self_attention_forward.4} parent=194 // pred_fallthru
              _
          $region195: #{self_attention_forward.4} parent=190 // pred_fallthru
            _
          %1152 = vnop
        $region191: #{self_attention_forward.4} parent=166 // pred_fallthru
          _
      $region167: #{self_attention_forward.4} parent=5 // pred_fallthru
        _
      %p1153 = scmp.le.s32.totalorder 2, %s15
      // Predicated region
      $region229: #{self_attention_forward.4} parent=5 // pred_check
        %p1154 = pneg %p1153
      $region230: #{self_attention_forward.4} parent=5 // pred_check_branch
        %1156 = sbr.rel (%p1154) target = $region232
      $region231: #{self_attention_forward.4} parent=5 // pred_region
        %s1157 = ssub.s32 %s15, 2
        // Predicated region
        $region233: #{self_attention_forward.4} parent=231 // pred_check
          %p1158 = pneg %p322
        $region234: #{self_attention_forward.4} parent=231 // pred_check_branch
          %1160 = sbr.rel (%p1158) target = $region236
        $region235: #{self_attention_forward.4} parent=231 // pred_region
          %s1161 = sand.u32 %s307, 1
          %s1162 = sand.u32 %s307, 1
          %s1163 = smul.addr %s1162, 8
          %s1164 = scalar_lea.vmem [#allocation10], %s1163
        $region236: #{self_attention_forward.4} parent=231 // pred_fallthru
          _
      $region232: #{self_attention_forward.4} parent=5 // pred_fallthru
        _
    $region6: #{self_attention_forward.4} parent=1 // loop_footer
      %s19 = sadd.s32 1, %s15
    $region7: #{self_attention_forward.4} parent=1 // loop_footer_branch
      %14 = sbr.rel target = $region3
    $region8: #{self_attention_forward.4} parent=1 // loop_exit
      _

// kernel: self_attention_forward.3
$region0: #{self_attention_forward.3}
  #allocation0 [shape = 'u32[]', space=smem, size = 0x4, offset = 0x4, fixed_abs, tag = 'smem constant byte address 0x4 - core index']
  #allocation1 [shape = 'u32[144,128]{1,0:T(1,128)}', space=vmem, size = 0x12000, scoped, tag = 'internal scratch']
  #allocation2 [shape = 'f32[32,768]{1,0:T(8,128)}', space=vmem, size = 0x18000, scoped, tag = 'scratch operand']
  %s0 = inlined_call_operand.vmem [shape: bf16[32,256], index: 0, kind: input, shape index: {}]
  %s1 = inlined_call_operand.hbm [shape: bf16[256,768], index: 1, kind: input, shape index: {}]
  %s2 = inlined_call_operand.vmem [shape: f32[1,768], index: 2, kind: input, shape index: {}]
  %s3 = inlined_call_operand.vmem [shape: bf16[32,768], index: 3, kind: output, shape index: {}]
  %s4 = sld [smem:[#allocation0]]
  $region34: #{self_attention_forward.3} parent=0
    _
  %s6 = ssub.s32 1, %s4
  %s7 = scalar_select 0, %s6, %s4
  $region1: #{self_attention_forward.3} parent=0
    #allocation3 [shape = 'u8[393216]{0}', space=vmem, size = 0x60000, scoped, tag = 'input window, operand 1, single buffered']
    #allocation4 [shape = 's32[1]{0}', space=sflag, size = 0x4, scoped, tag = 'scoped memory for self_attention_forward.3']
    %8 = vsyncpa [#allocation4], 0
    // Predicated region
    $region2: #{self_attention_forward.3} parent=1 // pred_check
      _
    $region3: #{self_attention_forward.3} parent=1 // pred_check_branch
      %10 = sbr.rel (0) target = $region5
    $region4: #{self_attention_forward.3} parent=1 // pred_region
      _
    $region5: #{self_attention_forward.3} parent=1 // pred_fallthru
      _
    // Predicated region
    $region6: #{self_attention_forward.3} parent=1 // pred_check
      _
    $region7: #{self_attention_forward.3} parent=1 // pred_check_branch
      %12 = sbr.rel (0) target = $region9
    $region8: #{self_attention_forward.3} parent=1 // pred_region
      %s14 = ssub.s32 12288, 12288
      %15 = vsyncadd [#allocation4], %s14
      %s16 = sshll.u32 [#allocation3], 4
      %s17 = int_to_ptr.vmem [resolvable:$true] %s16
      %22 = dma.hbm_to_vmem [thread:$0]  %s1, 12288, %s17, [#allocation4], 384, 384, 24
    $region9: #{self_attention_forward.3} parent=1 // pred_fallthru
      _
    // Predicated region
    $region10: #{self_attention_forward.3} parent=1 // pred_check
      _
    $region11: #{self_attention_forward.3} parent=1 // pred_check_branch
      %24 = sbr.rel (0) target = $region13
    $region12: #{self_attention_forward.3} parent=1 // pred_region
      _
    $region13: #{self_attention_forward.3} parent=1 // pred_fallthru
      _
    // Predicated region
    $region14: #{self_attention_forward.3} parent=1 // pred_check
      _
    $region15: #{self_attention_forward.3} parent=1 // pred_check_branch
      %26 = sbr.rel (0) target = $region17
    $region16: #{self_attention_forward.3} parent=1 // pred_region
      %27 = dma.done [#allocation4], 12288
    $region17: #{self_attention_forward.3} parent=1 // pred_fallthru
      _
    %p28 = scmp.eq.s32.totalorder 0, 0
    // Predicated region
    $region18: #{self_attention_forward.3} parent=1 // pred_check
      %p29 = pneg %p28
    $region19: #{self_attention_forward.3} parent=1 // pred_check_branch
      %31 = sbr.rel (%p29) target = $region21
    $region20: #{self_attention_forward.3} parent=1 // pred_region
      %v32 = vld [vmem:[%s2] sm:$0x3f]
      %v34 = vlaneseq
      %v35 = vshrl.u32 %v34, 7
      %v36 = vsub.s32 0, %v35
      %v37 = vrot.slane %v32, %v36
      %v38 = vlaneseq
      %v39 = vshrl.u32 %v38, 7
      %v40 = vsub.s32 1, %v39
      %v41 = vrot.slane %v32, %v40
      %v42 = vlaneseq
      %v43 = vshrl.u32 %v42, 7
      %v44 = vsub.s32 2, %v43
      %v45 = vrot.slane %v32, %v44
      %v46 = vlaneseq
      %v47 = vshrl.u32 %v46, 7
      %v48 = vsub.s32 3, %v47
      %v49 = vrot.slane %v32, %v48
      %v50 = vlaneseq
      %v51 = vshrl.u32 %v50, 7
      %v52 = vsub.s32 4, %v51
      %v53 = vrot.slane %v32, %v52
      %v54 = vlaneseq
      %v55 = vshrl.u32 %v54, 7
      %v56 = vsub.s32 5, %v55
      %v57 = vrot.slane %v32, %v56
      %64 = vst [vmem:[#allocation2] sm:$0xff] %v37
      %65 = vst [vmem:[#allocation2 + $0x8] sm:$0xff] %v41
      %66 = vst [vmem:[#allocation2 + $0x10] sm:$0xff] %v45
      %67 = vst [vmem:[#allocation2 + $0x18] sm:$0xff] %v49
      %68 = vst [vmem:[#allocation2 + $0x20] sm:$0xff] %v53
      %69 = vst [vmem:[#allocation2 + $0x28] sm:$0xff] %v57
      %70 = vst [vmem:[#allocation2 + $0x30] sm:$0xff] %v37
      %71 = vst [vmem:[#allocation2 + $0x38] sm:$0xff] %v41
      %72 = vst [vmem:[#allocation2 + $0x40] sm:$0xff] %v45
      %73 = vst [vmem:[#allocation2 + $0x48] sm:$0xff] %v49
      %74 = vst [vmem:[#allocation2 + $0x50] sm:$0xff] %v53
      %75 = vst [vmem:[#allocation2 + $0x58] sm:$0xff] %v57
      %76 = vst [vmem:[#allocation2 + $0x60] sm:$0xff] %v37
      %77 = vst [vmem:[#allocation2 + $0x68] sm:$0xff] %v41
      %78 = vst [vmem:[#allocation2 + $0x70] sm:$0xff] %v45
      %79 = vst [vmem:[#allocation2 + $0x78] sm:$0xff] %v49
      %80 = vst [vmem:[#allocation2 + $0x80] sm:$0xff] %v53
      %81 = vst [vmem:[#allocation2 + $0x88] sm:$0xff] %v57
      %82 = vst [vmem:[#allocation2 + $0x90] sm:$0xff] %v37
      %83 = vst [vmem:[#allocation2 + $0x98] sm:$0xff] %v41
      %84 = vst [vmem:[#allocation2 + $0xa0] sm:$0xff] %v45
      %85 = vst [vmem:[#allocation2 + $0xa8] sm:$0xff] %v49
      %86 = vst [vmem:[#allocation2 + $0xb0] sm:$0xff] %v53
      %87 = vst [vmem:[#allocation2 + $0xb8] sm:$0xff] %v57
    $region21: #{self_attention_forward.3} parent=1 // pred_fallthru
      _
    %v88 = vld [vmem:[#allocation2] sm:$0xff]
    %v89 = vld [vmem:[#allocation2 + $0x8] sm:$0xff]
    %v90 = vld [vmem:[#allocation2 + $0x10] sm:$0xff]
    %v91 = vld [vmem:[#allocation2 + $0x18] sm:$0xff]
    %v92 = vld [vmem:[#allocation2 + $0x20] sm:$0xff]
    %v93 = vld [vmem:[#allocation2 + $0x28] sm:$0xff]
    %v94 = vld [vmem:[#allocation2 + $0x30] sm:$0xff]
    %v95 = vld [vmem:[#allocation2 + $0x38] sm:$0xff]
    %v96 = vld [vmem:[#allocation2 + $0x40] sm:$0xff]
    %v97 = vld [vmem:[#allocation2 + $0x48] sm:$0xff]
    %v98 = vld [vmem:[#allocation2 + $0x50] sm:$0xff]
    %v99 = vld [vmem:[#allocation2 + $0x58] sm:$0xff]
    %v100 = vld [vmem:[#allocation2 + $0x60] sm:$0xff]
    %v101 = vld [vmem:[#allocation2 + $0x68] sm:$0xff]
    %v102 = vld [vmem:[#allocation2 + $0x70] sm:$0xff]
    %v103 = vld [vmem:[#allocation2 + $0x78] sm:$0xff]
    %v104 = vld [vmem:[#allocation2 + $0x80] sm:$0xff]
    %v105 = vld [vmem:[#allocation2 + $0x88] sm:$0xff]
    %v106 = vld [vmem:[#allocation2 + $0x90] sm:$0xff]
    %v107 = vld [vmem:[#allocation2 + $0x98] sm:$0xff]
    %v108 = vld [vmem:[#allocation2 + $0xa0] sm:$0xff]
    %v109 = vld [vmem:[#allocation2 + $0xa8] sm:$0xff]
    %v110 = vld [vmem:[#allocation2 + $0xb0] sm:$0xff]
    %v111 = vld [vmem:[#allocation2 + $0xb8] sm:$0xff]
    %v112 = vld [vmem:[%s0] sm:$0xff]
    %v113 = vld [vmem:[%s0 + $0x8] sm:$0xff]
    %v114 = vld [vmem:[%s0 + $0x10] sm:$0xff]
    %v115 = vld [vmem:[%s0 + $0x18] sm:$0xff]
    %v116 = vld [vmem:[#allocation3] sm:$0xff]
    %v117 = vld [vmem:[#allocation3 + $0x8] sm:$0xff]
    %v118 = vld [vmem:[#allocation3 + $0x10] sm:$0xff]
    %v119 = vld [vmem:[#allocation3 + $0x18] sm:$0xff]
    %v120 = vld [vmem:[#allocation3 + $0x20] sm:$0xff]
    %v121 = vld [vmem:[#allocation3 + $0x28] sm:$0xff]
    %v122 = vld [vmem:[#allocation3 + $0x30] sm:$0xff]
    %v123 = vld [vmem:[#allocation3 + $0x38] sm:$0xff]
    %v124 = vld [vmem:[#allocation3 + $0x40] sm:$0xff]
    %v125 = vld [vmem:[#allocation3 + $0x48] sm:$0xff]
    %v126 = vld [vmem:[#allocation3 + $0x50] sm:$0xff]
    %v127 = vld [vmem:[#allocation3 + $0x58] sm:$0xff]
    %v128 = vld [vmem:[#allocation3 + $0x60] sm:$0xff]
    %v129 = vld [vmem:[#allocation3 + $0x68] sm:$0xff]
    %v130 = vld [vmem:[#allocation3 + $0x70] sm:$0xff]
    %v131 = vld [vmem:[#allocation3 + $0x78] sm:$0xff]
    %v132 = vld [vmem:[#allocation3 + $0x80] sm:$0xff]
    %v133 = vld [vmem:[#allocation3 + $0x88] sm:$0xff]
    %v134 = vld [vmem:[#allocation3 + $0x90] sm:$0xff]
    %v135 = vld [vmem:[#allocation3 + $0x98] sm:$0xff]
    %v136 = vld [vmem:[#allocation3 + $0xa0] sm:$0xff]
    %v137 = vld [vmem:[#allocation3 + $0xa8] sm:$0xff]
    %v138 = vld [vmem:[#allocation3 + $0xb0] sm:$0xff]
    %v139 = vld [vmem:[#allocation3 + $0xb8] sm:$0xff]
    %v140 = vld [vmem:[#allocation3 + $0xc0] sm:$0xff]
    %v141 = vld [vmem:[#allocation3 + $0xc8] sm:$0xff]
    %v142 = vld [vmem:[#allocation3 + $0xd0] sm:$0xff]
    %v143 = vld [vmem:[#allocation3 + $0xd8] sm:$0xff]
    %v144 = vld [vmem:[#allocation3 + $0xe0] sm:$0xff]
    %v145 = vld [vmem:[#allocation3 + $0xe8] sm:$0xff]
    %v146 = vld [vmem:[#allocation3 + $0xf0] sm:$0xff]
    %v147 = vld [vmem:[#allocation3 + $0xf8] sm:$0xff]
    %v148 = vld [vmem:[#allocation3 + $0x100] sm:$0xff]
    %v149 = vld [vmem:[#allocation3 + $0x108] sm:$0xff]
    %v150 = vld [vmem:[#allocation3 + $0x110] sm:$0xff]
    %v151 = vld [vmem:[#allocation3 + $0x118] sm:$0xff]
    %v152 = vld [vmem:[#allocation3 + $0x120] sm:$0xff]
    %v153 = vld [vmem:[#allocation3 + $0x128] sm:$0xff]
    %v154 = vld [vmem:[#allocation3 + $0x130] sm:$0xff]
    %v155 = vld [vmem:[#allocation3 + $0x138] sm:$0xff]
    %v156 = vld [vmem:[#allocation3 + $0x140] sm:$0xff]
    %v157 = vld [vmem:[#allocation3 + $0x148] sm:$0xff]
    %v158 = vld [vmem:[#allocation3 + $0x150] sm:$0xff]
    %v159 = vld [vmem:[#allocation3 + $0x158] sm:$0xff]
    %v160 = vld [vmem:[#allocation3 + $0x160] sm:$0xff]
    %v161 = vld [vmem:[#allocation3 + $0x168] sm:$0xff]
    %v162 = vld [vmem:[#allocation3 + $0x170] sm:$0xff]
    %v163 = vld [vmem:[#allocation3 + $0x178] sm:$0xff]
    %v164 = vld [vmem:[#allocation3 + $0x180] sm:$0xff]
    %v165 = vld [vmem:[#allocation3 + $0x188] sm:$0xff]
    %v166 = vld [vmem:[#allocation3 + $0x190] sm:$0xff]
    %v167 = vld [vmem:[#allocation3 + $0x198] sm:$0xff]
    %v168 = vld [vmem:[#allocation3 + $0x1a0] sm:$0xff]
    %v169 = vld [vmem:[#allocation3 + $0x1a8] sm:$0xff]
    %v170 = vld [vmem:[#allocation3 + $0x1b0] sm:$0xff]
    %v171 = vld [vmem:[#allocation3 + $0x1b8] sm:$0xff]
    %v172 = vld [vmem:[#allocation3 + $0x1c0] sm:$0xff]
    %v173 = vld [vmem:[#allocation3 + $0x1c8] sm:$0xff]
    %v174 = vld [vmem:[#allocation3 + $0x1d0] sm:$0xff]
    %v175 = vld [vmem:[#allocation3 + $0x1d8] sm:$0xff]
    %v176 = vld [vmem:[#allocation3 + $0x1e0] sm:$0xff]
    %v177 = vld [vmem:[#allocation3 + $0x1e8] sm:$0xff]
    %v178 = vld [vmem:[#allocation3 + $0x1f0] sm:$0xff]
    %v179 = vld [vmem:[#allocation3 + $0x1f8] sm:$0xff]
    %v180 = vld [vmem:[#allocation3 + $0x200] sm:$0xff]
    %v181 = vld [vmem:[#allocation3 + $0x208] sm:$0xff]
    %v182 = vld [vmem:[#allocation3 + $0x210] sm:$0xff]
    %v183 = vld [vmem:[#allocation3 + $0x218] sm:$0xff]
    %v184 = vld [vmem:[#allocation3 + $0x220] sm:$0xff]
    %v185 = vld [vmem:[#allocation3 + $0x228] sm:$0xff]
    %v186 = vld [vmem:[#allocation3 + $0x230] sm:$0xff]
    %v187 = vld [vmem:[#allocation3 + $0x238] sm:$0xff]
    %v188 = vld [vmem:[#allocation3 + $0x240] sm:$0xff]
    %v189 = vld [vmem:[#allocation3 + $0x248] sm:$0xff]
    %v190 = vld [vmem:[#allocation3 + $0x250] sm:$0xff]
    %v191 = vld [vmem:[#allocation3 + $0x258] sm:$0xff]
    %v192 = vld [vmem:[#allocation3 + $0x260] sm:$0xff]
    %v193 = vld [vmem:[#allocation3 + $0x268] sm:$0xff]
    %v194 = vld [vmem:[#allocation3 + $0x270] sm:$0xff]
    %v195 = vld [vmem:[#allocation3 + $0x278] sm:$0xff]
    %v196 = vld [vmem:[#allocation3 + $0x280] sm:$0xff]
    %v197 = vld [vmem:[#allocation3 + $0x288] sm:$0xff]
    %v198 = vld [vmem:[#allocation3 + $0x290] sm:$0xff]
    %v199 = vld [vmem:[#allocation3 + $0x298] sm:$0xff]
    %v200 = vld [vmem:[#allocation3 + $0x2a0] sm:$0xff]
    %v201 = vld [vmem:[#allocation3 + $0x2a8] sm:$0xff]
    %v202 = vld [vmem:[#allocation3 + $0x2b0] sm:$0xff]
    %v203 = vld [vmem:[#allocation3 + $0x2b8] sm:$0xff]
    %v204 = vld [vmem:[#allocation3 + $0x2c0] sm:$0xff]
    %v205 = vld [vmem:[#allocation3 + $0x2c8] sm:$0xff]
    %v206 = vld [vmem:[#allocation3 + $0x2d0] sm:$0xff]
    %v207 = vld [vmem:[#allocation3 + $0x2d8] sm:$0xff]
    %v208 = vld [vmem:[#allocation3 + $0x2e0] sm:$0xff]
    %v209 = vld [vmem:[#allocation3 + $0x2e8] sm:$0xff]
    %v210 = vld [vmem:[#allocation3 + $0x2f0] sm:$0xff]
    %v211 = vld [vmem:[#allocation3 + $0x2f8] sm:$0xff]
    %v216 = vunpack.c.l.b16 %v112
    %v217 = vunpack.c.h.b16 %v112
    %v218 = vunpack.c.l.b16 %v113
    %v219 = vunpack.c.h.b16 %v113
    %v220 = vunpack.c.l.b16 %v114
    %v221 = vunpack.c.h.b16 %v114
    %v222 = vunpack.c.l.b16 %v115
    %v223 = vunpack.c.h.b16 %v115
    %v224 = vpack.c.b16 %v218, %v216
    %v225 = vpack.c.b16 %v219, %v217
    %v226 = vpack.c.b16 %v222, %v220
    %v227 = vpack.c.b16 %v223, %v221
    %v328 = vunpack.c.l.b16 %v116
    %v329 = vunpack.c.h.b16 %v116
    %v330 = vunpack.c.l.b16 %v117
    %v331 = vunpack.c.h.b16 %v117
    %v332 = vunpack.c.l.b16 %v118
    %v333 = vunpack.c.h.b16 %v118
    %v334 = vunpack.c.l.b16 %v119
    %v335 = vunpack.c.h.b16 %v119
    %v336 = vunpack.c.l.b16 %v120
    %v337 = vunpack.c.h.b16 %v120
    %v338 = vunpack.c.l.b16 %v121
    %v339 = vunpack.c.h.b16 %v121
    %v340 = vunpack.c.l.b16 %v122
    %v341 = vunpack.c.h.b16 %v122
    %v342 = vunpack.c.l.b16 %v123
    %v343 = vunpack.c.h.b16 %v123
    %v344 = vunpack.c.l.b16 %v124
    %v345 = vunpack.c.h.b16 %v124
    %v346 = vunpack.c.l.b16 %v125
    %v347 = vunpack.c.h.b16 %v125
    %v348 = vunpack.c.l.b16 %v126
    %v349 = vunpack.c.h.b16 %v126
    %v350 = vunpack.c.l.b16 %v127
    %v351 = vunpack.c.h.b16 %v127
    %v352 = vunpack.c.l.b16 %v128
    %v353 = vunpack.c.h.b16 %v128
    %v354 = vunpack.c.l.b16 %v129
    %v355 = vunpack.c.h.b16 %v129
    %v356 = vunpack.c.l.b16 %v130
    %v357 = vunpack.c.h.b16 %v130
    %v358 = vunpack.c.l.b16 %v131
    %v359 = vunpack.c.h.b16 %v131
    %v360 = vunpack.c.l.b16 %v132
    %v361 = vunpack.c.h.b16 %v132
    %v362 = vunpack.c.l.b16 %v133
    %v363 = vunpack.c.h.b16 %v133
    %v364 = vunpack.c.l.b16 %v134
    %v365 = vunpack.c.h.b16 %v134
    %v366 = vunpack.c.l.b16 %v135
    %v367 = vunpack.c.h.b16 %v135
    %v368 = vunpack.c.l.b16 %v136
    %v369 = vunpack.c.h.b16 %v136
    %v370 = vunpack.c.l.b16 %v137
    %v371 = vunpack.c.h.b16 %v137
    %v372 = vunpack.c.l.b16 %v138
    %v373 = vunpack.c.h.b16 %v138
    %v374 = vunpack.c.l.b16 %v139
    %v375 = vunpack.c.h.b16 %v139
    %v376 = vunpack.c.l.b16 %v140
    %v377 = vunpack.c.h.b16 %v140
    %v378 = vunpack.c.l.b16 %v141
    %v379 = vunpack.c.h.b16 %v141
    %v380 = vunpack.c.l.b16 %v142
    %v381 = vunpack.c.h.b16 %v142
    %v382 = vunpack.c.l.b16 %v143
    %v383 = vunpack.c.h.b16 %v143
    %v384 = vunpack.c.l.b16 %v144
    %v385 = vunpack.c.h.b16 %v144
    %v386 = vunpack.c.l.b16 %v145
    %v387 = vunpack.c.h.b16 %v145
    %v388 = vunpack.c.l.b16 %v146
    %v389 = vunpack.c.h.b16 %v146
    %v390 = vunpack.c.l.b16 %v147
    %v391 = vunpack.c.h.b16 %v147
    %v392 = vunpack.c.l.b16 %v148
    %v393 = vunpack.c.h.b16 %v148
    %v394 = vunpack.c.l.b16 %v149
    %v395 = vunpack.c.h.b16 %v149
    %v396 = vunpack.c.l.b16 %v150
    %v397 = vunpack.c.h.b16 %v150
    %v398 = vunpack.c.l.b16 %v151
    %v399 = vunpack.c.h.b16 %v151
    %v400 = vunpack.c.l.b16 %v152
    %v401 = vunpack.c.h.b16 %v152
    %v402 = vunpack.c.l.b16 %v153
    %v403 = vunpack.c.h.b16 %v153
    %v404 = vunpack.c.l.b16 %v154
    %v405 = vunpack.c.h.b16 %v154
    %v406 = vunpack.c.l.b16 %v155
    %v407 = vunpack.c.h.b16 %v155
    %v408 = vunpack.c.l.b16 %v156
    %v409 = vunpack.c.h.b16 %v156
    %v410 = vunpack.c.l.b16 %v157
    %v411 = vunpack.c.h.b16 %v157
    %v412 = vunpack.c.l.b16 %v158
    %v413 = vunpack.c.h.b16 %v158
    %v414 = vunpack.c.l.b16 %v159
    %v415 = vunpack.c.h.b16 %v159
    %v416 = vunpack.c.l.b16 %v160
    %v417 = vunpack.c.h.b16 %v160
    %v418 = vunpack.c.l.b16 %v161
    %v419 = vunpack.c.h.b16 %v161
    %v420 = vunpack.c.l.b16 %v162
    %v421 = vunpack.c.h.b16 %v162
    %v422 = vunpack.c.l.b16 %v163
    %v423 = vunpack.c.h.b16 %v163
    %v424 = vunpack.c.l.b16 %v164
    %v425 = vunpack.c.h.b16 %v164
    %v426 = vunpack.c.l.b16 %v165
    %v427 = vunpack.c.h.b16 %v165
    %v428 = vunpack.c.l.b16 %v166
    %v429 = vunpack.c.h.b16 %v166
    %v430 = vunpack.c.l.b16 %v167
    %v431 = vunpack.c.h.b16 %v167
    %v432 = vunpack.c.l.b16 %v168
    %v433 = vunpack.c.h.b16 %v168
    %v434 = vunpack.c.l.b16 %v169
    %v435 = vunpack.c.h.b16 %v169
    %v436 = vunpack.c.l.b16 %v170
    %v437 = vunpack.c.h.b16 %v170
    %v438 = vunpack.c.l.b16 %v171
    %v439 = vunpack.c.h.b16 %v171
    %v440 = vunpack.c.l.b16 %v172
    %v441 = vunpack.c.h.b16 %v172
    %v442 = vunpack.c.l.b16 %v173
    %v443 = vunpack.c.h.b16 %v173
    %v444 = vunpack.c.l.b16 %v174
    %v445 = vunpack.c.h.b16 %v174
    %v446 = vunpack.c.l.b16 %v175
    %v447 = vunpack.c.h.b16 %v175
    %v448 = vunpack.c.l.b16 %v176
    %v449 = vunpack.c.h.b16 %v176
    %v450 = vunpack.c.l.b16 %v177
    %v451 = vunpack.c.h.b16 %v177
    %v452 = vunpack.c.l.b16 %v178
    %v453 = vunpack.c.h.b16 %v178
    %v454 = vunpack.c.l.b16 %v179
    %v455 = vunpack.c.h.b16 %v179
    %v456 = vunpack.c.l.b16 %v180
    %v457 = vunpack.c.h.b16 %v180
    %v458 = vunpack.c.l.b16 %v181
    %v459 = vunpack.c.h.b16 %v181
    %v460 = vunpack.c.l.b16 %v182
    %v461 = vunpack.c.h.b16 %v182
    %v462 = vunpack.c.l.b16 %v183
    %v463 = vunpack.c.h.b16 %v183
    %v464 = vunpack.c.l.b16 %v184
    %v465 = vunpack.c.h.b16 %v184
    %v466 = vunpack.c.l.b16 %v185
    %v467 = vunpack.c.h.b16 %v185
    %v468 = vunpack.c.l.b16 %v186
    %v469 = vunpack.c.h.b16 %v186
    %v470 = vunpack.c.l.b16 %v187
    %v471 = vunpack.c.h.b16 %v187
    %v472 = vunpack.c.l.b16 %v188
    %v473 = vunpack.c.h.b16 %v188
    %v474 = vunpack.c.l.b16 %v189
    %v475 = vunpack.c.h.b16 %v189
    %v476 = vunpack.c.l.b16 %v190
    %v477 = vunpack.c.h.b16 %v190
    %v478 = vunpack.c.l.b16 %v191
    %v479 = vunpack.c.h.b16 %v191
    %v480 = vunpack.c.l.b16 %v192
    %v481 = vunpack.c.h.b16 %v192
    %v482 = vunpack.c.l.b16 %v193
    %v483 = vunpack.c.h.b16 %v193
    %v484 = vunpack.c.l.b16 %v194
    %v485 = vunpack.c.h.b16 %v194
    %v486 = vunpack.c.l.b16 %v195
    %v487 = vunpack.c.h.b16 %v195
    %v488 = vunpack.c.l.b16 %v196
    %v489 = vunpack.c.h.b16 %v196
    %v490 = vunpack.c.l.b16 %v197
    %v491 = vunpack.c.h.b16 %v197
    %v492 = vunpack.c.l.b16 %v198
    %v493 = vunpack.c.h.b16 %v198
    %v494 = vunpack.c.l.b16 %v199
    %v495 = vunpack.c.h.b16 %v199
    %v496 = vunpack.c.l.b16 %v200
    %v497 = vunpack.c.h.b16 %v200
    %v498 = vunpack.c.l.b16 %v201
    %v499 = vunpack.c.h.b16 %v201
    %v500 = vunpack.c.l.b16 %v202
    %v501 = vunpack.c.h.b16 %v202
    %v502 = vunpack.c.l.b16 %v203
    %v503 = vunpack.c.h.b16 %v203
    %v504 = vunpack.c.l.b16 %v204
    %v505 = vunpack.c.h.b16 %v204
    %v506 = vunpack.c.l.b16 %v205
    %v507 = vunpack.c.h.b16 %v205
    %v508 = vunpack.c.l.b16 %v206
    %v509 = vunpack.c.h.b16 %v206
    %v510 = vunpack.c.l.b16 %v207
    %v511 = vunpack.c.h.b16 %v207
    %v512 = vunpack.c.l.b16 %v208
    %v513 = vunpack.c.h.b16 %v208
    %v514 = vunpack.c.l.b16 %v209
    %v515 = vunpack.c.h.b16 %v209
    %v516 = vunpack.c.l.b16 %v210
    %v517 = vunpack.c.h.b16 %v210
    %v518 = vunpack.c.l.b16 %v211
    %v519 = vunpack.c.h.b16 %v211
    %v520 = vpack.c.b16 %v334, %v328
    %v521 = vpack.c.b16 %v335, %v329
    %v522 = vpack.c.b16 %v336, %v330
    %v523 = vpack.c.b16 %v337, %v331
    %v524 = vpack.c.b16 %v338, %v332
    %v525 = vpack.c.b16 %v339, %v333
    %v526 = vpack.c.b16 %v346, %v340
    %v527 = vpack.c.b16 %v347, %v341
    %v528 = vpack.c.b16 %v348, %v342
    %v529 = vpack.c.b16 %v349, %v343
    %v530 = vpack.c.b16 %v350, %v344
    %v531 = vpack.c.b16 %v351, %v345
    %v532 = vpack.c.b16 %v358, %v352
    %v533 = vpack.c.b16 %v359, %v353
    %v534 = vpack.c.b16 %v360, %v354
    %v535 = vpack.c.b16 %v361, %v355
    %v536 = vpack.c.b16 %v362, %v356
    %v537 = vpack.c.b16 %v363, %v357
    %v538 = vpack.c.b16 %v370, %v364
    %v539 = vpack.c.b16 %v371, %v365
    %v540 = vpack.c.b16 %v372, %v366
    %v541 = vpack.c.b16 %v373, %v367
    %v542 = vpack.c.b16 %v374, %v368
    %v543 = vpack.c.b16 %v375, %v369
    %v544 = vpack.c.b16 %v382, %v376
    %v545 = vpack.c.b16 %v383, %v377
    %v546 = vpack.c.b16 %v384, %v378
    %v547 = vpack.c.b16 %v385, %v379
    %v548 = vpack.c.b16 %v386, %v380
    %v549 = vpack.c.b16 %v387, %v381
    %v550 = vpack.c.b16 %v394, %v388
    %v551 = vpack.c.b16 %v395, %v389
    %v552 = vpack.c.b16 %v396, %v390
    %v553 = vpack.c.b16 %v397, %v391
    %v554 = vpack.c.b16 %v398, %v392
    %v555 = vpack.c.b16 %v399, %v393
    %v556 = vpack.c.b16 %v406, %v400
    %v557 = vpack.c.b16 %v407, %v401
    %v558 = vpack.c.b16 %v408, %v402
    %v559 = vpack.c.b16 %v409, %v403
    %v560 = vpack.c.b16 %v410, %v404
    %v561 = vpack.c.b16 %v411, %v405
    %v562 = vpack.c.b16 %v418, %v412
    %v563 = vpack.c.b16 %v419, %v413
    %v564 = vpack.c.b16 %v420, %v414
    %v565 = vpack.c.b16 %v421, %v415
    %v566 = vpack.c.b16 %v422, %v416
    %v567 = vpack.c.b16 %v423, %v417
    %v568 = vpack.c.b16 %v430, %v424
    %v569 = vpack.c.b16 %v431, %v425
    %v570 = vpack.c.b16 %v432, %v426
    %v571 = vpack.c.b16 %v433, %v427
    %v572 = vpack.c.b16 %v434, %v428
    %v573 = vpack.c.b16 %v435, %v429
    %v574 = vpack.c.b16 %v442, %v436
    %v575 = vpack.c.b16 %v443, %v437
    %v576 = vpack.c.b16 %v444, %v438
    %v577 = vpack.c.b16 %v445, %v439
    %v578 = vpack.c.b16 %v446, %v440
    %v579 = vpack.c.b16 %v447, %v441
    %v580 = vpack.c.b16 %v454, %v448
    %v581 = vpack.c.b16 %v455, %v449
    %v582 = vpack.c.b16 %v456, %v450
    %v583 = vpack.c.b16 %v457, %v451
    %v584 = vpack.c.b16 %v458, %v452
    %v585 = vpack.c.b16 %v459, %v453
    %v586 = vpack.c.b16 %v466, %v460
    %v587 = vpack.c.b16 %v467, %v461
    %v588 = vpack.c.b16 %v468, %v462
    %v589 = vpack.c.b16 %v469, %v463
    %v590 = vpack.c.b16 %v470, %v464
    %v591 = vpack.c.b16 %v471, %v465
    %v592 = vpack.c.b16 %v478, %v472
    %v593 = vpack.c.b16 %v479, %v473
    %v594 = vpack.c.b16 %v480, %v474
    %v595 = vpack.c.b16 %v481, %v475
    %v596 = vpack.c.b16 %v482, %v476
    %v597 = vpack.c.b16 %v483, %v477
    %v598 = vpack.c.b16 %v490, %v484
    %v599 = vpack.c.b16 %v491, %v485
    %v600 = vpack.c.b16 %v492, %v486
    %v601 = vpack.c.b16 %v493, %v487
    %v602 = vpack.c.b16 %v494, %v488
    %v603 = vpack.c.b16 %v495, %v489
    %v604 = vpack.c.b16 %v502, %v496
    %v605 = vpack.c.b16 %v503, %v497
    %v606 = vpack.c.b16 %v504, %v498
    %v607 = vpack.c.b16 %v505, %v499
    %v608 = vpack.c.b16 %v506, %v500
    %v609 = vpack.c.b16 %v507, %v501
    %v610 = vpack.c.b16 %v514, %v508
    %v611 = vpack.c.b16 %v515, %v509
    %v612 = vpack.c.b16 %v516, %v510
    %v613 = vpack.c.b16 %v517, %v511
    %v614 = vpack.c.b16 %v518, %v512
    %v615 = vpack.c.b16 %v519, %v513
    %712 = vmatprep.subr.bf16.mxu0 %v521
    %713 = vmatpush1.bf16.msra.mxu0 %v520
    %714 = vmatprep.subr.bf16.mxu0 %v527
    %715 = vmatpush1.bf16.msra.mxu0 %v526
    %716 = vmatprep.subr.bf16.mxu0 %v533
    %717 = vmatpush1.bf16.msra.mxu0 %v532
    %718 = vmatprep.subr.bf16.mxu0 %v539
    %719 = vmatpush1.bf16.msra.mxu0 %v538
    %720 = vmatprep.subr.bf16.mxu0 %v545
    %721 = vmatpush1.bf16.msra.mxu0 %v544
    %722 = vmatprep.subr.bf16.mxu0 %v551
    %723 = vmatpush1.bf16.msra.mxu0 %v550
    %724 = vmatprep.subr.bf16.mxu0 %v557
    %725 = vmatpush1.bf16.msra.mxu0 %v556
    %726 = vmatprep.subr.bf16.mxu0 %v563
    %727 = vmatpush1.bf16.msra.mxu0 %v562
    %728 = vmatprep.subr.bf16.mxu0 %v569
    %729 = vmatpush1.bf16.msra.mxu0 %v568
    %730 = vmatprep.subr.bf16.mxu0 %v575
    %731 = vmatpush1.bf16.msra.mxu0 %v574
    %732 = vmatprep.subr.bf16.mxu0 %v581
    %733 = vmatpush1.bf16.msra.mxu0 %v580
    %734 = vmatprep.subr.bf16.mxu0 %v587
    %735 = vmatpush1.bf16.msra.mxu0 %v586
    %736 = vmatprep.subr.bf16.mxu0 %v593
    %737 = vmatpush1.bf16.msra.mxu0 %v592
    %738 = vmatprep.subr.bf16.mxu0 %v599
    %739 = vmatpush1.bf16.msra.mxu0 %v598
    %740 = vmatprep.subr.bf16.mxu0 %v605
    %741 = vmatpush1.bf16.msra.mxu0 %v604
    %742 = vmatprep.subr.bf16.mxu0 %v611
    %743 = vmatpush1.bf16.msra.mxu0 %v610
    %744 = vmatprep.mubr.bf16.mxu0 %v225
    %745 = vmatmul.mubr.bf16.gmra.mrb[0].mxu0 %v224
    %v746 = vpop.f32.mrb[0].mxu0
    %v747 = vadd.f32 0.0, %v746
    %v748 = vpop.f32.mrb[0].mxu0
    %v749 = vadd.f32 0.0, %v748
    %v750 = vpop.f32.mrb[0].mxu0
    %v751 = vadd.f32 0.0, %v750
    %v752 = vpop.f32.mrb[0].mxu0
    %v753 = vadd.f32 0.0, %v752
    %754 = vmatprep.mubr.bf16.mxu0 %v227
    %755 = vmatmul.mubr.bf16.gmra.mrb[0].mxu0 %v226
    %v756 = vpop.f32.mrb[0].mxu0
    %v757 = vadd.f32 0.0, %v756
    %v758 = vpop.f32.mrb[0].mxu0
    %v759 = vadd.f32 0.0, %v758
    %v760 = vpop.f32.mrb[0].mxu0
    %v761 = vadd.f32 0.0, %v760
    %v762 = vpop.f32.mrb[0].mxu0
    %v763 = vadd.f32 0.0, %v762
    %764 = vdwg.mxu0
    %765 = vmatprep.subr.bf16.mxu0 %v523
    %766 = vmatpush1.bf16.msra.mxu0 %v522
    %767 = vmatprep.subr.bf16.mxu0 %v529
    %768 = vmatpush1.bf16.msra.mxu0 %v528
    %769 = vmatprep.subr.bf16.mxu0 %v535
    %770 = vmatpush1.bf16.msra.mxu0 %v534
    %771 = vmatprep.subr.bf16.mxu0 %v541
    %772 = vmatpush1.bf16.msra.mxu0 %v540
    %773 = vmatprep.subr.bf16.mxu0 %v547
    %774 = vmatpush1.bf16.msra.mxu0 %v546
    %775 = vmatprep.subr.bf16.mxu0 %v553
    %776 = vmatpush1.bf16.msra.mxu0 %v552
    %777 = vmatprep.subr.bf16.mxu0 %v559
    %778 = vmatpush1.bf16.msra.mxu0 %v558
    %779 = vmatprep.subr.bf16.mxu0 %v565
    %780 = vmatpush1.bf16.msra.mxu0 %v564
    %781 = vmatprep.subr.bf16.mxu0 %v571
    %782 = vmatpush1.bf16.msra.mxu0 %v570
    %783 = vmatprep.subr.bf16.mxu0 %v577
    %784 = vmatpush1.bf16.msra.mxu0 %v576
    %785 = vmatprep.subr.bf16.mxu0 %v583
    %786 = vmatpush1.bf16.msra.mxu0 %v582
    %787 = vmatprep.subr.bf16.mxu0 %v589
    %788 = vmatpush1.bf16.msra.mxu0 %v588
    %789 = vmatprep.subr.bf16.mxu0 %v595
    %790 = vmatpush1.bf16.msra.mxu0 %v594
    %791 = vmatprep.subr.bf16.mxu0 %v601
    %792 = vmatpush1.bf16.msra.mxu0 %v600
    %793 = vmatprep.subr.bf16.mxu0 %v607
    %794 = vmatpush1.bf16.msra.mxu0 %v606
    %795 = vmatprep.subr.bf16.mxu0 %v613
    %796 = vmatpush1.bf16.msra.mxu0 %v612
    %797 = vmatprep.mubr.bf16.mxu0 %v225
    %798 = vmatmul.mubr.bf16.gmra.mrb[0].mxu0 %v224
    %v799 = vpop.f32.mrb[0].mxu0
    %v800 = vadd.f32 0.0, %v799
    %v801 = vpop.f32.mrb[0].mxu0
    %v802 = vadd.f32 0.0, %v801
    %v803 = vpop.f32.mrb[0].mxu0
    %v804 = vadd.f32 0.0, %v803
    %v805 = vpop.f32.mrb[0].mxu0
    %v806 = vadd.f32 0.0, %v805
    %807 = vmatprep.mubr.bf16.mxu0 %v227
    %808 = vmatmul.mubr.bf16.gmra.mrb[0].mxu0 %v226
    %v809 = vpop.f32.mrb[0].mxu0
    %v810 = vadd.f32 0.0, %v809
    %v811 = vpop.f32.mrb[0].mxu0
    %v812 = vadd.f32 0.0, %v811
    %v813 = vpop.f32.mrb[0].mxu0
    %v814 = vadd.f32 0.0, %v813
    %v815 = vpop.f32.mrb[0].mxu0
    %v816 = vadd.f32 0.0, %v815
    %817 = vdwg.mxu0
    %818 = vmatprep.subr.bf16.mxu0 %v525
    %819 = vmatpush1.bf16.msra.mxu0 %v524
    %820 = vmatprep.subr.bf16.mxu0 %v531
    %821 = vmatpush1.bf16.msra.mxu0 %v530
    %822 = vmatprep.subr.bf16.mxu0 %v537
    %823 = vmatpush1.bf16.msra.mxu0 %v536
    %824 = vmatprep.subr.bf16.mxu0 %v543
    %825 = vmatpush1.bf16.msra.mxu0 %v542
    %826 = vmatprep.subr.bf16.mxu0 %v549
    %827 = vmatpush1.bf16.msra.mxu0 %v548
    %828 = vmatprep.subr.bf16.mxu0 %v555
    %829 = vmatpush1.bf16.msra.mxu0 %v554
    %830 = vmatprep.subr.bf16.mxu0 %v561
    %831 = vmatpush1.bf16.msra.mxu0 %v560
    %832 = vmatprep.subr.bf16.mxu0 %v567
    %833 = vmatpush1.bf16.msra.mxu0 %v566
    %834 = vmatprep.subr.bf16.mxu0 %v573
    %835 = vmatpush1.bf16.msra.mxu0 %v572
    %836 = vmatprep.subr.bf16.mxu0 %v579
    %837 = vmatpush1.bf16.msra.mxu0 %v578
    %838 = vmatprep.subr.bf16.mxu0 %v585
    %839 = vmatpush1.bf16.msra.mxu0 %v584
    %840 = vmatprep.subr.bf16.mxu0 %v591
    %841 = vmatpush1.bf16.msra.mxu0 %v590
    %842 = vmatprep.subr.bf16.mxu0 %v597
    %843 = vmatpush1.bf16.msra.mxu0 %v596
    %844 = vmatprep.subr.bf16.mxu0 %v603
    %845 = vmatpush1.bf16.msra.mxu0 %v602
    %846 = vmatprep.subr.bf16.mxu0 %v609
    %847 = vmatpush1.bf16.msra.mxu0 %v608
    %848 = vmatprep.subr.bf16.mxu0 %v615
    %849 = vmatpush1.bf16.msra.mxu0 %v614
    %850 = vmatprep.mubr.bf16.mxu0 %v225
    %851 = vmatmul.mubr.bf16.gmra.mrb[0].mxu0 %v224
    %v852 = vpop.f32.mrb[0].mxu0
    %v853 = vadd.f32 0.0, %v852
    %v854 = vpop.f32.mrb[0].mxu0
    %v855 = vadd.f32 0.0, %v854
    %v856 = vpop.f32.mrb[0].mxu0
    %v857 = vadd.f32 0.0, %v856
    %v858 = vpop.f32.mrb[0].mxu0
    %v859 = vadd.f32 0.0, %v858
    %860 = vmatprep.mubr.bf16.mxu0 %v227
    %861 = vmatmul.mubr.bf16.gmra.mrb[0].mxu0 %v226
    %v862 = vpop.f32.mrb[0].mxu0
    %v863 = vadd.f32 0.0, %v862
    %v864 = vpop.f32.mrb[0].mxu0
    %v865 = vadd.f32 0.0, %v864
    %v866 = vpop.f32.mrb[0].mxu0
    %v867 = vadd.f32 0.0, %v866
    %v868 = vpop.f32.mrb[0].mxu0
    %v869 = vadd.f32 0.0, %v868
    %870 = vdwg.mxu0
    %v871 = vadd.f32 %v88, %v747
    %v872 = vadd.f32 %v89, %v749
    %v873 = vadd.f32 %v90, %v800
    %v874 = vadd.f32 %v91, %v802
    %v875 = vadd.f32 %v92, %v853
    %v876 = vadd.f32 %v93, %v855
    %v877 = vadd.f32 %v94, %v751
    %v878 = vadd.f32 %v95, %v753
    %v879 = vadd.f32 %v96, %v804
    %v880 = vadd.f32 %v97, %v806
    %v881 = vadd.f32 %v98, %v857
    %v882 = vadd.f32 %v99, %v859
    %v883 = vadd.f32 %v100, %v757
    %v884 = vadd.f32 %v101, %v759
    %v885 = vadd.f32 %v102, %v810
    %v886 = vadd.f32 %v103, %v812
    %v887 = vadd.f32 %v104, %v863
    %v888 = vadd.f32 %v105, %v865
    %v889 = vadd.f32 %v106, %v761
    %v890 = vadd.f32 %v107, %v763
    %v891 = vadd.f32 %v108, %v814
    %v892 = vadd.f32 %v109, %v816
    %v893 = vadd.f32 %v110, %v867
    %v894 = vadd.f32 %v111, %v869
    %895 = vst [vmem:[#allocation2] sm:$0xff] %v871
    %896 = vst [vmem:[#allocation2 + $0x8] sm:$0xff] %v872
    %897 = vst [vmem:[#allocation2 + $0x10] sm:$0xff] %v873
    %898 = vst [vmem:[#allocation2 + $0x18] sm:$0xff] %v874
    %899 = vst [vmem:[#allocation2 + $0x20] sm:$0xff] %v875
    %900 = vst [vmem:[#allocation2 + $0x28] sm:$0xff] %v876
    %901 = vst [vmem:[#allocation2 + $0x30] sm:$0xff] %v877
    %902 = vst [vmem:[#allocation2 + $0x38] sm:$0xff] %v878
    %903 = vst [vmem:[#allocation2 + $0x40] sm:$0xff] %v879
    %904 = vst [vmem:[#allocation2 + $0x48] sm:$0xff] %v880
    %905 = vst [vmem:[#allocation2 + $0x50] sm:$0xff] %v881
    %906 = vst [vmem:[#allocation2 + $0x58] sm:$0xff] %v882
    %907 = vst [vmem:[#allocation2 + $0x60] sm:$0xff] %v883
    %908 = vst [vmem:[#allocation2 + $0x68] sm:$0xff] %v884
    %909 = vst [vmem:[#allocation2 + $0x70] sm:$0xff] %v885
    %910 = vst [vmem:[#allocation2 + $0x78] sm:$0xff] %v886
    %911 = vst [vmem:[#allocation2 + $0x80] sm:$0xff] %v887
    %912 = vst [vmem:[#allocation2 + $0x88] sm:$0xff] %v888
    %913 = vst [vmem:[#allocation2 + $0x90] sm:$0xff] %v889
    %914 = vst [vmem:[#allocation2 + $0x98] sm:$0xff] %v890
    %915 = vst [vmem:[#allocation2 + $0xa0] sm:$0xff] %v891
    %916 = vst [vmem:[#allocation2 + $0xa8] sm:$0xff] %v892
    %917 = vst [vmem:[#allocation2 + $0xb0] sm:$0xff] %v893
    %918 = vst [vmem:[#allocation2 + $0xb8] sm:$0xff] %v894
    // Predicated region
    $region22: #{self_attention_forward.3} parent=1 // pred_check
      %p919 = pneg %p28
    $region23: #{self_attention_forward.3} parent=1 // pred_check_branch
      %921 = sbr.rel (%p919) target = $region25
    $region24: #{self_attention_forward.3} parent=1 // pred_region
      %v922 = vld [vmem:[#allocation2] sm:$0xff]
      %v923 = vld [vmem:[#allocation2 + $0x8] sm:$0xff]
      %v924 = vld [vmem:[#allocation2 + $0x10] sm:$0xff]
      %v925 = vld [vmem:[#allocation2 + $0x18] sm:$0xff]
      %v926 = vld [vmem:[#allocation2 + $0x20] sm:$0xff]
      %v927 = vld [vmem:[#allocation2 + $0x28] sm:$0xff]
      %v928 = vld [vmem:[#allocation2 + $0x30] sm:$0xff]
      %v929 = vld [vmem:[#allocation2 + $0x38] sm:$0xff]
      %v930 = vld [vmem:[#allocation2 + $0x40] sm:$0xff]
      %v931 = vld [vmem:[#allocation2 + $0x48] sm:$0xff]
      %v932 = vld [vmem:[#allocation2 + $0x50] sm:$0xff]
      %v933 = vld [vmem:[#allocation2 + $0x58] sm:$0xff]
      %v934 = vld [vmem:[#allocation2 + $0x60] sm:$0xff]
      %v935 = vld [vmem:[#allocation2 + $0x68] sm:$0xff]
      %v936 = vld [vmem:[#allocation2 + $0x70] sm:$0xff]
      %v937 = vld [vmem:[#allocation2 + $0x78] sm:$0xff]
      %v938 = vld [vmem:[#allocation2 + $0x80] sm:$0xff]
      %v939 = vld [vmem:[#allocation2 + $0x88] sm:$0xff]
      %v940 = vld [vmem:[#allocation2 + $0x90] sm:$0xff]
      %v941 = vld [vmem:[#allocation2 + $0x98] sm:$0xff]
      %v942 = vld [vmem:[#allocation2 + $0xa0] sm:$0xff]
      %v943 = vld [vmem:[#allocation2 + $0xa8] sm:$0xff]
      %v944 = vld [vmem:[#allocation2 + $0xb0] sm:$0xff]
      %v945 = vld [vmem:[#allocation2 + $0xb8] sm:$0xff]
      %v946 = vpack.c.bf16 %v928, %v922
      %v947 = vpack.c.bf16 %v929, %v923
      %v948 = vpack.c.bf16 %v930, %v924
      %v949 = vpack.c.bf16 %v931, %v925
      %v950 = vpack.c.bf16 %v932, %v926
      %v951 = vpack.c.bf16 %v933, %v927
      %v952 = vpack.c.bf16 %v940, %v934
      %v953 = vpack.c.bf16 %v941, %v935
      %v954 = vpack.c.bf16 %v942, %v936
      %v955 = vpack.c.bf16 %v943, %v937
      %v956 = vpack.c.bf16 %v944, %v938
      %v957 = vpack.c.bf16 %v945, %v939
      %v970 = vunpack.c.l.b16 %v946
      %v971 = vunpack.c.l.b16 %v947
      %v972 = vunpack.c.l.b16 %v948
      %v973 = vunpack.c.l.b16 %v949
      %v974 = vunpack.c.l.b16 %v950
      %v975 = vunpack.c.l.b16 %v951
      %v976 = vunpack.c.h.b16 %v946
      %v977 = vunpack.c.h.b16 %v947
      %v978 = vunpack.c.h.b16 %v948
      %v979 = vunpack.c.h.b16 %v949
      %v980 = vunpack.c.h.b16 %v950
      %v981 = vunpack.c.h.b16 %v951
      %v982 = vunpack.c.l.b16 %v952
      %v983 = vunpack.c.l.b16 %v953
      %v984 = vunpack.c.l.b16 %v954
      %v985 = vunpack.c.l.b16 %v955
      %v986 = vunpack.c.l.b16 %v956
      %v987 = vunpack.c.l.b16 %v957
      %v988 = vunpack.c.h.b16 %v952
      %v989 = vunpack.c.h.b16 %v953
      %v990 = vunpack.c.h.b16 %v954
      %v991 = vunpack.c.h.b16 %v955
      %v992 = vunpack.c.h.b16 %v956
      %v993 = vunpack.c.h.b16 %v957
      %v994 = vpack.c.b16 %v971, %v970
      %v995 = vpack.c.b16 %v973, %v972
      %v996 = vpack.c.b16 %v975, %v974
      %v997 = vpack.c.b16 %v977, %v976
      %v998 = vpack.c.b16 %v979, %v978
      %v999 = vpack.c.b16 %v981, %v980
      %v1000 = vpack.c.b16 %v983, %v982
      %v1001 = vpack.c.b16 %v985, %v984
      %v1002 = vpack.c.b16 %v987, %v986
      %v1003 = vpack.c.b16 %v989, %v988
      %v1004 = vpack.c.b16 %v991, %v990
      %v1005 = vpack.c.b16 %v993, %v992
      %1018 = vst [vmem:[%s3] sm:$0xff] %v994
      %1019 = vst [vmem:[%s3 + $0x8] sm:$0xff] %v995
      %1020 = vst [vmem:[%s3 + $0x10] sm:$0xff] %v996
      %1021 = vst [vmem:[%s3 + $0x18] sm:$0xff] %v997
      %1022 = vst [vmem:[%s3 + $0x20] sm:$0xff] %v998
      %1023 = vst [vmem:[%s3 + $0x28] sm:$0xff] %v999
      %1024 = vst [vmem:[%s3 + $0x30] sm:$0xff] %v1000
      %1025 = vst [vmem:[%s3 + $0x38] sm:$0xff] %v1001
      %1026 = vst [vmem:[%s3 + $0x40] sm:$0xff] %v1002
      %1027 = vst [vmem:[%s3 + $0x48] sm:$0xff] %v1003
      %1028 = vst [vmem:[%s3 + $0x50] sm:$0xff] %v1004
      %1029 = vst [vmem:[%s3 + $0x58] sm:$0xff] %v1005
    $region25: #{self_attention_forward.3} parent=1 // pred_fallthru
      _
    // Predicated region
    $region26: #{self_attention_forward.3} parent=1 // pred_check
      _
    $region27: #{self_attention_forward.3} parent=1 // pred_check_branch
      %1031 = sbr.rel (0) target = $region29
    $region28: #{self_attention_forward.3} parent=1 // pred_region
      _
    $region29: #{self_attention_forward.3} parent=1 // pred_fallthru
      _
    // Predicated region
    $region30: #{self_attention_forward.3} parent=1 // pred_check
      _
    $region31: #{self_attention_forward.3} parent=1 // pred_check_branch
      %1033 = sbr.rel (0) target = $region33
    $region32: #{self_attention_forward.3} parent=1 // pred_region
      _
    $region33: #{self_attention_forward.3} parent=1 // pred_fallthru
      _
    %1034 = vsyncpa [#allocation4], 1

</llo_original>
